<compile_context>
chip_gen: v7x
topology: tpu7x:2x2x1
jax: 0.10.0
libtpu: 0.0.40
codegen_flags: <defaults>
</compile_context>

<pallas_src>
import functools
import jax
import jax.numpy as jnp
from jax.experimental import pallas as pl
from jax.experimental.pallas import tpu as pltpu

# ----------------------------- hyper-parameters (args.*) ---------------------
SCALE = 2                 # args.scale      -> kernel_size=6, stride=2, padding=2
NUM_GROUPS = 3            # args.num_groups (>=3 so the re_guide branch runs)
NUM_FEATURES = 16         # args.num_features
BN_EPS = 1e-5
PRELU_INIT = 0.2          # args.act_type == 'prelu', num_parameters=1, init=0.2

if SCALE == 2:
    K_SP, S_SP, P_SP = 6, 2, 2
elif SCALE == 4:
    K_SP, S_SP, P_SP = 8, 4, 2

TM_MAX = 256   # row tile: cover the whole M up to 256 (grid of 1-2 steps)
C_LANE = 128   # out-channel padding target -> lane-dense (unmasked) stores


def _round_up(x, m):
    return ((x + m - 1) // m) * m


# ----------------------------- Pallas kernel ---------------------------------
def _mm_shift_prelu_kernel(a_ref, w_ref, shift_ref, alpha_ref, o_ref):
    # a_ref:     (TM, K)   bf16 im2col / activation rows
    # w_ref:     (K, Cp)   bf16 weights, BN scale pre-folded
    # shift_ref: (1, Cp)   f32 folded (conv-bias + BN) shift
    # alpha_ref: (1,)      f32 PReLU slope, resident in SMEM
    acc = jnp.dot(a_ref[...], w_ref[...], preferred_element_type=jnp.float32)
    y = acc + shift_ref[...]
    alpha = alpha_ref[0]
    o_ref[...] = jnp.where(y >= 0.0, y, alpha * y)


def matmul_shift_prelu(a, w, shift, alpha):
    """PReLU((a @ w) + shift) on the MXU/VPU. Operands cast to bf16, f32 accum."""
    M, K = a.shape
    Kw, C = w.shape
    assert K == Kw
    TM = min(TM_MAX, _round_up(M, 8))
    Mp = pl.cdiv(M, TM) * TM
    Cp = _round_up(C, C_LANE)

    a_p = a.astype(jnp.bfloat16)
    if Mp != M:
        a_p = jnp.pad(a_p, ((0, Mp - M), (0, 0)))
    w_p = jnp.pad(w, ((0, 0), (0, Cp - C))).astype(jnp.bfloat16)
    shift_p = jnp.pad(shift.reshape(1, C).astype(jnp.float32),
                      ((0, 0), (0, Cp - C)))
    alpha_s = jnp.reshape(alpha, (1,)).astype(jnp.float32)

    out = pl.pallas_call(
        _mm_shift_prelu_kernel,
        out_shape=jax.ShapeDtypeStruct((Mp, Cp), jnp.float32),
        grid_spec=pltpu.PrefetchScalarGridSpec(
            num_scalar_prefetch=0,
            grid=(Mp // TM,),
            in_specs=[
                pl.BlockSpec((TM, K), lambda i: (i, 0)),
                pl.BlockSpec((K, Cp), lambda i: (0, 0)),
                pl.BlockSpec((1, Cp), lambda i: (0, 0)),
                pl.BlockSpec(memory_space=pltpu.MemorySpace.SMEM),
            ],
            out_specs=pl.BlockSpec((TM, Cp), lambda i: (i, 0)),
        ),
        compiler_params=pltpu.CompilerParams(
            dimension_semantics=("parallel",),
            vmem_limit_bytes=32 * 1024 * 1024,
        ),
    )(a_p, w_p, shift_p, alpha_s)
    return out[:M, :C]


# ----------------------------- im2col glue (plain JAX, bf16 slab) ------------
def im2col(x, k, s, pad_lo, pad_hi=None):
    """x: (N,H,W,C) -> patch rows (N*Ho*Wo, k*k*C) ordered (kh, kw, c)."""
    if pad_hi is None:
        pad_hi = pad_lo
    N, H, W, C = x.shape
    xp = jnp.pad(x, ((0, 0), (pad_lo, pad_hi), (pad_lo, pad_hi), (0, 0)))
    Ho = (H + pad_lo + pad_hi - k) // s + 1
    Wo = (W + pad_lo + pad_hi - k) // s + 1
    cols = []
    for kh in range(k):
        for kw in range(k):
            cols.append(xp[:, kh:kh + s * Ho:s, kw:kw + s * Wo:s, :])
    col = jnp.stack(cols, axis=3)                      # (N,Ho,Wo,k*k,C)
    return col.reshape(N * Ho * Wo, k * k * C), (N, Ho, Wo)


def fold_bn(p):
    """Eval-mode BN + conv bias folded to per-out-channel (scale, shift)."""
    bn_scale = p["gamma"] * jax.lax.rsqrt(p["var"] + BN_EPS)
    shift = (p["b"] - p["mean"]) * bn_scale + p["beta"]
    return bn_scale, shift


def conv_block(x, p, k, s, pad_):
    """Conv2d(k,s,pad) + BN + PReLU.  Weight stored PyTorch-style (Cout,Cin,k,k)."""
    cout, cin = p["w"].shape[0], p["w"].shape[1]
    N, H, W, _ = x.shape
    xb = x.astype(jnp.bfloat16)
    if k == 1 and s == 1 and pad_ == 0:
        col, Ho, Wo = xb.reshape(N * H * W, cin), H, W
    else:
        col, (_, Ho, Wo) = im2col(xb, k, s, pad_)
    bn_scale, shift = fold_bn(p)
    wmat = jnp.transpose(p["w"], (2, 3, 1, 0)).reshape(k * k * cin, cout)
    wmat = wmat * bn_scale[None, :]                    # fold BN scale into weights
    out = matmul_shift_prelu(col, wmat, shift, p["alpha"])
    return out.reshape(N, Ho, Wo, cout)


def _deconv_taps(r, k, s, pad_):
    """Weight taps + input offsets contributing to output phase r (1-D)."""
    kys = [ky for ky in range(k) if (ky - (r + pad_)) % s == 0]
    offs = [(r + pad_ - ky) // s for ky in kys]
    order = sorted(range(len(kys)), key=lambda t: offs[t])
    return [kys[t] for t in order], [offs[t] for t in order]


def deconv_block(x, p, k, s, pad_):
    """ConvTranspose2d(k,s,pad) + BN + PReLU via sub-pixel decomposition.

    Each of the s*s output phases is a small stride-1 conv on the un-dilated
    input; for the scale=2 config all phases share one 3x3 receptive field, so
    the whole deconv is ONE im2col + ONE fused matmul with a (9*Cin, 4*Cout)
    weight (4x fewer MACs than the zero-insertion formulation).
    """
    N, H, W, cin = x.shape
    cout = p["w"].shape[1]                             # weight: (Cin, Cout, k, k)
    kk = k // s

    _, base_offs = _deconv_taps(0, k, s, pad_)
    for r in range(s):
        # TODO(synk): phases with differing offsets (scale=4 config) would need
        # per-phase im2col; not exercised for SCALE=2.
        assert _deconv_taps(r, k, s, pad_)[1] == base_offs
    pad_lo, pad_hi = -base_offs[0], base_offs[-1]

    xb = x.astype(jnp.bfloat16)
    col, _ = im2col(xb, kk, 1, pad_lo, pad_hi)         # (N*H*W, kk*kk*cin)

    bn_scale, shift = fold_bn(p)
    w = p["w"]
    wcols, shifts = [], []
    for ry in range(s):
        kys, _ = _deconv_taps(ry, k, s, pad_)
        for rx in range(s):
            kxs, _ = _deconv_taps(rx, k, s, pad_)
            wsub = w[:, :, kys, :][:, :, :, kxs]       # (cin, cout, kk, kk)
            wsub = jnp.transpose(wsub, (2, 3, 0, 1)).reshape(kk * kk * cin, cout)
            wcols.append(wsub * bn_scale[None, :])
            shifts.append(shift)
    wmat = jnp.concatenate(wcols, axis=1)              # (kk*kk*cin, s*s*cout)
    shift_all = jnp.concatenate(shifts, axis=0)

    out = matmul_shift_prelu(col, wmat, shift_all, p["alpha"])  # (N*H*W, s*s*cout)
    out = out.reshape(N, H, W, s, s, cout)
    out = jnp.transpose(out, (0, 1, 3, 2, 4, 5)).reshape(N, H * s, W * s, cout)
    return out


# ----------------------------- parameter construction ------------------------
def make_block_params(key, cin, cout, k, transposed=False):
    ks = jax.random.split(key, 6)
    wshape = (cin, cout, k, k) if transposed else (cout, cin, k, k)
    fan = cin * k * k
    return dict(
        w=jax.random.normal(ks[0], wshape, jnp.float32) * (fan ** -0.5),
        b=jax.random.normal(ks[1], (cout,), jnp.float32) * 0.05,
        gamma=1.0 + 0.1 * jax.random.normal(ks[2], (cout,), jnp.float32),
        beta=0.1 * jax.random.normal(ks[3], (cout,), jnp.float32),
        mean=0.1 * jax.random.normal(ks[4], (cout,), jnp.float32),
        var=1.0 + 0.1 * jnp.abs(jax.random.normal(ks[5], (cout,), jnp.float32)),
        alpha=jnp.float32(PRELU_INIT),
    )


def make_cfb_params(key):
    F, G = NUM_FEATURES, NUM_GROUPS
    keys = iter(jax.random.split(key, 4 + 4 * G))
    params = dict(
        compress_in=make_block_params(next(keys), 3 * F, F, 1),
        re_guide=make_block_params(next(keys), 2 * F, F, 1),
        compress_out=make_block_params(next(keys), G * F, F, 1),
        up=[], down=[], uptran=[], downtran=[],
    )
    for idx in range(G):
        params["up"].append(make_block_params(next(keys), F, F, K_SP, transposed=True))
        params["down"].append(make_block_params(next(keys), F, F, K_SP))
        if idx > 0:
            params["uptran"].append(make_block_params(next(keys), F * (idx + 1), F, 1))
            params["downtran"].append(make_block_params(next(keys), F * (idx + 1), F, 1))
    return params


# ----------------------------- CFB forward -----------------------------------
def cfb_forward(params, f_in, g1, g2):
    # f_in, g1, g2: (N, H, W, F)   [NHWC equivalent of PyTorch (N, F, H, W)]
    x = jnp.concatenate([f_in, g1, g2], axis=-1)
    x = conv_block(x, params["compress_in"], 1, 1, 0)

    lr_features = [x]
    hr_features = []
    for idx in range(NUM_GROUPS):
        LD_L = jnp.concatenate(lr_features, axis=-1)
        if idx > 0:
            LD_L = conv_block(LD_L, params["uptran"][idx - 1], 1, 1, 0)
        LD_H = deconv_block(LD_L, params["up"][idx], K_SP, S_SP, P_SP)
        hr_features.append(LD_H)
        LD_H = jnp.concatenate(hr_features, axis=-1)
        if idx > 0:
            LD_H = conv_block(LD_H, params["downtran"][idx - 1], 1, 1, 0)
        LD_L = conv_block(LD_H, params["down"][idx], K_SP, S_SP, P_SP)
        if idx == 2:
            x_mid = jnp.concatenate([LD_L, g2], axis=-1)
            LD_L = conv_block(x_mid, params["re_guide"], 1, 1, 0)
        lr_features.append(LD_L)

    output = jnp.concatenate(lr_features[1:], axis=-1)
    output = conv_block(output, params["compress_out"], 1, 1, 0)
    return output


# ----------------------------- main -------------------------------------------
if __name__ == "__main__":
    key = jax.random.PRNGKey(0)
    kp, kf, kg1, kg2 = jax.random.split(key, 4)

    N, H, W, F = 2, 8, 8, NUM_FEATURES
    params = make_cfb_params(kp)
    f_in = jax.random.normal(kf, (N, H, W, F), jnp.float32)
    g1 = jax.random.normal(kg1, (N, H, W, F), jnp.float32)
    g2 = jax.random.normal(kg2, (N, H, W, F), jnp.float32)

    out = jax.jit(functools.partial(cfb_forward, params))(f_in, g1, g2)
    out = jax.block_until_ready(out)
    assert out.shape == (N, H, W, F), out.shape
    assert bool(jnp.all(jnp.isfinite(out)))
    print("KERNEL_OK")
</pallas_src>

<mosaic_0001>
module attributes {stable_mosaic.version = 11 : i64} {
  func.func @_mm_shift_prelu_kernel(%arg0: i32, %arg1: memref<128x48xbf16, #tpu.memory_space<vmem>>, %arg2: memref<48x128xbf16, #tpu.memory_space<vmem>>, %arg3: memref<1x128xf32, #tpu.memory_space<vmem>>, %arg4: memref<1xf32, #tpu.memory_space<smem>>, %arg5: memref<128x128xf32, #tpu.memory_space<vmem>>) attributes {dimension_semantics = [#tpu.dimension_semantics<parallel>], iteration_bounds = array<i64: 1>, scalar_prefetch = 0 : i64, scratch_operands = 0 : i64, tpu.core_type = #tpu.core_type<tc>, window_params = [{transform_indices = @transform_0, window_bounds = array<i64: 128, 48>}, {pipeline_mode = #tpu.pipeline_mode<synchronous>, transform_indices = @transform_1, window_bounds = array<i64: 48, 128>}, {pipeline_mode = #tpu.pipeline_mode<synchronous>, transform_indices = @transform_2, window_bounds = array<i64: 1, 128>}, {transform_indices = @transform_3, window_bounds = array<i64: 1>}, {transform_indices = @transform_4, window_bounds = array<i64: 128, 128>}]} {
    %c0 = arith.constant 0 : index
    %c0_0 = arith.constant 0 : index
    %0 = vector.load %arg1[%c0, %c0_0] : memref<128x48xbf16, #tpu.memory_space<vmem>>, vector<128x48xbf16>
    %c0_1 = arith.constant 0 : index
    %c0_2 = arith.constant 0 : index
    %1 = vector.load %arg2[%c0_1, %c0_2] : memref<48x128xbf16, #tpu.memory_space<vmem>>, vector<48x128xbf16>
    %cst = arith.constant dense<0.000000e+00> : vector<128x128xf32>
    %2 = tpu.matmul %0, %1, %cst {dimension_numbers = #tpu.dot_dimension_numbers<[1], [0], [0], [1], [0, 0, 1, 1], [], []>} : vector<128x48xbf16>, vector<48x128xbf16>, vector<128x128xf32> -> vector<128x128xf32>
    %c0_3 = arith.constant 0 : index
    %c0_4 = arith.constant 0 : index
    %3 = vector.load %arg3[%c0_3, %c0_4] : memref<1x128xf32, #tpu.memory_space<vmem>>, vector<1x128xf32>
    %4 = vector.broadcast %3 : vector<1x128xf32> to vector<128x128xf32>
    %5 = arith.addf %2, %4 : vector<128x128xf32>
    %c0_5 = arith.constant 0 : index
    %6 = memref.load %arg4[%c0_5] : memref<1xf32, #tpu.memory_space<smem>>
    %cst_6 = arith.constant 0.000000e+00 : f32
    %7 = vector.broadcast %cst_6 : f32 to vector<128x128xf32>
    %8 = arith.cmpf oge, %5, %7 : vector<128x128xf32>
    %9 = vector.broadcast %6 : f32 to vector<128x128xf32>
    %10 = arith.mulf %9, %5 : vector<128x128xf32>
    %11 = arith.select %8, %5, %10 : vector<128x128xi1>, vector<128x128xf32>
    %c0_7 = arith.constant 0 : index
    %c0_8 = arith.constant 0 : index
    %12 = vector.load %arg5[%c0_7, %c0_8] : memref<128x128xf32, #tpu.memory_space<vmem>>, vector<128x128xf32>
    tpu.vector_store %arg5[%c0_7, %c0_8], %11 {strides = array<i32>} : memref<128x128xf32, #tpu.memory_space<vmem>>, vector<128x128xf32>,
    return
  }
  func.func @transform_0(%arg0: i32) -> (i32, i32) {
    %c0_i32 = arith.constant 0 : i32
    %c0_i32_0 = arith.constant 0 : i32
    return %arg0, %c0_i32 : i32, i32
  }
  func.func @transform_1(%arg0: i32) -> (i32, i32) {
    %c0_i32 = arith.constant 0 : i32
    %c0_i32_0 = arith.constant 0 : i32
    %c0_i32_1 = arith.constant 0 : i32
    return %c0_i32, %c0_i32_0 : i32, i32
  }
  func.func @transform_2(%arg0: i32) -> (i32, i32) {
    %c0_i32 = arith.constant 0 : i32
    %c0_i32_0 = arith.constant 0 : i32
    %c0_i32_1 = arith.constant 0 : i32
    return %c0_i32, %c0_i32_0 : i32, i32
  }
  func.func @transform_3(%arg0: i32) -> i32 {
    %c0_i32 = arith.constant 0 : i32
    %c0_i32_0 = arith.constant 0 : i32
    return %c0_i32 : i32
  }
  func.func @transform_4(%arg0: i32) -> (i32, i32) {
    %c0_i32 = arith.constant 0 : i32
    %c0_i32_0 = arith.constant 0 : i32
    return %arg0, %c0_i32 : i32, i32
  }
}

module attributes {stable_mosaic.version = 11 : i64} {
  func.func @_mm_shift_prelu_kernel(%arg0: i32, %arg1: memref<128x144xbf16, #tpu.memory_space<vmem>>, %arg2: memref<144x128xbf16, #tpu.memory_space<vmem>>, %arg3: memref<1x128xf32, #tpu.memory_space<vmem>>, %arg4: memref<1xf32, #tpu.memory_space<smem>>, %arg5: memref<128x128xf32, #tpu.memory_space<vmem>>) attributes {dimension_semantics = [#tpu.dimension_semantics<parallel>], iteration_bounds = array<i64: 1>, scalar_prefetch = 0 : i64, scratch_operands = 0 : i64, tpu.core_type = #tpu.core_type<tc>, window_params = [{transform_indices = @transform_0, window_bounds = array<i64: 128, 144>}, {pipeline_mode = #tpu.pipeline_mode<synchronous>, transform_indices = @transform_1, window_bounds = array<i64: 144, 128>}, {pipeline_mode = #tpu.pipeline_mode<synchronous>, transform_indices = @transform_2, window_bounds = array<i64: 1, 128>}, {transform_indices = @transform_3, window_bounds = array<i64: 1>}, {transform_indices = @transform_4, window_bounds = array<i64: 128, 128>}]} {
    %c0 = arith.constant 0 : index
    %c0_0 = arith.constant 0 : index
    %0 = vector.load %arg1[%c0, %c0_0] : memref<128x144xbf16, #tpu.memory_space<vmem>>, vector<128x144xbf16>
    %c0_1 = arith.constant 0 : index
    %c0_2 = arith.constant 0 : index
    %1 = vector.load %arg2[%c0_1, %c0_2] : memref<144x128xbf16, #tpu.memory_space<vmem>>, vector<144x128xbf16>
    %cst = arith.constant dense<0.000000e+00> : vector<128x128xf32>
    %2 = tpu.matmul %0, %1, %cst {dimension_numbers = #tpu.dot_dimension_numbers<[1], [0], [0], [1], [0, 0, 1, 1], [], []>} : vector<128x144xbf16>, vector<144x128xbf16>, vector<128x128xf32> -> vector<128x128xf32>
    %c0_3 = arith.constant 0 : index
    %c0_4 = arith.constant 0 : index
    %3 = vector.load %arg3[%c0_3, %c0_4] : memref<1x128xf32, #tpu.memory_space<vmem>>, vector<1x128xf32>
    %4 = vector.broadcast %3 : vector<1x128xf32> to vector<128x128xf32>
    %5 = arith.addf %2, %4 : vector<128x128xf32>
    %c0_5 = arith.constant 0 : index
    %6 = memref.load %arg4[%c0_5] : memref<1xf32, #tpu.memory_space<smem>>
    %cst_6 = arith.constant 0.000000e+00 : f32
    %7 = vector.broadcast %cst_6 : f32 to vector<128x128xf32>
    %8 = arith.cmpf oge, %5, %7 : vector<128x128xf32>
    %9 = vector.broadcast %6 : f32 to vector<128x128xf32>
    %10 = arith.mulf %9, %5 : vector<128x128xf32>
    %11 = arith.select %8, %5, %10 : vector<128x128xi1>, vector<128x128xf32>
    %c0_7 = arith.constant 0 : index
    %c0_8 = arith.constant 0 : index
    %12 = vector.load %arg5[%c0_7, %c0_8] : memref<128x128xf32, #tpu.memory_space<vmem>>, vector<128x128xf32>
    tpu.vector_store %arg5[%c0_7, %c0_8], %11 {strides = array<i32>} : memref<128x128xf32, #tpu.memory_space<vmem>>, vector<128x128xf32>,
    return
  }
  func.func @transform_0(%arg0: i32) -> (i32, i32) {
    %c0_i32 = arith.constant 0 : i32
    %c0_i32_0 = arith.constant 0 : i32
    return %arg0, %c0_i32 : i32, i32
  }
  func.func @transform_1(%arg0: i32) -> (i32, i32) {
    %c0_i32 = arith.constant 0 : i32
    %c0_i32_0 = arith.constant 0 : i32
    %c0_i32_1 = arith.constant 0 : i32
    return %c0_i32, %c0_i32_0 : i32, i32
  }
  func.func @transform_2(%arg0: i32) -> (i32, i32) {
    %c0_i32 = arith.constant 0 : i32
    %c0_i32_0 = arith.constant 0 : i32
    %c0_i32_1 = arith.constant 0 : i32
    return %c0_i32, %c0_i32_0 : i32, i32
  }
  func.func @transform_3(%arg0: i32) -> i32 {
    %c0_i32 = arith.constant 0 : i32
    %c0_i32_0 = arith.constant 0 : i32
    return %c0_i32 : i32
  }
  func.func @transform_4(%arg0: i32) -> (i32, i32) {
    %c0_i32 = arith.constant 0 : i32
    %c0_i32_0 = arith.constant 0 : i32
    return %arg0, %c0_i32 : i32, i32
  }
}

module attributes {stable_mosaic.version = 11 : i64} {
  func.func @_mm_shift_prelu_kernel(%arg0: i32, %arg1: memref<128x576xbf16, #tpu.memory_space<vmem>>, %arg2: memref<576x128xbf16, #tpu.memory_space<vmem>>, %arg3: memref<1x128xf32, #tpu.memory_space<vmem>>, %arg4: memref<1xf32, #tpu.memory_space<smem>>, %arg5: memref<128x128xf32, #tpu.memory_space<vmem>>) attributes {dimension_semantics = [#tpu.dimension_semantics<parallel>], iteration_bounds = array<i64: 1>, scalar_prefetch = 0 : i64, scratch_operands = 0 : i64, tpu.core_type = #tpu.core_type<tc>, window_params = [{transform_indices = @transform_0, window_bounds = array<i64: 128, 576>}, {pipeline_mode = #tpu.pipeline_mode<synchronous>, transform_indices = @transform_1, window_bounds = array<i64: 576, 128>}, {pipeline_mode = #tpu.pipeline_mode<synchronous>, transform_indices = @transform_2, window_bounds = array<i64: 1, 128>}, {transform_indices = @transform_3, window_bounds = array<i64: 1>}, {transform_indices = @transform_4, window_bounds = array<i64: 128, 128>}]} {
    %c0 = arith.constant 0 : index
    %c0_0 = arith.constant 0 : index
    %0 = vector.load %arg1[%c0, %c0_0] : memref<128x576xbf16, #tpu.memory_space<vmem>>, vector<128x576xbf16>
    %c0_1 = arith.constant 0 : index
    %c0_2 = arith.constant 0 : index
    %1 = vector.load %arg2[%c0_1, %c0_2] : memref<576x128xbf16, #tpu.memory_space<vmem>>, vector<576x128xbf16>
    %cst = arith.constant dense<0.000000e+00> : vector<128x128xf32>
    %2 = tpu.matmul %0, %1, %cst {dimension_numbers = #tpu.dot_dimension_numbers<[1], [0], [0], [1], [0, 0, 1, 1], [], []>} : vector<128x576xbf16>, vector<576x128xbf16>, vector<128x128xf32> -> vector<128x128xf32>
    %c0_3 = arith.constant 0 : index
    %c0_4 = arith.constant 0 : index
    %3 = vector.load %arg3[%c0_3, %c0_4] : memref<1x128xf32, #tpu.memory_space<vmem>>, vector<1x128xf32>
    %4 = vector.broadcast %3 : vector<1x128xf32> to vector<128x128xf32>
    %5 = arith.addf %2, %4 : vector<128x128xf32>
    %c0_5 = arith.constant 0 : index
    %6 = memref.load %arg4[%c0_5] : memref<1xf32, #tpu.memory_space<smem>>
    %cst_6 = arith.constant 0.000000e+00 : f32
    %7 = vector.broadcast %cst_6 : f32 to vector<128x128xf32>
    %8 = arith.cmpf oge, %5, %7 : vector<128x128xf32>
    %9 = vector.broadcast %6 : f32 to vector<128x128xf32>
    %10 = arith.mulf %9, %5 : vector<128x128xf32>
    %11 = arith.select %8, %5, %10 : vector<128x128xi1>, vector<128x128xf32>
    %c0_7 = arith.constant 0 : index
    %c0_8 = arith.constant 0 : index
    %12 = vector.load %arg5[%c0_7, %c0_8] : memref<128x128xf32, #tpu.memory_space<vmem>>, vector<128x128xf32>
    tpu.vector_store %arg5[%c0_7, %c0_8], %11 {strides = array<i32>} : memref<128x128xf32, #tpu.memory_space<vmem>>, vector<128x128xf32>,
    return
  }
  func.func @transform_0(%arg0: i32) -> (i32, i32) {
    %c0_i32 = arith.constant 0 : i32
    %c0_i32_0 = arith.constant 0 : i32
    return %arg0, %c0_i32 : i32, i32
  }
  func.func @transform_1(%arg0: i32) -> (i32, i32) {
    %c0_i32 = arith.constant 0 : i32
    %c0_i32_0 = arith.constant 0 : i32
    %c0_i32_1 = arith.constant 0 : i32
    return %c0_i32, %c0_i32_0 : i32, i32
  }
  func.func @transform_2(%arg0: i32) -> (i32, i32) {
    %c0_i32 = arith.constant 0 : i32
    %c0_i32_0 = arith.constant 0 : i32
    %c0_i32_1 = arith.constant 0 : i32
    return %c0_i32, %c0_i32_0 : i32, i32
  }
  func.func @transform_3(%arg0: i32) -> i32 {
    %c0_i32 = arith.constant 0 : i32
    %c0_i32_0 = arith.constant 0 : i32
    return %c0_i32 : i32
  }
  func.func @transform_4(%arg0: i32) -> (i32, i32) {
    %c0_i32 = arith.constant 0 : i32
    %c0_i32_0 = arith.constant 0 : i32
    return %arg0, %c0_i32 : i32, i32
  }
}

module attributes {stable_mosaic.version = 11 : i64} {
  func.func @_mm_shift_prelu_kernel(%arg0: i32, %arg1: memref<128x32xbf16, #tpu.memory_space<vmem>>, %arg2: memref<32x128xbf16, #tpu.memory_space<vmem>>, %arg3: memref<1x128xf32, #tpu.memory_space<vmem>>, %arg4: memref<1xf32, #tpu.memory_space<smem>>, %arg5: memref<128x128xf32, #tpu.memory_space<vmem>>) attributes {dimension_semantics = [#tpu.dimension_semantics<parallel>], iteration_bounds = array<i64: 1>, scalar_prefetch = 0 : i64, scratch_operands = 0 : i64, tpu.core_type = #tpu.core_type<tc>, window_params = [{transform_indices = @transform_0, window_bounds = array<i64: 128, 32>}, {pipeline_mode = #tpu.pipeline_mode<synchronous>, transform_indices = @transform_1, window_bounds = array<i64: 32, 128>}, {pipeline_mode = #tpu.pipeline_mode<synchronous>, transform_indices = @transform_2, window_bounds = array<i64: 1, 128>}, {transform_indices = @transform_3, window_bounds = array<i64: 1>}, {transform_indices = @transform_4, window_bounds = array<i64: 128, 128>}]} {
    %c0 = arith.constant 0 : index
    %c0_0 = arith.constant 0 : index
    %0 = vector.load %arg1[%c0, %c0_0] : memref<128x32xbf16, #tpu.memory_space<vmem>>, vector<128x32xbf16>
    %c0_1 = arith.constant 0 : index
    %c0_2 = arith.constant 0 : index
    %1 = vector.load %arg2[%c0_1, %c0_2] : memref<32x128xbf16, #tpu.memory_space<vmem>>, vector<32x128xbf16>
    %cst = arith.constant dense<0.000000e+00> : vector<128x128xf32>
    %2 = tpu.matmul %0, %1, %cst {dimension_numbers = #tpu.dot_dimension_numbers<[1], [0], [0], [1], [0, 0, 1, 1], [], []>} : vector<128x32xbf16>, vector<32x128xbf16>, vector<128x128xf32> -> vector<128x128xf32>
    %c0_3 = arith.constant 0 : index
    %c0_4 = arith.constant 0 : index
    %3 = vector.load %arg3[%c0_3, %c0_4] : memref<1x128xf32, #tpu.memory_space<vmem>>, vector<1x128xf32>
    %4 = vector.broadcast %3 : vector<1x128xf32> to vector<128x128xf32>
    %5 = arith.addf %2, %4 : vector<128x128xf32>
    %c0_5 = arith.constant 0 : index
    %6 = memref.load %arg4[%c0_5] : memref<1xf32, #tpu.memory_space<smem>>
    %cst_6 = arith.constant 0.000000e+00 : f32
    %7 = vector.broadcast %cst_6 : f32 to vector<128x128xf32>
    %8 = arith.cmpf oge, %5, %7 : vector<128x128xf32>
    %9 = vector.broadcast %6 : f32 to vector<128x128xf32>
    %10 = arith.mulf %9, %5 : vector<128x128xf32>
    %11 = arith.select %8, %5, %10 : vector<128x128xi1>, vector<128x128xf32>
    %c0_7 = arith.constant 0 : index
    %c0_8 = arith.constant 0 : index
    %12 = vector.load %arg5[%c0_7, %c0_8] : memref<128x128xf32, #tpu.memory_space<vmem>>, vector<128x128xf32>
    tpu.vector_store %arg5[%c0_7, %c0_8], %11 {strides = array<i32>} : memref<128x128xf32, #tpu.memory_space<vmem>>, vector<128x128xf32>,
    return
  }
  func.func @transform_0(%arg0: i32) -> (i32, i32) {
    %c0_i32 = arith.constant 0 : i32
    %c0_i32_0 = arith.constant 0 : i32
    return %arg0, %c0_i32 : i32, i32
  }
  func.func @transform_1(%arg0: i32) -> (i32, i32) {
    %c0_i32 = arith.constant 0 : i32
    %c0_i32_0 = arith.constant 0 : i32
    %c0_i32_1 = arith.constant 0 : i32
    return %c0_i32, %c0_i32_0 : i32, i32
  }
  func.func @transform_2(%arg0: i32) -> (i32, i32) {
    %c0_i32 = arith.constant 0 : i32
    %c0_i32_0 = arith.constant 0 : i32
    %c0_i32_1 = arith.constant 0 : i32
    return %c0_i32, %c0_i32_0 : i32, i32
  }
  func.func @transform_3(%arg0: i32) -> i32 {
    %c0_i32 = arith.constant 0 : i32
    %c0_i32_0 = arith.constant 0 : i32
    return %c0_i32 : i32
  }
  func.func @transform_4(%arg0: i32) -> (i32, i32) {
    %c0_i32 = arith.constant 0 : i32
    %c0_i32_0 = arith.constant 0 : i32
    return %arg0, %c0_i32 : i32, i32
  }
}

module attributes {stable_mosaic.version = 11 : i64} {
  func.func @_mm_shift_prelu_kernel(%arg0: i32, %arg1: memref<256x32xbf16, #tpu.memory_space<vmem>>, %arg2: memref<32x128xbf16, #tpu.memory_space<vmem>>, %arg3: memref<1x128xf32, #tpu.memory_space<vmem>>, %arg4: memref<1xf32, #tpu.memory_space<smem>>, %arg5: memref<256x128xf32, #tpu.memory_space<vmem>>) attributes {dimension_semantics = [#tpu.dimension_semantics<parallel>], iteration_bounds = array<i64: 2>, scalar_prefetch = 0 : i64, scratch_operands = 0 : i64, tpu.core_type = #tpu.core_type<tc>, window_params = [{transform_indices = @transform_0, window_bounds = array<i64: 256, 32>}, {pipeline_mode = #tpu.pipeline_mode<synchronous>, transform_indices = @transform_1, window_bounds = array<i64: 32, 128>}, {pipeline_mode = #tpu.pipeline_mode<synchronous>, transform_indices = @transform_2, window_bounds = array<i64: 1, 128>}, {transform_indices = @transform_3, window_bounds = array<i64: 1>}, {transform_indices = @transform_4, window_bounds = array<i64: 256, 128>}]} {
    %c0 = arith.constant 0 : index
    %c0_0 = arith.constant 0 : index
    %0 = vector.load %arg1[%c0, %c0_0] : memref<256x32xbf16, #tpu.memory_space<vmem>>, vector<256x32xbf16>
    %c0_1 = arith.constant 0 : index
    %c0_2 = arith.constant 0 : index
    %1 = vector.load %arg2[%c0_1, %c0_2] : memref<32x128xbf16, #tpu.memory_space<vmem>>, vector<32x128xbf16>
    %cst = arith.constant dense<0.000000e+00> : vector<256x128xf32>
    %2 = tpu.matmul %0, %1, %cst {dimension_numbers = #tpu.dot_dimension_numbers<[1], [0], [0], [1], [0, 0, 1, 1], [], []>} : vector<256x32xbf16>, vector<32x128xbf16>, vector<256x128xf32> -> vector<256x128xf32>
    %c0_3 = arith.constant 0 : index
    %c0_4 = arith.constant 0 : index
    %3 = vector.load %arg3[%c0_3, %c0_4] : memref<1x128xf32, #tpu.memory_space<vmem>>, vector<1x128xf32>
    %4 = vector.broadcast %3 : vector<1x128xf32> to vector<256x128xf32>
    %5 = arith.addf %2, %4 : vector<256x128xf32>
    %c0_5 = arith.constant 0 : index
    %6 = memref.load %arg4[%c0_5] : memref<1xf32, #tpu.memory_space<smem>>
    %cst_6 = arith.constant 0.000000e+00 : f32
    %7 = vector.broadcast %cst_6 : f32 to vector<256x128xf32>
    %8 = arith.cmpf oge, %5, %7 : vector<256x128xf32>
    %9 = vector.broadcast %6 : f32 to vector<256x128xf32>
    %10 = arith.mulf %9, %5 : vector<256x128xf32>
    %11 = arith.select %8, %5, %10 : vector<256x128xi1>, vector<256x128xf32>
    %c0_7 = arith.constant 0 : index
    %c0_8 = arith.constant 0 : index
    %12 = vector.load %arg5[%c0_7, %c0_8] : memref<256x128xf32, #tpu.memory_space<vmem>>, vector<256x128xf32>
    tpu.vector_store %arg5[%c0_7, %c0_8], %11 {strides = array<i32>} : memref<256x128xf32, #tpu.memory_space<vmem>>, vector<256x128xf32>,
    return
  }
  func.func @transform_0(%arg0: i32) -> (i32, i32) {
    %c0_i32 = arith.constant 0 : i32
    %c0_i32_0 = arith.constant 0 : i32
    return %arg0, %c0_i32 : i32, i32
  }
  func.func @transform_1(%arg0: i32) -> (i32, i32) {
    %c0_i32 = arith.constant 0 : i32
    %c0_i32_0 = arith.constant 0 : i32
    %c0_i32_1 = arith.constant 0 : i32
    return %c0_i32, %c0_i32_0 : i32, i32
  }
  func.func @transform_2(%arg0: i32) -> (i32, i32) {
    %c0_i32 = arith.constant 0 : i32
    %c0_i32_0 = arith.constant 0 : i32
    %c0_i32_1 = arith.constant 0 : i32
    return %c0_i32, %c0_i32_0 : i32, i32
  }
  func.func @transform_3(%arg0: i32) -> i32 {
    %c0_i32 = arith.constant 0 : i32
    %c0_i32_0 = arith.constant 0 : i32
    return %c0_i32 : i32
  }
  func.func @transform_4(%arg0: i32) -> (i32, i32) {
    %c0_i32 = arith.constant 0 : i32
    %c0_i32_0 = arith.constant 0 : i32
    return %arg0, %c0_i32 : i32, i32
  }
}

module attributes {stable_mosaic.version = 11 : i64} {
  func.func @_mm_shift_prelu_kernel(%arg0: i32, %arg1: memref<128x48xbf16, #tpu.memory_space<vmem>>, %arg2: memref<48x128xbf16, #tpu.memory_space<vmem>>, %arg3: memref<1x128xf32, #tpu.memory_space<vmem>>, %arg4: memref<1xf32, #tpu.memory_space<smem>>, %arg5: memref<128x128xf32, #tpu.memory_space<vmem>>) attributes {dimension_semantics = [#tpu.dimension_semantics<parallel>], iteration_bounds = array<i64: 1>, scalar_prefetch = 0 : i64, scratch_operands = 0 : i64, tpu.core_type = #tpu.core_type<tc>, window_params = [{transform_indices = @transform_0, window_bounds = array<i64: 128, 48>}, {pipeline_mode = #tpu.pipeline_mode<synchronous>, transform_indices = @transform_1, window_bounds = array<i64: 48, 128>}, {pipeline_mode = #tpu.pipeline_mode<synchronous>, transform_indices = @transform_2, window_bounds = array<i64: 1, 128>}, {transform_indices = @transform_3, window_bounds = array<i64: 1>}, {transform_indices = @transform_4, window_bounds = array<i64: 128, 128>}]} {
    %c0 = arith.constant 0 : index
    %c0_0 = arith.constant 0 : index
    %0 = vector.load %arg1[%c0, %c0_0] : memref<128x48xbf16, #tpu.memory_space<vmem>>, vector<128x48xbf16>
    %c0_1 = arith.constant 0 : index
    %c0_2 = arith.constant 0 : index
    %1 = vector.load %arg2[%c0_1, %c0_2] : memref<48x128xbf16, #tpu.memory_space<vmem>>, vector<48x128xbf16>
    %cst = arith.constant dense<0.000000e+00> : vector<128x128xf32>
    %2 = tpu.matmul %0, %1, %cst {dimension_numbers = #tpu.dot_dimension_numbers<[1], [0], [0], [1], [0, 0, 1, 1], [], []>} : vector<128x48xbf16>, vector<48x128xbf16>, vector<128x128xf32> -> vector<128x128xf32>
    %c0_3 = arith.constant 0 : index
    %c0_4 = arith.constant 0 : index
    %3 = vector.load %arg3[%c0_3, %c0_4] : memref<1x128xf32, #tpu.memory_space<vmem>>, vector<1x128xf32>
    %4 = vector.broadcast %3 : vector<1x128xf32> to vector<128x128xf32>
    %5 = arith.addf %2, %4 : vector<128x128xf32>
    %c0_5 = arith.constant 0 : index
    %6 = memref.load %arg4[%c0_5] : memref<1xf32, #tpu.memory_space<smem>>
    %cst_6 = arith.constant 0.000000e+00 : f32
    %7 = vector.broadcast %cst_6 : f32 to vector<128x128xf32>
    %8 = arith.cmpf oge, %5, %7 : vector<128x128xf32>
    %9 = vector.broadcast %6 : f32 to vector<128x128xf32>
    %10 = arith.mulf %9, %5 : vector<128x128xf32>
    %11 = arith.select %8, %5, %10 : vector<128x128xi1>, vector<128x128xf32>
    %c0_7 = arith.constant 0 : index
    %c0_8 = arith.constant 0 : index
    %12 = vector.load %arg5[%c0_7, %c0_8] : memref<128x128xf32, #tpu.memory_space<vmem>>, vector<128x128xf32>
    tpu.vector_store %arg5[%c0_7, %c0_8], %11 {strides = array<i32>} : memref<128x128xf32, #tpu.memory_space<vmem>>, vector<128x128xf32>,
    return
  }
  func.func @transform_0(%arg0: i32) -> (i32, i32) {
    %c0_i32 = arith.constant 0 : i32
    %c0_i32_0 = arith.constant 0 : i32
    return %arg0, %c0_i32 : i32, i32
  }
  func.func @transform_1(%arg0: i32) -> (i32, i32) {
    %c0_i32 = arith.constant 0 : i32
    %c0_i32_0 = arith.constant 0 : i32
    %c0_i32_1 = arith.constant 0 : i32
    return %c0_i32, %c0_i32_0 : i32, i32
  }
  func.func @transform_2(%arg0: i32) -> (i32, i32) {
    %c0_i32 = arith.constant 0 : i32
    %c0_i32_0 = arith.constant 0 : i32
    %c0_i32_1 = arith.constant 0 : i32
    return %c0_i32, %c0_i32_0 : i32, i32
  }
  func.func @transform_3(%arg0: i32) -> i32 {
    %c0_i32 = arith.constant 0 : i32
    %c0_i32_0 = arith.constant 0 : i32
    return %c0_i32 : i32
  }
  func.func @transform_4(%arg0: i32) -> (i32, i32) {
    %c0_i32 = arith.constant 0 : i32
    %c0_i32_0 = arith.constant 0 : i32
    return %arg0, %c0_i32 : i32, i32
  }
}

module attributes {stable_mosaic.version = 11 : i64} {
  func.func @_mm_shift_prelu_kernel(%arg0: i32, %arg1: memref<256x48xbf16, #tpu.memory_space<vmem>>, %arg2: memref<48x128xbf16, #tpu.memory_space<vmem>>, %arg3: memref<1x128xf32, #tpu.memory_space<vmem>>, %arg4: memref<1xf32, #tpu.memory_space<smem>>, %arg5: memref<256x128xf32, #tpu.memory_space<vmem>>) attributes {dimension_semantics = [#tpu.dimension_semantics<parallel>], iteration_bounds = array<i64: 2>, scalar_prefetch = 0 : i64, scratch_operands = 0 : i64, tpu.core_type = #tpu.core_type<tc>, window_params = [{transform_indices = @transform_0, window_bounds = array<i64: 256, 48>}, {pipeline_mode = #tpu.pipeline_mode<synchronous>, transform_indices = @transform_1, window_bounds = array<i64: 48, 128>}, {pipeline_mode = #tpu.pipeline_mode<synchronous>, transform_indices = @transform_2, window_bounds = array<i64: 1, 128>}, {transform_indices = @transform_3, window_bounds = array<i64: 1>}, {transform_indices = @transform_4, window_bounds = array<i64: 256, 128>}]} {
    %c0 = arith.constant 0 : index
    %c0_0 = arith.constant 0 : index
    %0 = vector.load %arg1[%c0, %c0_0] : memref<256x48xbf16, #tpu.memory_space<vmem>>, vector<256x48xbf16>
    %c0_1 = arith.constant 0 : index
    %c0_2 = arith.constant 0 : index
    %1 = vector.load %arg2[%c0_1, %c0_2] : memref<48x128xbf16, #tpu.memory_space<vmem>>, vector<48x128xbf16>
    %cst = arith.constant dense<0.000000e+00> : vector<256x128xf32>
    %2 = tpu.matmul %0, %1, %cst {dimension_numbers = #tpu.dot_dimension_numbers<[1], [0], [0], [1], [0, 0, 1, 1], [], []>} : vector<256x48xbf16>, vector<48x128xbf16>, vector<256x128xf32> -> vector<256x128xf32>
    %c0_3 = arith.constant 0 : index
    %c0_4 = arith.constant 0 : index
    %3 = vector.load %arg3[%c0_3, %c0_4] : memref<1x128xf32, #tpu.memory_space<vmem>>, vector<1x128xf32>
    %4 = vector.broadcast %3 : vector<1x128xf32> to vector<256x128xf32>
    %5 = arith.addf %2, %4 : vector<256x128xf32>
    %c0_5 = arith.constant 0 : index
    %6 = memref.load %arg4[%c0_5] : memref<1xf32, #tpu.memory_space<smem>>
    %cst_6 = arith.constant 0.000000e+00 : f32
    %7 = vector.broadcast %cst_6 : f32 to vector<256x128xf32>
    %8 = arith.cmpf oge, %5, %7 : vector<256x128xf32>
    %9 = vector.broadcast %6 : f32 to vector<256x128xf32>
    %10 = arith.mulf %9, %5 : vector<256x128xf32>
    %11 = arith.select %8, %5, %10 : vector<256x128xi1>, vector<256x128xf32>
    %c0_7 = arith.constant 0 : index
    %c0_8 = arith.constant 0 : index
    %12 = vector.load %arg5[%c0_7, %c0_8] : memref<256x128xf32, #tpu.memory_space<vmem>>, vector<256x128xf32>
    tpu.vector_store %arg5[%c0_7, %c0_8], %11 {strides = array<i32>} : memref<256x128xf32, #tpu.memory_space<vmem>>, vector<256x128xf32>,
    return
  }
  func.func @transform_0(%arg0: i32) -> (i32, i32) {
    %c0_i32 = arith.constant 0 : i32
    %c0_i32_0 = arith.constant 0 : i32
    return %arg0, %c0_i32 : i32, i32
  }
  func.func @transform_1(%arg0: i32) -> (i32, i32) {
    %c0_i32 = arith.constant 0 : i32
    %c0_i32_0 = arith.constant 0 : i32
    %c0_i32_1 = arith.constant 0 : i32
    return %c0_i32, %c0_i32_0 : i32, i32
  }
  func.func @transform_2(%arg0: i32) -> (i32, i32) {
    %c0_i32 = arith.constant 0 : i32
    %c0_i32_0 = arith.constant 0 : i32
    %c0_i32_1 = arith.constant 0 : i32
    return %c0_i32, %c0_i32_0 : i32, i32
  }
  func.func @transform_3(%arg0: i32) -> i32 {
    %c0_i32 = arith.constant 0 : i32
    %c0_i32_0 = arith.constant 0 : i32
    return %c0_i32 : i32
  }
  func.func @transform_4(%arg0: i32) -> (i32, i32) {
    %c0_i32 = arith.constant 0 : i32
    %c0_i32_0 = arith.constant 0 : i32
    return %arg0, %c0_i32 : i32, i32
  }
}

module attributes {stable_mosaic.version = 11 : i64} {
  func.func @_mm_shift_prelu_kernel(%arg0: i32, %arg1: memref<128x48xbf16, #tpu.memory_space<vmem>>, %arg2: memref<48x128xbf16, #tpu.memory_space<vmem>>, %arg3: memref<1x128xf32, #tpu.memory_space<vmem>>, %arg4: memref<1xf32, #tpu.memory_space<smem>>, %arg5: memref<128x128xf32, #tpu.memory_space<vmem>>) attributes {dimension_semantics = [#tpu.dimension_semantics<parallel>], iteration_bounds = array<i64: 1>, scalar_prefetch = 0 : i64, scratch_operands = 0 : i64, tpu.core_type = #tpu.core_type<tc>, window_params = [{transform_indices = @transform_0, window_bounds = array<i64: 128, 48>}, {pipeline_mode = #tpu.pipeline_mode<synchronous>, transform_indices = @transform_1, window_bounds = array<i64: 48, 128>}, {pipeline_mode = #tpu.pipeline_mode<synchronous>, transform_indices = @transform_2, window_bounds = array<i64: 1, 128>}, {transform_indices = @transform_3, window_bounds = array<i64: 1>}, {transform_indices = @transform_4, window_bounds = array<i64: 128, 128>}]} {
    %c0 = arith.constant 0 : index
    %c0_0 = arith.constant 0 : index
    %0 = vector.load %arg1[%c0, %c0_0] : memref<128x48xbf16, #tpu.memory_space<vmem>>, vector<128x48xbf16>
    %c0_1 = arith.constant 0 : index
    %c0_2 = arith.constant 0 : index
    %1 = vector.load %arg2[%c0_1, %c0_2] : memref<48x128xbf16, #tpu.memory_space<vmem>>, vector<48x128xbf16>
    %cst = arith.constant dense<0.000000e+00> : vector<128x128xf32>
    %2 = tpu.matmul %0, %1, %cst {dimension_numbers = #tpu.dot_dimension_numbers<[1], [0], [0], [1], [0, 0, 1, 1], [], []>} : vector<128x48xbf16>, vector<48x128xbf16>, vector<128x128xf32> -> vector<128x128xf32>
    %c0_3 = arith.constant 0 : index
    %c0_4 = arith.constant 0 : index
    %3 = vector.load %arg3[%c0_3, %c0_4] : memref<1x128xf32, #tpu.memory_space<vmem>>, vector<1x128xf32>
    %4 = vector.broadcast %3 : vector<1x128xf32> to vector<128x128xf32>
    %5 = arith.addf %2, %4 : vector<128x128xf32>
    %c0_5 = arith.constant 0 : index
    %6 = memref.load %arg4[%c0_5] : memref<1xf32, #tpu.memory_space<smem>>
    %cst_6 = arith.constant 0.000000e+00 : f32
    %7 = vector.broadcast %cst_6 : f32 to vector<128x128xf32>
    %8 = arith.cmpf oge, %5, %7 : vector<128x128xf32>
    %9 = vector.broadcast %6 : f32 to vector<128x128xf32>
    %10 = arith.mulf %9, %5 : vector<128x128xf32>
    %11 = arith.select %8, %5, %10 : vector<128x128xi1>, vector<128x128xf32>
    %c0_7 = arith.constant 0 : index
    %c0_8 = arith.constant 0 : index
    %12 = vector.load %arg5[%c0_7, %c0_8] : memref<128x128xf32, #tpu.memory_space<vmem>>, vector<128x128xf32>
    tpu.vector_store %arg5[%c0_7, %c0_8], %11 {strides = array<i32>} : memref<128x128xf32, #tpu.memory_space<vmem>>, vector<128x128xf32>,
    return
  }
  func.func @transform_0(%arg0: i32) -> (i32, i32) {
    %c0_i32 = arith.constant 0 : i32
    %c0_i32_0 = arith.constant 0 : i32
    return %arg0, %c0_i32 : i32, i32
  }
  func.func @transform_1(%arg0: i32) -> (i32, i32) {
    %c0_i32 = arith.constant 0 : i32
    %c0_i32_0 = arith.constant 0 : i32
    %c0_i32_1 = arith.constant 0 : i32
    return %c0_i32, %c0_i32_0 : i32, i32
  }
  func.func @transform_2(%arg0: i32) -> (i32, i32) {
    %c0_i32 = arith.constant 0 : i32
    %c0_i32_0 = arith.constant 0 : i32
    %c0_i32_1 = arith.constant 0 : i32
    return %c0_i32, %c0_i32_0 : i32, i32
  }
  func.func @transform_3(%arg0: i32) -> i32 {
    %c0_i32 = arith.constant 0 : i32
    %c0_i32_0 = arith.constant 0 : i32
    return %c0_i32 : i32
  }
  func.func @transform_4(%arg0: i32) -> (i32, i32) {
    %c0_i32 = arith.constant 0 : i32
    %c0_i32_0 = arith.constant 0 : i32
    return %arg0, %c0_i32 : i32, i32
  }
}

</mosaic_0001>

<llo_original>
// kernel: cfb_forward.13
$region0: #{cfb_forward.13}
  #allocation0 [shape = 'u32[]', space=smem, size = 0x4, offset = 0x4, fixed_abs, tag = 'smem constant byte address 0x4 - core index']
  #allocation1 [shape = 'u32[144,128]{1,0:T(1,128)}', space=vmem, size = 0x12000, scoped, tag = 'internal scratch']
  #allocation2 [shape = 'f32[1]{0:T(128)S(6)}', space=smem, size = 0x200, scoped, tag = 'scoped memory for cfb_forward.13']
  %s0 = inlined_call_operand.vmem [shape: bf16[128,48], index: 0, kind: input, shape index: {}]
  %s1 = inlined_call_operand.hbm [shape: bf16[48,128], index: 1, kind: input, shape index: {}]
  %s2 = inlined_call_operand.hbm [shape: f32[1,128], index: 2, kind: input, shape index: {}]
  %s3 = inlined_call_operand.<no memory space> [shape: f32[1], index: 3, kind: input, shape index: {}]
  %s4 = inlined_call_operand.vmem [shape: f32[128,128], index: 4, kind: output, shape index: {}]
  %s5 = sld [smem:[#allocation0]]
  $region34: #{cfb_forward.13} parent=0
    _
  %s7 = ssub.s32 1, %s5
  %s8 = scalar_select 0, %s7, %s5
  %9 = sst [smem:[#allocation2]] %s3
  $region1: #{cfb_forward.13} parent=0
    #allocation3 [shape = 'u8[12288]{0}', space=vmem, size = 0x3000, scoped, tag = 'input window, operand 1, single buffered']
    #allocation4 [shape = 's32[1]{0}', space=sflag, size = 0x4, scoped, tag = 'scoped memory for cfb_forward.13']
    #allocation5 [shape = 'u8[512]{0}', space=vmem, size = 0x400, scoped, tag = 'input window, operand 2, single buffered']
    #allocation6 [shape = 's32[1]{0}', space=sflag, size = 0x4, scoped, tag = 'scoped memory for cfb_forward.13']
    %10 = vsyncpa [#allocation4], 0
    %11 = vsyncpa [#allocation6], 0
    // Predicated region
    $region2: #{cfb_forward.13} parent=1 // pred_check
      _
    $region3: #{cfb_forward.13} parent=1 // pred_check_branch
      %13 = sbr.rel (0) target = $region5
    $region4: #{cfb_forward.13} parent=1 // pred_region
      _
    $region5: #{cfb_forward.13} parent=1 // pred_fallthru
      _
    // Predicated region
    $region6: #{cfb_forward.13} parent=1 // pred_check
      _
    $region7: #{cfb_forward.13} parent=1 // pred_check_branch
      %15 = sbr.rel (0) target = $region9
    $region8: #{cfb_forward.13} parent=1 // pred_region
      %s17 = ssub.s32 384, 384
      %18 = vsyncadd [#allocation4], %s17
      %s19 = sshll.u32 [#allocation3], 4
      %s20 = int_to_ptr.vmem [resolvable:$true] %s19
      %25 = dma.hbm_to_vmem [thread:$0]  %s1, 384, %s20, [#allocation4], 64, 64, 4
    $region9: #{cfb_forward.13} parent=1 // pred_fallthru
      _
    // Predicated region
    $region10: #{cfb_forward.13} parent=1 // pred_check
      _
    $region11: #{cfb_forward.13} parent=1 // pred_check_branch
      %27 = sbr.rel (0) target = $region13
    $region12: #{cfb_forward.13} parent=1 // pred_region
      %s29 = ssub.s32 16, 16
      %30 = vsyncadd [#allocation6], %s29
      %s32 = sshll.u32 [#allocation5], 4
      %s33 = int_to_ptr.vmem [resolvable:$true] %s32
      %35 = dma.hbm_to_vmem [thread:$0]  %s2, 16, %s33, [#allocation6]
    $region13: #{cfb_forward.13} parent=1 // pred_fallthru
      _
    // Predicated region
    $region14: #{cfb_forward.13} parent=1 // pred_check
      _
    $region15: #{cfb_forward.13} parent=1 // pred_check_branch
      %37 = sbr.rel (0) target = $region17
    $region16: #{cfb_forward.13} parent=1 // pred_region
      _
    $region17: #{cfb_forward.13} parent=1 // pred_fallthru
      _
    // Predicated region
    $region18: #{cfb_forward.13} parent=1 // pred_check
      _
    $region19: #{cfb_forward.13} parent=1 // pred_check_branch
      %39 = sbr.rel (0) target = $region21
    $region20: #{cfb_forward.13} parent=1 // pred_region
      %40 = dma.done [#allocation4], 384
    $region21: #{cfb_forward.13} parent=1 // pred_fallthru
      _
    // Predicated region
    $region22: #{cfb_forward.13} parent=1 // pred_check
      _
    $region23: #{cfb_forward.13} parent=1 // pred_check_branch
      %42 = sbr.rel (0) target = $region25
    $region24: #{cfb_forward.13} parent=1 // pred_region
      %43 = dma.done [#allocation6], 16
    $region25: #{cfb_forward.13} parent=1 // pred_fallthru
      _
    %v45 = vld [vmem:[%s0] sm:$0xf]
    %v46 = vld [vmem:[%s0 + $0x4] sm:$0xf]
    %v47 = vld [vmem:[%s0 + $0x8] sm:$0xf]
    %v48 = vld [vmem:[%s0 + $0xc] sm:$0xf]
    %v49 = vld [vmem:[%s0 + $0x10] sm:$0xf]
    %v50 = vld [vmem:[%s0 + $0x14] sm:$0xf]
    %v51 = vld [vmem:[%s0 + $0x18] sm:$0xf]
    %v52 = vld [vmem:[%s0 + $0x1c] sm:$0xf]
    %v53 = vld [vmem:[%s0 + $0x20] sm:$0xf]
    %v54 = vld [vmem:[%s0 + $0x24] sm:$0xf]
    %v55 = vld [vmem:[%s0 + $0x28] sm:$0xf]
    %v56 = vld [vmem:[%s0 + $0x2c] sm:$0xf]
    %v57 = vld [vmem:[%s0 + $0x30] sm:$0xf]
    %v58 = vld [vmem:[%s0 + $0x34] sm:$0xf]
    %v59 = vld [vmem:[%s0 + $0x38] sm:$0xf]
    %v60 = vld [vmem:[%s0 + $0x3c] sm:$0xf]
    %v61 = vld [vmem:[#allocation3] sm:$0xf]
    %v62 = vld [vmem:[#allocation3 + $0x4] sm:$0xf]
    %v63 = vld [vmem:[#allocation3 + $0x8] sm:$0xf]
    %v64 = vld [vmem:[#allocation3 + $0xc] sm:$0xf]
    %v65 = vld [vmem:[#allocation3 + $0x10] sm:$0xf]
    %v66 = vld [vmem:[#allocation3 + $0x14] sm:$0xf]
    %v67 = vld [vmem:[#allocation5] sm:$0x1]
    %v69 = vlaneseq
    %v70 = vshrl.u32 %v69, 7
    %v71 = vsub.s32 0, %v70
    %v72 = vrot.slane %v67, %v71
    %v90 = vunpack.c.l.b16 %v45
    %v91 = vunpack.c.l.b16 %v46
    %v92 = vunpack.c.l.b16 %v47
    %v93 = vunpack.c.l.b16 %v48
    %v94 = vunpack.c.l.b16 %v49
    %v95 = vunpack.c.l.b16 %v50
    %v96 = vunpack.c.l.b16 %v51
    %v97 = vunpack.c.l.b16 %v52
    %v98 = vunpack.c.l.b16 %v53
    %v99 = vunpack.c.l.b16 %v54
    %v100 = vunpack.c.l.b16 %v55
    %v101 = vunpack.c.l.b16 %v56
    %v102 = vunpack.c.l.b16 %v57
    %v103 = vunpack.c.l.b16 %v58
    %v104 = vunpack.c.l.b16 %v59
    %v105 = vunpack.c.l.b16 %v60
    %v106 = vpack.c.b16 %v91, %v90
    %v107 = vpack.c.b16 %v93, %v92
    %v108 = vpack.c.b16 %v95, %v94
    %v109 = vpack.c.b16 %v97, %v96
    %v110 = vpack.c.b16 %v99, %v98
    %v111 = vpack.c.b16 %v101, %v100
    %v112 = vpack.c.b16 %v103, %v102
    %v113 = vpack.c.b16 %v105, %v104
    %v120 = vunpack.c.l.b16 %v61
    %v121 = vunpack.c.l.b16 %v62
    %v122 = vunpack.c.l.b16 %v63
    %v123 = vunpack.c.l.b16 %v64
    %v124 = vunpack.c.l.b16 %v65
    %v125 = vunpack.c.l.b16 %v66
    %v126 = vpack.c.b16 %v121, %v120
    %v127 = vpack.c.b16 %v123, %v122
    %v128 = vpack.c.b16 %v125, %v124
    %vm132 = vcmask 392192
    %v134 = vsel %vm132, %v106, 0
    %v137 = vsel %vm132, %v107, 0
    %v140 = vsel %vm132, %v108, 0
    %v143 = vsel %vm132, %v109, 0
    %v146 = vsel %vm132, %v110, 0
    %v149 = vsel %vm132, %v111, 0
    %v152 = vsel %vm132, %v112, 0
    %v155 = vsel %vm132, %v113, 0
    %157 = vmatprep.subr.bf16.mxu0 0
    %158 = vmatpush1.bf16.msra.mxu0 %v126
    %159 = vmatprep.subr.bf16.mxu0 0
    %160 = vmatpush1.bf16.msra.mxu0 %v127
    %161 = vmatprep.subr.bf16.mxu0 0
    %162 = vmatpush1.bf16.msra.mxu0 %v128
    %163 = vmatprep.subr.bf16.mxu0 0
    %164 = vmatpush1.bf16.msra.mxu0 0
    %165 = vmatprep.subr.bf16.mxu0 0
    %166 = vmatpush1.bf16.msra.mxu0 0
    %167 = vmatprep.subr.bf16.mxu0 0
    %168 = vmatpush1.bf16.msra.mxu0 0
    %169 = vmatprep.subr.bf16.mxu0 0
    %170 = vmatpush1.bf16.msra.mxu0 0
    %171 = vmatprep.subr.bf16.mxu0 0
    %172 = vmatpush1.bf16.msra.mxu0 0
    %173 = vmatprep.subr.bf16.mxu0 0
    %174 = vmatpush1.bf16.msra.mxu0 0
    %175 = vmatprep.subr.bf16.mxu0 0
    %176 = vmatpush1.bf16.msra.mxu0 0
    %177 = vmatprep.subr.bf16.mxu0 0
    %178 = vmatpush1.bf16.msra.mxu0 0
    %179 = vmatprep.subr.bf16.mxu0 0
    %180 = vmatpush1.bf16.msra.mxu0 0
    %181 = vmatprep.subr.bf16.mxu0 0
    %182 = vmatpush1.bf16.msra.mxu0 0
    %183 = vmatprep.subr.bf16.mxu0 0
    %184 = vmatpush1.bf16.msra.mxu0 0
    %185 = vmatprep.subr.bf16.mxu0 0
    %186 = vmatpush1.bf16.msra.mxu0 0
    %187 = vmatprep.subr.bf16.mxu0 0
    %188 = vmatpush1.bf16.msra.mxu0 0
    %189 = vmatprep.mubr.bf16.mxu0 0
    %190 = vmatmul.mubr.bf16.gmra.mrb[0].mxu0 %v134
    %v191 = vpop.f32.mrb[0].mxu0
    %v192 = vadd.f32 %v72, %v191
    %v193 = vpop.f32.mrb[0].mxu0
    %v194 = vpop.f32.mrb[0].mxu0
    %v195 = vadd.f32 %v72, %v194
    %v196 = vpop.f32.mrb[0].mxu0
    %197 = vmatprep.mubr.bf16.mxu0 0
    %198 = vmatmul.mubr.bf16.gmra.mrb[0].mxu0 %v137
    %v199 = vpop.f32.mrb[0].mxu0
    %v200 = vadd.f32 %v72, %v199
    %v201 = vpop.f32.mrb[0].mxu0
    %v202 = vpop.f32.mrb[0].mxu0
    %v203 = vadd.f32 %v72, %v202
    %v204 = vpop.f32.mrb[0].mxu0
    %205 = vmatprep.mubr.bf16.mxu0 0
    %206 = vmatmul.mubr.bf16.gmra.mrb[0].mxu0 %v140
    %v207 = vpop.f32.mrb[0].mxu0
    %v208 = vadd.f32 %v72, %v207
    %v209 = vpop.f32.mrb[0].mxu0
    %v210 = vpop.f32.mrb[0].mxu0
    %v211 = vadd.f32 %v72, %v210
    %v212 = vpop.f32.mrb[0].mxu0
    %213 = vmatprep.mubr.bf16.mxu0 0
    %214 = vmatmul.mubr.bf16.gmra.mrb[0].mxu0 %v143
    %v215 = vpop.f32.mrb[0].mxu0
    %v216 = vadd.f32 %v72, %v215
    %v217 = vpop.f32.mrb[0].mxu0
    %v218 = vpop.f32.mrb[0].mxu0
    %v219 = vadd.f32 %v72, %v218
    %v220 = vpop.f32.mrb[0].mxu0
    %221 = vmatprep.mubr.bf16.mxu0 0
    %222 = vmatmul.mubr.bf16.gmra.mrb[0].mxu0 %v146
    %v223 = vpop.f32.mrb[0].mxu0
    %v224 = vadd.f32 %v72, %v223
    %v225 = vpop.f32.mrb[0].mxu0
    %v226 = vpop.f32.mrb[0].mxu0
    %v227 = vadd.f32 %v72, %v226
    %v228 = vpop.f32.mrb[0].mxu0
    %229 = vmatprep.mubr.bf16.mxu0 0
    %230 = vmatmul.mubr.bf16.gmra.mrb[0].mxu0 %v149
    %v231 = vpop.f32.mrb[0].mxu0
    %v232 = vadd.f32 %v72, %v231
    %v233 = vpop.f32.mrb[0].mxu0
    %v234 = vpop.f32.mrb[0].mxu0
    %v235 = vadd.f32 %v72, %v234
    %v236 = vpop.f32.mrb[0].mxu0
    %237 = vmatprep.mubr.bf16.mxu0 0
    %238 = vmatmul.mubr.bf16.gmra.mrb[0].mxu0 %v152
    %v239 = vpop.f32.mrb[0].mxu0
    %v240 = vadd.f32 %v72, %v239
    %v241 = vpop.f32.mrb[0].mxu0
    %v242 = vpop.f32.mrb[0].mxu0
    %v243 = vadd.f32 %v72, %v242
    %v244 = vpop.f32.mrb[0].mxu0
    %245 = vmatprep.mubr.bf16.mxu0 0
    %246 = vmatmul.mubr.bf16.gmra.mrb[0].mxu0 %v155
    %v247 = vpop.f32.mrb[0].mxu0
    %v248 = vadd.f32 %v72, %v247
    %v249 = vpop.f32.mrb[0].mxu0
    %v250 = vpop.f32.mrb[0].mxu0
    %v251 = vadd.f32 %v72, %v250
    %v252 = vpop.f32.mrb[0].mxu0
    %253 = vdwg.mxu0
    %s254 = sld [smem:[#allocation2]]
    %vm255 = vcmp.ge.f32.partialorder %v192, 0.0
    %vm256 = vcmp.ge.f32.partialorder %v195, 0.0
    %vm257 = vcmp.ge.f32.partialorder %v200, 0.0
    %vm258 = vcmp.ge.f32.partialorder %v203, 0.0
    %vm259 = vcmp.ge.f32.partialorder %v208, 0.0
    %vm260 = vcmp.ge.f32.partialorder %v211, 0.0
    %vm261 = vcmp.ge.f32.partialorder %v216, 0.0
    %vm262 = vcmp.ge.f32.partialorder %v219, 0.0
    %vm263 = vcmp.ge.f32.partialorder %v224, 0.0
    %vm264 = vcmp.ge.f32.partialorder %v227, 0.0
    %vm265 = vcmp.ge.f32.partialorder %v232, 0.0
    %vm266 = vcmp.ge.f32.partialorder %v235, 0.0
    %vm267 = vcmp.ge.f32.partialorder %v240, 0.0
    %vm268 = vcmp.ge.f32.partialorder %v243, 0.0
    %vm269 = vcmp.ge.f32.partialorder %v248, 0.0
    %vm270 = vcmp.ge.f32.partialorder %v251, 0.0
    %v271 = vstv %s254
    %v272 = vmul.f32 %v271, %v192
    %v273 = vmul.f32 %v271, %v195
    %v274 = vmul.f32 %v271, %v200
    %v275 = vmul.f32 %v271, %v203
    %v276 = vmul.f32 %v271, %v208
    %v277 = vmul.f32 %v271, %v211
    %v278 = vmul.f32 %v271, %v216
    %v279 = vmul.f32 %v271, %v219
    %v280 = vmul.f32 %v271, %v224
    %v281 = vmul.f32 %v271, %v227
    %v282 = vmul.f32 %v271, %v232
    %v283 = vmul.f32 %v271, %v235
    %v284 = vmul.f32 %v271, %v240
    %v285 = vmul.f32 %v271, %v243
    %v286 = vmul.f32 %v271, %v248
    %v287 = vmul.f32 %v271, %v251
    %v288 = vsel %vm255, %v192, %v272
    %v289 = vsel %vm256, %v195, %v273
    %v290 = vsel %vm257, %v200, %v274
    %v291 = vsel %vm258, %v203, %v275
    %v292 = vsel %vm259, %v208, %v276
    %v293 = vsel %vm260, %v211, %v277
    %v294 = vsel %vm261, %v216, %v278
    %v295 = vsel %vm262, %v219, %v279
    %v296 = vsel %vm263, %v224, %v280
    %v297 = vsel %vm264, %v227, %v281
    %v298 = vsel %vm265, %v232, %v282
    %v299 = vsel %vm266, %v235, %v283
    %v300 = vsel %vm267, %v240, %v284
    %v301 = vsel %vm268, %v243, %v285
    %v302 = vsel %vm269, %v248, %v286
    %v303 = vsel %vm270, %v251, %v287
    %304 = vst [vmem:[%s4] sm:$0xff] %v288
    %305 = vst [vmem:[%s4 + $0x8] sm:$0xff] %v289
    %306 = vst [vmem:[%s4 + $0x10] sm:$0xff] %v290
    %307 = vst [vmem:[%s4 + $0x18] sm:$0xff] %v291
    %308 = vst [vmem:[%s4 + $0x20] sm:$0xff] %v292
    %309 = vst [vmem:[%s4 + $0x28] sm:$0xff] %v293
    %310 = vst [vmem:[%s4 + $0x30] sm:$0xff] %v294
    %311 = vst [vmem:[%s4 + $0x38] sm:$0xff] %v295
    %312 = vst [vmem:[%s4 + $0x40] sm:$0xff] %v296
    %313 = vst [vmem:[%s4 + $0x48] sm:$0xff] %v297
    %314 = vst [vmem:[%s4 + $0x50] sm:$0xff] %v298
    %315 = vst [vmem:[%s4 + $0x58] sm:$0xff] %v299
    %316 = vst [vmem:[%s4 + $0x60] sm:$0xff] %v300
    %317 = vst [vmem:[%s4 + $0x68] sm:$0xff] %v301
    %318 = vst [vmem:[%s4 + $0x70] sm:$0xff] %v302
    %319 = vst [vmem:[%s4 + $0x78] sm:$0xff] %v303
    // Predicated region
    $region26: #{cfb_forward.13} parent=1 // pred_check
      _
    $region27: #{cfb_forward.13} parent=1 // pred_check_branch
      %321 = sbr.rel (0) target = $region29
    $region28: #{cfb_forward.13} parent=1 // pred_region
      _
    $region29: #{cfb_forward.13} parent=1 // pred_fallthru
      _
    // Predicated region
    $region30: #{cfb_forward.13} parent=1 // pred_check
      _
    $region31: #{cfb_forward.13} parent=1 // pred_check_branch
      %323 = sbr.rel (0) target = $region33
    $region32: #{cfb_forward.13} parent=1 // pred_region
      _
    $region33: #{cfb_forward.13} parent=1 // pred_fallthru
      _
    %324 = vsyncpa [#allocation4], 1
    %325 = vsyncpa [#allocation6], 1

// kernel: cfb_forward.14
$region0: #{cfb_forward.14}
  #allocation0 [shape = 'u32[]', space=smem, size = 0x4, offset = 0x4, fixed_abs, tag = 'smem constant byte address 0x4 - core index']
  #allocation1 [shape = 'u32[144,128]{1,0:T(1,128)}', space=vmem, size = 0x12000, scoped, tag = 'internal scratch']
  #allocation2 [shape = 'f32[1]{0:T(128)S(6)}', space=smem, size = 0x200, scoped, tag = 'scoped memory for cfb_forward.14']
  %s0 = inlined_call_operand.vmem [shape: bf16[128,144], index: 0, kind: input, shape index: {}]
  %s1 = inlined_call_operand.vmem [shape: bf16[144,128], index: 1, kind: input, shape index: {}]
  %s2 = inlined_call_operand.vmem [shape: f32[1,128], index: 2, kind: input, shape index: {}]
  %s3 = inlined_call_operand.<no memory space> [shape: f32[1], index: 3, kind: input, shape index: {}]
  %s4 = inlined_call_operand.vmem [shape: f32[128,128], index: 4, kind: output, shape index: {}]
  %s5 = sld [smem:[#allocation0]]
  $region26: #{cfb_forward.14} parent=0
    _
  %s7 = ssub.s32 1, %s5
  %s8 = scalar_select 0, %s7, %s5
  %9 = sst [smem:[#allocation2]] %s3
  // Predicated region
  $region2: #{cfb_forward.14} parent=0 // pred_check
    _
  $region3: #{cfb_forward.14} parent=0 // pred_check_branch
    %11 = sbr.rel (0) target = $region5
  $region4: #{cfb_forward.14} parent=0 // pred_region
    _
  $region5: #{cfb_forward.14} parent=0 // pred_fallthru
    _
  // Predicated region
  $region6: #{cfb_forward.14} parent=0 // pred_check
    _
  $region7: #{cfb_forward.14} parent=0 // pred_check_branch
    %13 = sbr.rel (0) target = $region9
  $region8: #{cfb_forward.14} parent=0 // pred_region
    _
  $region9: #{cfb_forward.14} parent=0 // pred_fallthru
    _
  // Predicated region
  $region10: #{cfb_forward.14} parent=0 // pred_check
    _
  $region11: #{cfb_forward.14} parent=0 // pred_check_branch
    %15 = sbr.rel (0) target = $region13
  $region12: #{cfb_forward.14} parent=0 // pred_region
    _
  $region13: #{cfb_forward.14} parent=0 // pred_fallthru
    _
  // Predicated region
  $region14: #{cfb_forward.14} parent=0 // pred_check
    _
  $region15: #{cfb_forward.14} parent=0 // pred_check_branch
    %17 = sbr.rel (0) target = $region17
  $region16: #{cfb_forward.14} parent=0 // pred_region
    _
  $region17: #{cfb_forward.14} parent=0 // pred_fallthru
    _
  %v19 = vld [vmem:[%s0] sm:$0xff]
  %v20 = vld [vmem:[%s0 + $0x8] sm:$0xff]
  %v21 = vld [vmem:[%s0 + $0x10] sm:$0xff]
  %v22 = vld [vmem:[%s0 + $0x18] sm:$0xff]
  %v23 = vld [vmem:[%s0 + $0x20] sm:$0xff]
  %v24 = vld [vmem:[%s0 + $0x28] sm:$0xff]
  %v25 = vld [vmem:[%s0 + $0x30] sm:$0xff]
  %v26 = vld [vmem:[%s0 + $0x38] sm:$0xff]
  %v27 = vld [vmem:[%s0 + $0x40] sm:$0xff]
  %v28 = vld [vmem:[%s0 + $0x48] sm:$0xff]
  %v29 = vld [vmem:[%s0 + $0x50] sm:$0xff]
  %v30 = vld [vmem:[%s0 + $0x58] sm:$0xff]
  %v31 = vld [vmem:[%s0 + $0x60] sm:$0xff]
  %v32 = vld [vmem:[%s0 + $0x68] sm:$0xff]
  %v33 = vld [vmem:[%s0 + $0x70] sm:$0xff]
  %v34 = vld [vmem:[%s0 + $0x78] sm:$0xff]
  %v35 = vld [vmem:[%s1] sm:$0xf]
  %v36 = vld [vmem:[%s1 + $0x4] sm:$0xf]
  %v37 = vld [vmem:[%s1 + $0x8] sm:$0xf]
  %v38 = vld [vmem:[%s1 + $0xc] sm:$0xf]
  %v39 = vld [vmem:[%s1 + $0x10] sm:$0xf]
  %v40 = vld [vmem:[%s1 + $0x14] sm:$0xf]
  %v41 = vld [vmem:[%s1 + $0x18] sm:$0xf]
  %v42 = vld [vmem:[%s1 + $0x1c] sm:$0xf]
  %v43 = vld [vmem:[%s1 + $0x20] sm:$0xf]
  %v44 = vld [vmem:[%s1 + $0x24] sm:$0xf]
  %v45 = vld [vmem:[%s1 + $0x28] sm:$0xf]
  %v46 = vld [vmem:[%s1 + $0x2c] sm:$0xf]
  %v47 = vld [vmem:[%s1 + $0x30] sm:$0xf]
  %v48 = vld [vmem:[%s1 + $0x34] sm:$0xf]
  %v49 = vld [vmem:[%s1 + $0x38] sm:$0xf]
  %v50 = vld [vmem:[%s1 + $0x3c] sm:$0xf]
  %v51 = vld [vmem:[%s1 + $0x40] sm:$0xf]
  %v52 = vld [vmem:[%s1 + $0x44] sm:$0xf]
  %v53 = vld [vmem:[%s2] sm:$0x1]
  %v55 = vlaneseq
  %v56 = vshrl.u32 %v55, 7
  %v57 = vsub.s32 0, %v56
  %v58 = vrot.slane %v53, %v57
  %v76 = vunpack.c.l.b16 %v19
  %v77 = vunpack.c.h.b16 %v19
  %v78 = vunpack.c.l.b16 %v20
  %v79 = vunpack.c.h.b16 %v20
  %v80 = vunpack.c.l.b16 %v21
  %v81 = vunpack.c.h.b16 %v21
  %v82 = vunpack.c.l.b16 %v22
  %v83 = vunpack.c.h.b16 %v22
  %v84 = vunpack.c.l.b16 %v23
  %v85 = vunpack.c.h.b16 %v23
  %v86 = vunpack.c.l.b16 %v24
  %v87 = vunpack.c.h.b16 %v24
  %v88 = vunpack.c.l.b16 %v25
  %v89 = vunpack.c.h.b16 %v25
  %v90 = vunpack.c.l.b16 %v26
  %v91 = vunpack.c.h.b16 %v26
  %v92 = vunpack.c.l.b16 %v27
  %v93 = vunpack.c.h.b16 %v27
  %v94 = vunpack.c.l.b16 %v28
  %v95 = vunpack.c.h.b16 %v28
  %v96 = vunpack.c.l.b16 %v29
  %v97 = vunpack.c.h.b16 %v29
  %v98 = vunpack.c.l.b16 %v30
  %v99 = vunpack.c.h.b16 %v30
  %v100 = vunpack.c.l.b16 %v31
  %v101 = vunpack.c.h.b16 %v31
  %v102 = vunpack.c.l.b16 %v32
  %v103 = vunpack.c.h.b16 %v32
  %v104 = vunpack.c.l.b16 %v33
  %v105 = vunpack.c.h.b16 %v33
  %v106 = vunpack.c.l.b16 %v34
  %v107 = vunpack.c.h.b16 %v34
  %v108 = vpack.c.b16 %v78, %v76
  %v109 = vpack.c.b16 %v79, %v77
  %v110 = vpack.c.b16 %v82, %v80
  %v111 = vpack.c.b16 %v83, %v81
  %v112 = vpack.c.b16 %v86, %v84
  %v113 = vpack.c.b16 %v87, %v85
  %v114 = vpack.c.b16 %v90, %v88
  %v115 = vpack.c.b16 %v91, %v89
  %v116 = vpack.c.b16 %v94, %v92
  %v117 = vpack.c.b16 %v95, %v93
  %v118 = vpack.c.b16 %v98, %v96
  %v119 = vpack.c.b16 %v99, %v97
  %v120 = vpack.c.b16 %v102, %v100
  %v121 = vpack.c.b16 %v103, %v101
  %v122 = vpack.c.b16 %v106, %v104
  %v123 = vpack.c.b16 %v107, %v105
  %v150 = vunpack.c.l.b16 %v35
  %v151 = vunpack.c.l.b16 %v36
  %v152 = vunpack.c.l.b16 %v37
  %v153 = vunpack.c.l.b16 %v38
  %v154 = vunpack.c.l.b16 %v39
  %v155 = vunpack.c.l.b16 %v40
  %v156 = vunpack.c.l.b16 %v41
  %v157 = vunpack.c.l.b16 %v42
  %v158 = vunpack.c.l.b16 %v43
  %v159 = vunpack.c.l.b16 %v44
  %v160 = vunpack.c.l.b16 %v45
  %v161 = vunpack.c.l.b16 %v46
  %v162 = vunpack.c.l.b16 %v47
  %v163 = vunpack.c.l.b16 %v48
  %v164 = vunpack.c.l.b16 %v49
  %v165 = vunpack.c.l.b16 %v50
  %v166 = vunpack.c.l.b16 %v51
  %v167 = vunpack.c.l.b16 %v52
  %v168 = vpack.c.b16 %v151, %v150
  %v169 = vpack.c.b16 %v153, %v152
  %v170 = vpack.c.b16 %v155, %v154
  %v171 = vpack.c.b16 %v157, %v156
  %v172 = vpack.c.b16 %v159, %v158
  %v173 = vpack.c.b16 %v161, %v160
  %v174 = vpack.c.b16 %v163, %v162
  %v175 = vpack.c.b16 %v165, %v164
  %v176 = vpack.c.b16 %v167, %v166
  %vm186 = vcmask 130048
  %v188 = vsel %vm186, %v109, 0
  %v191 = vsel %vm186, %v111, 0
  %v194 = vsel %vm186, %v113, 0
  %v197 = vsel %vm186, %v115, 0
  %v200 = vsel %vm186, %v117, 0
  %v203 = vsel %vm186, %v119, 0
  %v206 = vsel %vm186, %v121, 0
  %v209 = vsel %vm186, %v123, 0
  %211 = vmatprep.subr.bf16.mxu0 0
  %212 = vmatpush1.bf16.msra.mxu0 %v168
  %213 = vmatprep.subr.bf16.mxu0 0
  %214 = vmatpush1.bf16.msra.mxu0 %v169
  %215 = vmatprep.subr.bf16.mxu0 0
  %216 = vmatpush1.bf16.msra.mxu0 %v170
  %217 = vmatprep.subr.bf16.mxu0 0
  %218 = vmatpush1.bf16.msra.mxu0 %v171
  %219 = vmatprep.subr.bf16.mxu0 0
  %220 = vmatpush1.bf16.msra.mxu0 %v172
  %221 = vmatprep.subr.bf16.mxu0 0
  %222 = vmatpush1.bf16.msra.mxu0 %v173
  %223 = vmatprep.subr.bf16.mxu0 0
  %224 = vmatpush1.bf16.msra.mxu0 %v174
  %225 = vmatprep.subr.bf16.mxu0 0
  %226 = vmatpush1.bf16.msra.mxu0 %v175
  %227 = vmatprep.subr.bf16.mxu0 0
  %228 = vmatpush1.bf16.msra.mxu0 %v176
  %229 = vmatprep.subr.bf16.mxu0 0
  %230 = vmatpush1.bf16.msra.mxu0 0
  %231 = vmatprep.subr.bf16.mxu0 0
  %232 = vmatpush1.bf16.msra.mxu0 0
  %233 = vmatprep.subr.bf16.mxu0 0
  %234 = vmatpush1.bf16.msra.mxu0 0
  %235 = vmatprep.subr.bf16.mxu0 0
  %236 = vmatpush1.bf16.msra.mxu0 0
  %237 = vmatprep.subr.bf16.mxu0 0
  %238 = vmatpush1.bf16.msra.mxu0 0
  %239 = vmatprep.subr.bf16.mxu0 0
  %240 = vmatpush1.bf16.msra.mxu0 0
  %241 = vmatprep.subr.bf16.mxu0 0
  %242 = vmatpush1.bf16.msra.mxu0 0
  %243 = vmatprep.mubr.bf16.mxu0 %v188
  %244 = vmatmul.mubr.bf16.gmra.mrb[0].mxu0 %v108
  %v245 = vpop.f32.mrb[0].mxu0
  %v246 = vadd.f32 %v58, %v245
  %v247 = vpop.f32.mrb[0].mxu0
  %v248 = vpop.f32.mrb[0].mxu0
  %v249 = vadd.f32 %v58, %v248
  %v250 = vpop.f32.mrb[0].mxu0
  %251 = vmatprep.mubr.bf16.mxu0 %v191
  %252 = vmatmul.mubr.bf16.gmra.mrb[0].mxu0 %v110
  %v253 = vpop.f32.mrb[0].mxu0
  %v254 = vadd.f32 %v58, %v253
  %v255 = vpop.f32.mrb[0].mxu0
  %v256 = vpop.f32.mrb[0].mxu0
  %v257 = vadd.f32 %v58, %v256
  %v258 = vpop.f32.mrb[0].mxu0
  %259 = vmatprep.mubr.bf16.mxu0 %v194
  %260 = vmatmul.mubr.bf16.gmra.mrb[0].mxu0 %v112
  %v261 = vpop.f32.mrb[0].mxu0
  %v262 = vadd.f32 %v58, %v261
  %v263 = vpop.f32.mrb[0].mxu0
  %v264 = vpop.f32.mrb[0].mxu0
  %v265 = vadd.f32 %v58, %v264
  %v266 = vpop.f32.mrb[0].mxu0
  %267 = vmatprep.mubr.bf16.mxu0 %v197
  %268 = vmatmul.mubr.bf16.gmra.mrb[0].mxu0 %v114
  %v269 = vpop.f32.mrb[0].mxu0
  %v270 = vadd.f32 %v58, %v269
  %v271 = vpop.f32.mrb[0].mxu0
  %v272 = vpop.f32.mrb[0].mxu0
  %v273 = vadd.f32 %v58, %v272
  %v274 = vpop.f32.mrb[0].mxu0
  %275 = vmatprep.mubr.bf16.mxu0 %v200
  %276 = vmatmul.mubr.bf16.gmra.mrb[0].mxu0 %v116
  %v277 = vpop.f32.mrb[0].mxu0
  %v278 = vadd.f32 %v58, %v277
  %v279 = vpop.f32.mrb[0].mxu0
  %v280 = vpop.f32.mrb[0].mxu0
  %v281 = vadd.f32 %v58, %v280
  %v282 = vpop.f32.mrb[0].mxu0
  %283 = vmatprep.mubr.bf16.mxu0 %v203
  %284 = vmatmul.mubr.bf16.gmra.mrb[0].mxu0 %v118
  %v285 = vpop.f32.mrb[0].mxu0
  %v286 = vadd.f32 %v58, %v285
  %v287 = vpop.f32.mrb[0].mxu0
  %v288 = vpop.f32.mrb[0].mxu0
  %v289 = vadd.f32 %v58, %v288
  %v290 = vpop.f32.mrb[0].mxu0
  %291 = vmatprep.mubr.bf16.mxu0 %v206
  %292 = vmatmul.mubr.bf16.gmra.mrb[0].mxu0 %v120
  %v293 = vpop.f32.mrb[0].mxu0
  %v294 = vadd.f32 %v58, %v293
  %v295 = vpop.f32.mrb[0].mxu0
  %v296 = vpop.f32.mrb[0].mxu0
  %v297 = vadd.f32 %v58, %v296
  %v298 = vpop.f32.mrb[0].mxu0
  %299 = vmatprep.mubr.bf16.mxu0 %v209
  %300 = vmatmul.mubr.bf16.gmra.mrb[0].mxu0 %v122
  %v301 = vpop.f32.mrb[0].mxu0
  %v302 = vadd.f32 %v58, %v301
  %v303 = vpop.f32.mrb[0].mxu0
  %v304 = vpop.f32.mrb[0].mxu0
  %v305 = vadd.f32 %v58, %v304
  %v306 = vpop.f32.mrb[0].mxu0
  %307 = vdwg.mxu0
  %s308 = sld [smem:[#allocation2]]
  %vm309 = vcmp.ge.f32.partialorder %v246, 0.0
  %vm310 = vcmp.ge.f32.partialorder %v249, 0.0
  %vm311 = vcmp.ge.f32.partialorder %v254, 0.0
  %vm312 = vcmp.ge.f32.partialorder %v257, 0.0
  %vm313 = vcmp.ge.f32.partialorder %v262, 0.0
  %vm314 = vcmp.ge.f32.partialorder %v265, 0.0
  %vm315 = vcmp.ge.f32.partialorder %v270, 0.0
  %vm316 = vcmp.ge.f32.partialorder %v273, 0.0
  %vm317 = vcmp.ge.f32.partialorder %v278, 0.0
  %vm318 = vcmp.ge.f32.partialorder %v281, 0.0
  %vm319 = vcmp.ge.f32.partialorder %v286, 0.0
  %vm320 = vcmp.ge.f32.partialorder %v289, 0.0
  %vm321 = vcmp.ge.f32.partialorder %v294, 0.0
  %vm322 = vcmp.ge.f32.partialorder %v297, 0.0
  %vm323 = vcmp.ge.f32.partialorder %v302, 0.0
  %vm324 = vcmp.ge.f32.partialorder %v305, 0.0
  %v325 = vstv %s308
  %v326 = vmul.f32 %v325, %v246
  %v327 = vmul.f32 %v325, %v249
  %v328 = vmul.f32 %v325, %v254
  %v329 = vmul.f32 %v325, %v257
  %v330 = vmul.f32 %v325, %v262
  %v331 = vmul.f32 %v325, %v265
  %v332 = vmul.f32 %v325, %v270
  %v333 = vmul.f32 %v325, %v273
  %v334 = vmul.f32 %v325, %v278
  %v335 = vmul.f32 %v325, %v281
  %v336 = vmul.f32 %v325, %v286
  %v337 = vmul.f32 %v325, %v289
  %v338 = vmul.f32 %v325, %v294
  %v339 = vmul.f32 %v325, %v297
  %v340 = vmul.f32 %v325, %v302
  %v341 = vmul.f32 %v325, %v305
  %v342 = vsel %vm309, %v246, %v326
  %v343 = vsel %vm310, %v249, %v327
  %v344 = vsel %vm311, %v254, %v328
  %v345 = vsel %vm312, %v257, %v329
  %v346 = vsel %vm313, %v262, %v330
  %v347 = vsel %vm314, %v265, %v331
  %v348 = vsel %vm315, %v270, %v332
  %v349 = vsel %vm316, %v273, %v333
  %v350 = vsel %vm317, %v278, %v334
  %v351 = vsel %vm318, %v281, %v335
  %v352 = vsel %vm319, %v286, %v336
  %v353 = vsel %vm320, %v289, %v337
  %v354 = vsel %vm321, %v294, %v338
  %v355 = vsel %vm322, %v297, %v339
  %v356 = vsel %vm323, %v302, %v340
  %v357 = vsel %vm324, %v305, %v341
  %358 = vst [vmem:[%s4] sm:$0xff] %v342
  %359 = vst [vmem:[%s4 + $0x8] sm:$0xff] %v343
  %360 = vst [vmem:[%s4 + $0x10] sm:$0xff] %v344
  %361 = vst [vmem:[%s4 + $0x18] sm:$0xff] %v345
  %362 = vst [vmem:[%s4 + $0x20] sm:$0xff] %v346
  %363 = vst [vmem:[%s4 + $0x28] sm:$0xff] %v347
  %364 = vst [vmem:[%s4 + $0x30] sm:$0xff] %v348
  %365 = vst [vmem:[%s4 + $0x38] sm:$0xff] %v349
  %366 = vst [vmem:[%s4 + $0x40] sm:$0xff] %v350
  %367 = vst [vmem:[%s4 + $0x48] sm:$0xff] %v351
  %368 = vst [vmem:[%s4 + $0x50] sm:$0xff] %v352
  %369 = vst [vmem:[%s4 + $0x58] sm:$0xff] %v353
  %370 = vst [vmem:[%s4 + $0x60] sm:$0xff] %v354
  %371 = vst [vmem:[%s4 + $0x68] sm:$0xff] %v355
  %372 = vst [vmem:[%s4 + $0x70] sm:$0xff] %v356
  %373 = vst [vmem:[%s4 + $0x78] sm:$0xff] %v357
  // Predicated region
  $region18: #{cfb_forward.14} parent=0 // pred_check
    _
  $region19: #{cfb_forward.14} parent=0 // pred_check_branch
    %375 = sbr.rel (0) target = $region21
  $region20: #{cfb_forward.14} parent=0 // pred_region
    _
  $region21: #{cfb_forward.14} parent=0 // pred_fallthru
    _
  // Predicated region
  $region22: #{cfb_forward.14} parent=0 // pred_check
    _
  $region23: #{cfb_forward.14} parent=0 // pred_check_branch
    %377 = sbr.rel (0) target = $region25
  $region24: #{cfb_forward.14} parent=0 // pred_region
    _
  $region25: #{cfb_forward.14} parent=0 // pred_fallthru
    _

// kernel: cfb_forward.16
$region0: #{cfb_forward.16}
  #allocation0 [shape = 'u32[]', space=smem, size = 0x4, offset = 0x4, fixed_abs, tag = 'smem constant byte address 0x4 - core index']
  #allocation1 [shape = 'u32[144,128]{1,0:T(1,128)}', space=vmem, size = 0x12000, scoped, tag = 'internal scratch']
  #allocation2 [shape = 'f32[1]{0:T(128)S(6)}', space=smem, size = 0x200, scoped, tag = 'scoped memory for cfb_forward.16']
  %s0 = inlined_call_operand.vmem [shape: bf16[128,32], index: 0, kind: input, shape index: {}]
  %s1 = inlined_call_operand.vmem [shape: bf16[32,128], index: 1, kind: input, shape index: {}]
  %s2 = inlined_call_operand.vmem [shape: f32[1,128], index: 2, kind: input, shape index: {}]
  %s3 = inlined_call_operand.<no memory space> [shape: f32[1], index: 3, kind: input, shape index: {}]
  %s4 = inlined_call_operand.vmem [shape: f32[128,128], index: 4, kind: output, shape index: {}]
  %s5 = sld [smem:[#allocation0]]
  $region26: #{cfb_forward.16} parent=0
    _
  %s7 = ssub.s32 1, %s5
  %s8 = scalar_select 0, %s7, %s5
  %9 = sst [smem:[#allocation2]] %s3
  // Predicated region
  $region2: #{cfb_forward.16} parent=0 // pred_check
    _
  $region3: #{cfb_forward.16} parent=0 // pred_check_branch
    %11 = sbr.rel (0) target = $region5
  $region4: #{cfb_forward.16} parent=0 // pred_region
    _
  $region5: #{cfb_forward.16} parent=0 // pred_fallthru
    _
  // Predicated region
  $region6: #{cfb_forward.16} parent=0 // pred_check
    _
  $region7: #{cfb_forward.16} parent=0 // pred_check_branch
    %13 = sbr.rel (0) target = $region9
  $region8: #{cfb_forward.16} parent=0 // pred_region
    _
  $region9: #{cfb_forward.16} parent=0 // pred_fallthru
    _
  // Predicated region
  $region10: #{cfb_forward.16} parent=0 // pred_check
    _
  $region11: #{cfb_forward.16} parent=0 // pred_check_branch
    %15 = sbr.rel (0) target = $region13
  $region12: #{cfb_forward.16} parent=0 // pred_region
    _
  $region13: #{cfb_forward.16} parent=0 // pred_fallthru
    _
  // Predicated region
  $region14: #{cfb_forward.16} parent=0 // pred_check
    _
  $region15: #{cfb_forward.16} parent=0 // pred_check_branch
    %17 = sbr.rel (0) target = $region17
  $region16: #{cfb_forward.16} parent=0 // pred_region
    _
  $region17: #{cfb_forward.16} parent=0 // pred_fallthru
    _
  %v19 = vld [vmem:[%s0] sm:$0xf]
  %v20 = vld [vmem:[%s0 + $0x4] sm:$0xf]
  %v21 = vld [vmem:[%s0 + $0x8] sm:$0xf]
  %v22 = vld [vmem:[%s0 + $0xc] sm:$0xf]
  %v23 = vld [vmem:[%s0 + $0x10] sm:$0xf]
  %v24 = vld [vmem:[%s0 + $0x14] sm:$0xf]
  %v25 = vld [vmem:[%s0 + $0x18] sm:$0xf]
  %v26 = vld [vmem:[%s0 + $0x1c] sm:$0xf]
  %v27 = vld [vmem:[%s0 + $0x20] sm:$0xf]
  %v28 = vld [vmem:[%s0 + $0x24] sm:$0xf]
  %v29 = vld [vmem:[%s0 + $0x28] sm:$0xf]
  %v30 = vld [vmem:[%s0 + $0x2c] sm:$0xf]
  %v31 = vld [vmem:[%s0 + $0x30] sm:$0xf]
  %v32 = vld [vmem:[%s0 + $0x34] sm:$0xf]
  %v33 = vld [vmem:[%s0 + $0x38] sm:$0xf]
  %v34 = vld [vmem:[%s0 + $0x3c] sm:$0xf]
  %v35 = vld [vmem:[%s1] sm:$0xf]
  %v36 = vld [vmem:[%s1 + $0x4] sm:$0xf]
  %v37 = vld [vmem:[%s1 + $0x8] sm:$0xf]
  %v38 = vld [vmem:[%s1 + $0xc] sm:$0xf]
  %v39 = vld [vmem:[%s2] sm:$0x1]
  %v41 = vlaneseq
  %v42 = vshrl.u32 %v41, 7
  %v43 = vsub.s32 0, %v42
  %v44 = vrot.slane %v39, %v43
  %v62 = vunpack.c.l.b16 %v19
  %v63 = vunpack.c.l.b16 %v20
  %v64 = vunpack.c.l.b16 %v21
  %v65 = vunpack.c.l.b16 %v22
  %v66 = vunpack.c.l.b16 %v23
  %v67 = vunpack.c.l.b16 %v24
  %v68 = vunpack.c.l.b16 %v25
  %v69 = vunpack.c.l.b16 %v26
  %v70 = vunpack.c.l.b16 %v27
  %v71 = vunpack.c.l.b16 %v28
  %v72 = vunpack.c.l.b16 %v29
  %v73 = vunpack.c.l.b16 %v30
  %v74 = vunpack.c.l.b16 %v31
  %v75 = vunpack.c.l.b16 %v32
  %v76 = vunpack.c.l.b16 %v33
  %v77 = vunpack.c.l.b16 %v34
  %v78 = vpack.c.b16 %v63, %v62
  %v79 = vpack.c.b16 %v65, %v64
  %v80 = vpack.c.b16 %v67, %v66
  %v81 = vpack.c.b16 %v69, %v68
  %v82 = vpack.c.b16 %v71, %v70
  %v83 = vpack.c.b16 %v73, %v72
  %v84 = vpack.c.b16 %v75, %v74
  %v85 = vpack.c.b16 %v77, %v76
  %v90 = vunpack.c.l.b16 %v35
  %v91 = vunpack.c.l.b16 %v36
  %v92 = vunpack.c.l.b16 %v37
  %v93 = vunpack.c.l.b16 %v38
  %v94 = vpack.c.b16 %v91, %v90
  %v95 = vpack.c.b16 %v93, %v92
  %vm98 = vcmask 261120
  %v100 = vsel %vm98, %v78, 0
  %v103 = vsel %vm98, %v79, 0
  %v106 = vsel %vm98, %v80, 0
  %v109 = vsel %vm98, %v81, 0
  %v112 = vsel %vm98, %v82, 0
  %v115 = vsel %vm98, %v83, 0
  %v118 = vsel %vm98, %v84, 0
  %v121 = vsel %vm98, %v85, 0
  %123 = vmatprep.subr.bf16.mxu0 0
  %124 = vmatpush1.bf16.msra.mxu0 %v94
  %125 = vmatprep.subr.bf16.mxu0 0
  %126 = vmatpush1.bf16.msra.mxu0 %v95
  %127 = vmatprep.subr.bf16.mxu0 0
  %128 = vmatpush1.bf16.msra.mxu0 0
  %129 = vmatprep.subr.bf16.mxu0 0
  %130 = vmatpush1.bf16.msra.mxu0 0
  %131 = vmatprep.subr.bf16.mxu0 0
  %132 = vmatpush1.bf16.msra.mxu0 0
  %133 = vmatprep.subr.bf16.mxu0 0
  %134 = vmatpush1.bf16.msra.mxu0 0
  %135 = vmatprep.subr.bf16.mxu0 0
  %136 = vmatpush1.bf16.msra.mxu0 0
  %137 = vmatprep.subr.bf16.mxu0 0
  %138 = vmatpush1.bf16.msra.mxu0 0
  %139 = vmatprep.subr.bf16.mxu0 0
  %140 = vmatpush1.bf16.msra.mxu0 0
  %141 = vmatprep.subr.bf16.mxu0 0
  %142 = vmatpush1.bf16.msra.mxu0 0
  %143 = vmatprep.subr.bf16.mxu0 0
  %144 = vmatpush1.bf16.msra.mxu0 0
  %145 = vmatprep.subr.bf16.mxu0 0
  %146 = vmatpush1.bf16.msra.mxu0 0
  %147 = vmatprep.subr.bf16.mxu0 0
  %148 = vmatpush1.bf16.msra.mxu0 0
  %149 = vmatprep.subr.bf16.mxu0 0
  %150 = vmatpush1.bf16.msra.mxu0 0
  %151 = vmatprep.subr.bf16.mxu0 0
  %152 = vmatpush1.bf16.msra.mxu0 0
  %153 = vmatprep.subr.bf16.mxu0 0
  %154 = vmatpush1.bf16.msra.mxu0 0
  %155 = vmatprep.mubr.bf16.mxu0 0
  %156 = vmatmul.mubr.bf16.gmra.mrb[0].mxu0 %v100
  %v157 = vpop.f32.mrb[0].mxu0
  %v158 = vadd.f32 %v44, %v157
  %v159 = vpop.f32.mrb[0].mxu0
  %v160 = vpop.f32.mrb[0].mxu0
  %v161 = vadd.f32 %v44, %v160
  %v162 = vpop.f32.mrb[0].mxu0
  %163 = vmatprep.mubr.bf16.mxu0 0
  %164 = vmatmul.mubr.bf16.gmra.mrb[0].mxu0 %v103
  %v165 = vpop.f32.mrb[0].mxu0
  %v166 = vadd.f32 %v44, %v165
  %v167 = vpop.f32.mrb[0].mxu0
  %v168 = vpop.f32.mrb[0].mxu0
  %v169 = vadd.f32 %v44, %v168
  %v170 = vpop.f32.mrb[0].mxu0
  %171 = vmatprep.mubr.bf16.mxu0 0
  %172 = vmatmul.mubr.bf16.gmra.mrb[0].mxu0 %v106
  %v173 = vpop.f32.mrb[0].mxu0
  %v174 = vadd.f32 %v44, %v173
  %v175 = vpop.f32.mrb[0].mxu0
  %v176 = vpop.f32.mrb[0].mxu0
  %v177 = vadd.f32 %v44, %v176
  %v178 = vpop.f32.mrb[0].mxu0
  %179 = vmatprep.mubr.bf16.mxu0 0
  %180 = vmatmul.mubr.bf16.gmra.mrb[0].mxu0 %v109
  %v181 = vpop.f32.mrb[0].mxu0
  %v182 = vadd.f32 %v44, %v181
  %v183 = vpop.f32.mrb[0].mxu0
  %v184 = vpop.f32.mrb[0].mxu0
  %v185 = vadd.f32 %v44, %v184
  %v186 = vpop.f32.mrb[0].mxu0
  %187 = vmatprep.mubr.bf16.mxu0 0
  %188 = vmatmul.mubr.bf16.gmra.mrb[0].mxu0 %v112
  %v189 = vpop.f32.mrb[0].mxu0
  %v190 = vadd.f32 %v44, %v189
  %v191 = vpop.f32.mrb[0].mxu0
  %v192 = vpop.f32.mrb[0].mxu0
  %v193 = vadd.f32 %v44, %v192
  %v194 = vpop.f32.mrb[0].mxu0
  %195 = vmatprep.mubr.bf16.mxu0 0
  %196 = vmatmul.mubr.bf16.gmra.mrb[0].mxu0 %v115
  %v197 = vpop.f32.mrb[0].mxu0
  %v198 = vadd.f32 %v44, %v197
  %v199 = vpop.f32.mrb[0].mxu0
  %v200 = vpop.f32.mrb[0].mxu0
  %v201 = vadd.f32 %v44, %v200
  %v202 = vpop.f32.mrb[0].mxu0
  %203 = vmatprep.mubr.bf16.mxu0 0
  %204 = vmatmul.mubr.bf16.gmra.mrb[0].mxu0 %v118
  %v205 = vpop.f32.mrb[0].mxu0
  %v206 = vadd.f32 %v44, %v205
  %v207 = vpop.f32.mrb[0].mxu0
  %v208 = vpop.f32.mrb[0].mxu0
  %v209 = vadd.f32 %v44, %v208
  %v210 = vpop.f32.mrb[0].mxu0
  %211 = vmatprep.mubr.bf16.mxu0 0
  %212 = vmatmul.mubr.bf16.gmra.mrb[0].mxu0 %v121
  %v213 = vpop.f32.mrb[0].mxu0
  %v214 = vadd.f32 %v44, %v213
  %v215 = vpop.f32.mrb[0].mxu0
  %v216 = vpop.f32.mrb[0].mxu0
  %v217 = vadd.f32 %v44, %v216
  %v218 = vpop.f32.mrb[0].mxu0
  %219 = vdwg.mxu0
  %s220 = sld [smem:[#allocation2]]
  %vm221 = vcmp.ge.f32.partialorder %v158, 0.0
  %vm222 = vcmp.ge.f32.partialorder %v161, 0.0
  %vm223 = vcmp.ge.f32.partialorder %v166, 0.0
  %vm224 = vcmp.ge.f32.partialorder %v169, 0.0
  %vm225 = vcmp.ge.f32.partialorder %v174, 0.0
  %vm226 = vcmp.ge.f32.partialorder %v177, 0.0
  %vm227 = vcmp.ge.f32.partialorder %v182, 0.0
  %vm228 = vcmp.ge.f32.partialorder %v185, 0.0
  %vm229 = vcmp.ge.f32.partialorder %v190, 0.0
  %vm230 = vcmp.ge.f32.partialorder %v193, 0.0
  %vm231 = vcmp.ge.f32.partialorder %v198, 0.0
  %vm232 = vcmp.ge.f32.partialorder %v201, 0.0
  %vm233 = vcmp.ge.f32.partialorder %v206, 0.0
  %vm234 = vcmp.ge.f32.partialorder %v209, 0.0
  %vm235 = vcmp.ge.f32.partialorder %v214, 0.0
  %vm236 = vcmp.ge.f32.partialorder %v217, 0.0
  %v237 = vstv %s220
  %v238 = vmul.f32 %v237, %v158
  %v239 = vmul.f32 %v237, %v161
  %v240 = vmul.f32 %v237, %v166
  %v241 = vmul.f32 %v237, %v169
  %v242 = vmul.f32 %v237, %v174
  %v243 = vmul.f32 %v237, %v177
  %v244 = vmul.f32 %v237, %v182
  %v245 = vmul.f32 %v237, %v185
  %v246 = vmul.f32 %v237, %v190
  %v247 = vmul.f32 %v237, %v193
  %v248 = vmul.f32 %v237, %v198
  %v249 = vmul.f32 %v237, %v201
  %v250 = vmul.f32 %v237, %v206
  %v251 = vmul.f32 %v237, %v209
  %v252 = vmul.f32 %v237, %v214
  %v253 = vmul.f32 %v237, %v217
  %v254 = vsel %vm221, %v158, %v238
  %v255 = vsel %vm222, %v161, %v239
  %v256 = vsel %vm223, %v166, %v240
  %v257 = vsel %vm224, %v169, %v241
  %v258 = vsel %vm225, %v174, %v242
  %v259 = vsel %vm226, %v177, %v243
  %v260 = vsel %vm227, %v182, %v244
  %v261 = vsel %vm228, %v185, %v245
  %v262 = vsel %vm229, %v190, %v246
  %v263 = vsel %vm230, %v193, %v247
  %v264 = vsel %vm231, %v198, %v248
  %v265 = vsel %vm232, %v201, %v249
  %v266 = vsel %vm233, %v206, %v250
  %v267 = vsel %vm234, %v209, %v251
  %v268 = vsel %vm235, %v214, %v252
  %v269 = vsel %vm236, %v217, %v253
  %270 = vst [vmem:[%s4] sm:$0xff] %v254
  %271 = vst [vmem:[%s4 + $0x8] sm:$0xff] %v255
  %272 = vst [vmem:[%s4 + $0x10] sm:$0xff] %v256
  %273 = vst [vmem:[%s4 + $0x18] sm:$0xff] %v257
  %274 = vst [vmem:[%s4 + $0x20] sm:$0xff] %v258
  %275 = vst [vmem:[%s4 + $0x28] sm:$0xff] %v259
  %276 = vst [vmem:[%s4 + $0x30] sm:$0xff] %v260
  %277 = vst [vmem:[%s4 + $0x38] sm:$0xff] %v261
  %278 = vst [vmem:[%s4 + $0x40] sm:$0xff] %v262
  %279 = vst [vmem:[%s4 + $0x48] sm:$0xff] %v263
  %280 = vst [vmem:[%s4 + $0x50] sm:$0xff] %v264
  %281 = vst [vmem:[%s4 + $0x58] sm:$0xff] %v265
  %282 = vst [vmem:[%s4 + $0x60] sm:$0xff] %v266
  %283 = vst [vmem:[%s4 + $0x68] sm:$0xff] %v267
  %284 = vst [vmem:[%s4 + $0x70] sm:$0xff] %v268
  %285 = vst [vmem:[%s4 + $0x78] sm:$0xff] %v269
  // Predicated region
  $region18: #{cfb_forward.16} parent=0 // pred_check
    _
  $region19: #{cfb_forward.16} parent=0 // pred_check_branch
    %287 = sbr.rel (0) target = $region21
  $region20: #{cfb_forward.16} parent=0 // pred_region
    _
  $region21: #{cfb_forward.16} parent=0 // pred_fallthru
    _
  // Predicated region
  $region22: #{cfb_forward.16} parent=0 // pred_check
    _
  $region23: #{cfb_forward.16} parent=0 // pred_check_branch
    %289 = sbr.rel (0) target = $region25
  $region24: #{cfb_forward.16} parent=0 // pred_region
    _
  $region25: #{cfb_forward.16} parent=0 // pred_fallthru
    _

// kernel: cfb_forward.15
$region0: #{cfb_forward.15}
  #allocation0 [shape = 'u32[]', space=smem, size = 0x4, offset = 0x4, fixed_abs, tag = 'smem constant byte address 0x4 - core index']
  #allocation1 [shape = 'u32[144,128]{1,0:T(1,128)}', space=vmem, size = 0x12000, scoped, tag = 'internal scratch']
  #allocation2 [shape = 'f32[1]{0:T(128)S(6)}', space=smem, size = 0x200, scoped, tag = 'scoped memory for cfb_forward.15']
  %s0 = inlined_call_operand.vmem [shape: bf16[128,576], index: 0, kind: input, shape index: {}]
  %s1 = inlined_call_operand.vmem [shape: bf16[576,128], index: 1, kind: input, shape index: {}]
  %s2 = inlined_call_operand.vmem [shape: f32[1,128], index: 2, kind: input, shape index: {}]
  %s3 = inlined_call_operand.<no memory space> [shape: f32[1], index: 3, kind: input, shape index: {}]
  %s4 = inlined_call_operand.vmem [shape: f32[128,128], index: 4, kind: output, shape index: {}]
  %s5 = sld [smem:[#allocation0]]
  $region26: #{cfb_forward.15} parent=0
    _
  %s7 = ssub.s32 1, %s5
  %s8 = scalar_select 0, %s7, %s5
  %9 = sst [smem:[#allocation2]] %s3
  // Predicated region
  $region2: #{cfb_forward.15} parent=0 // pred_check
    _
  $region3: #{cfb_forward.15} parent=0 // pred_check_branch
    %11 = sbr.rel (0) target = $region5
  $region4: #{cfb_forward.15} parent=0 // pred_region
    _
  $region5: #{cfb_forward.15} parent=0 // pred_fallthru
    _
  // Predicated region
  $region6: #{cfb_forward.15} parent=0 // pred_check
    _
  $region7: #{cfb_forward.15} parent=0 // pred_check_branch
    %13 = sbr.rel (0) target = $region9
  $region8: #{cfb_forward.15} parent=0 // pred_region
    _
  $region9: #{cfb_forward.15} parent=0 // pred_fallthru
    _
  // Predicated region
  $region10: #{cfb_forward.15} parent=0 // pred_check
    _
  $region11: #{cfb_forward.15} parent=0 // pred_check_branch
    %15 = sbr.rel (0) target = $region13
  $region12: #{cfb_forward.15} parent=0 // pred_region
    _
  $region13: #{cfb_forward.15} parent=0 // pred_fallthru
    _
  // Predicated region
  $region14: #{cfb_forward.15} parent=0 // pred_check
    _
  $region15: #{cfb_forward.15} parent=0 // pred_check_branch
    %17 = sbr.rel (0) target = $region17
  $region16: #{cfb_forward.15} parent=0 // pred_region
    _
  $region17: #{cfb_forward.15} parent=0 // pred_fallthru
    _
  %v19 = vld [vmem:[%s0] sm:$0xff]
  %v20 = vld [vmem:[%s0 + $0x8] sm:$0xff]
  %v21 = vld [vmem:[%s0 + $0x10] sm:$0xf]
  %v22 = vld [vmem:[%s0 + $0x14] sm:$0xff]
  %v23 = vld [vmem:[%s0 + $0x1c] sm:$0xff]
  %v24 = vld [vmem:[%s0 + $0x24] sm:$0xf]
  %v25 = vld [vmem:[%s0 + $0x28] sm:$0xff]
  %v26 = vld [vmem:[%s0 + $0x30] sm:$0xff]
  %v27 = vld [vmem:[%s0 + $0x38] sm:$0xf]
  %v28 = vld [vmem:[%s0 + $0x3c] sm:$0xff]
  %v29 = vld [vmem:[%s0 + $0x44] sm:$0xff]
  %v30 = vld [vmem:[%s0 + $0x4c] sm:$0xf]
  %v31 = vld [vmem:[%s0 + $0x50] sm:$0xff]
  %v32 = vld [vmem:[%s0 + $0x58] sm:$0xff]
  %v33 = vld [vmem:[%s0 + $0x60] sm:$0xf]
  %v34 = vld [vmem:[%s0 + $0x64] sm:$0xff]
  %v35 = vld [vmem:[%s0 + $0x6c] sm:$0xff]
  %v36 = vld [vmem:[%s0 + $0x74] sm:$0xf]
  %v37 = vld [vmem:[%s0 + $0x78] sm:$0xff]
  %v38 = vld [vmem:[%s0 + $0x80] sm:$0xff]
  %v39 = vld [vmem:[%s0 + $0x88] sm:$0xf]
  %v40 = vld [vmem:[%s0 + $0x8c] sm:$0xff]
  %v41 = vld [vmem:[%s0 + $0x94] sm:$0xff]
  %v42 = vld [vmem:[%s0 + $0x9c] sm:$0xf]
  %v43 = vld [vmem:[%s0 + $0xa0] sm:$0xff]
  %v44 = vld [vmem:[%s0 + $0xa8] sm:$0xff]
  %v45 = vld [vmem:[%s0 + $0xb0] sm:$0xf]
  %v46 = vld [vmem:[%s0 + $0xb4] sm:$0xff]
  %v47 = vld [vmem:[%s0 + $0xbc] sm:$0xff]
  %v48 = vld [vmem:[%s0 + $0xc4] sm:$0xf]
  %v49 = vld [vmem:[%s0 + $0xc8] sm:$0xff]
  %v50 = vld [vmem:[%s0 + $0xd0] sm:$0xff]
  %v51 = vld [vmem:[%s0 + $0xd8] sm:$0xf]
  %v52 = vld [vmem:[%s0 + $0xdc] sm:$0xff]
  %v53 = vld [vmem:[%s0 + $0xe4] sm:$0xff]
  %v54 = vld [vmem:[%s0 + $0xec] sm:$0xf]
  %v55 = vld [vmem:[%s0 + $0xf0] sm:$0xff]
  %v56 = vld [vmem:[%s0 + $0xf8] sm:$0xff]
  %v57 = vld [vmem:[%s0 + $0x100] sm:$0xf]
  %v58 = vld [vmem:[%s0 + $0x104] sm:$0xff]
  %v59 = vld [vmem:[%s0 + $0x10c] sm:$0xff]
  %v60 = vld [vmem:[%s0 + $0x114] sm:$0xf]
  %v61 = vld [vmem:[%s0 + $0x118] sm:$0xff]
  %v62 = vld [vmem:[%s0 + $0x120] sm:$0xff]
  %v63 = vld [vmem:[%s0 + $0x128] sm:$0xf]
  %v64 = vld [vmem:[%s0 + $0x12c] sm:$0xff]
  %v65 = vld [vmem:[%s0 + $0x134] sm:$0xff]
  %v66 = vld [vmem:[%s0 + $0x13c] sm:$0xf]
  %v67 = vld [vmem:[%s1] sm:$0xf]
  %v68 = vld [vmem:[%s1 + $0x4] sm:$0xf]
  %v69 = vld [vmem:[%s1 + $0x8] sm:$0xf]
  %v70 = vld [vmem:[%s1 + $0xc] sm:$0xf]
  %v71 = vld [vmem:[%s1 + $0x10] sm:$0xf]
  %v72 = vld [vmem:[%s1 + $0x14] sm:$0xf]
  %v73 = vld [vmem:[%s1 + $0x18] sm:$0xf]
  %v74 = vld [vmem:[%s1 + $0x1c] sm:$0xf]
  %v75 = vld [vmem:[%s1 + $0x20] sm:$0xf]
  %v76 = vld [vmem:[%s1 + $0x24] sm:$0xf]
  %v77 = vld [vmem:[%s1 + $0x28] sm:$0xf]
  %v78 = vld [vmem:[%s1 + $0x2c] sm:$0xf]
  %v79 = vld [vmem:[%s1 + $0x30] sm:$0xf]
  %v80 = vld [vmem:[%s1 + $0x34] sm:$0xf]
  %v81 = vld [vmem:[%s1 + $0x38] sm:$0xf]
  %v82 = vld [vmem:[%s1 + $0x3c] sm:$0xf]
  %v83 = vld [vmem:[%s1 + $0x40] sm:$0xf]
  %v84 = vld [vmem:[%s1 + $0x44] sm:$0xf]
  %v85 = vld [vmem:[%s1 + $0x48] sm:$0xf]
  %v86 = vld [vmem:[%s1 + $0x4c] sm:$0xf]
  %v87 = vld [vmem:[%s1 + $0x50] sm:$0xf]
  %v88 = vld [vmem:[%s1 + $0x54] sm:$0xf]
  %v89 = vld [vmem:[%s1 + $0x58] sm:$0xf]
  %v90 = vld [vmem:[%s1 + $0x5c] sm:$0xf]
  %v91 = vld [vmem:[%s1 + $0x60] sm:$0xf]
  %v92 = vld [vmem:[%s1 + $0x64] sm:$0xf]
  %v93 = vld [vmem:[%s1 + $0x68] sm:$0xf]
  %v94 = vld [vmem:[%s1 + $0x6c] sm:$0xf]
  %v95 = vld [vmem:[%s1 + $0x70] sm:$0xf]
  %v96 = vld [vmem:[%s1 + $0x74] sm:$0xf]
  %v97 = vld [vmem:[%s1 + $0x78] sm:$0xf]
  %v98 = vld [vmem:[%s1 + $0x7c] sm:$0xf]
  %v99 = vld [vmem:[%s1 + $0x80] sm:$0xf]
  %v100 = vld [vmem:[%s1 + $0x84] sm:$0xf]
  %v101 = vld [vmem:[%s1 + $0x88] sm:$0xf]
  %v102 = vld [vmem:[%s1 + $0x8c] sm:$0xf]
  %v103 = vld [vmem:[%s1 + $0x90] sm:$0xf]
  %v104 = vld [vmem:[%s1 + $0x94] sm:$0xf]
  %v105 = vld [vmem:[%s1 + $0x98] sm:$0xf]
  %v106 = vld [vmem:[%s1 + $0x9c] sm:$0xf]
  %v107 = vld [vmem:[%s1 + $0xa0] sm:$0xf]
  %v108 = vld [vmem:[%s1 + $0xa4] sm:$0xf]
  %v109 = vld [vmem:[%s1 + $0xa8] sm:$0xf]
  %v110 = vld [vmem:[%s1 + $0xac] sm:$0xf]
  %v111 = vld [vmem:[%s1 + $0xb0] sm:$0xf]
  %v112 = vld [vmem:[%s1 + $0xb4] sm:$0xf]
  %v113 = vld [vmem:[%s1 + $0xb8] sm:$0xf]
  %v114 = vld [vmem:[%s1 + $0xbc] sm:$0xf]
  %v115 = vld [vmem:[%s1 + $0xc0] sm:$0xf]
  %v116 = vld [vmem:[%s1 + $0xc4] sm:$0xf]
  %v117 = vld [vmem:[%s1 + $0xc8] sm:$0xf]
  %v118 = vld [vmem:[%s1 + $0xcc] sm:$0xf]
  %v119 = vld [vmem:[%s1 + $0xd0] sm:$0xf]
  %v120 = vld [vmem:[%s1 + $0xd4] sm:$0xf]
  %v121 = vld [vmem:[%s1 + $0xd8] sm:$0xf]
  %v122 = vld [vmem:[%s1 + $0xdc] sm:$0xf]
  %v123 = vld [vmem:[%s1 + $0xe0] sm:$0xf]
  %v124 = vld [vmem:[%s1 + $0xe4] sm:$0xf]
  %v125 = vld [vmem:[%s1 + $0xe8] sm:$0xf]
  %v126 = vld [vmem:[%s1 + $0xec] sm:$0xf]
  %v127 = vld [vmem:[%s1 + $0xf0] sm:$0xf]
  %v128 = vld [vmem:[%s1 + $0xf4] sm:$0xf]
  %v129 = vld [vmem:[%s1 + $0xf8] sm:$0xf]
  %v130 = vld [vmem:[%s1 + $0xfc] sm:$0xf]
  %v131 = vld [vmem:[%s1 + $0x100] sm:$0xf]
  %v132 = vld [vmem:[%s1 + $0x104] sm:$0xf]
  %v133 = vld [vmem:[%s1 + $0x108] sm:$0xf]
  %v134 = vld [vmem:[%s1 + $0x10c] sm:$0xf]
  %v135 = vld [vmem:[%s1 + $0x110] sm:$0xf]
  %v136 = vld [vmem:[%s1 + $0x114] sm:$0xf]
  %v137 = vld [vmem:[%s1 + $0x118] sm:$0xf]
  %v138 = vld [vmem:[%s1 + $0x11c] sm:$0xf]
  %v139 = vld [vmem:[%s2] sm:$0x1]
  %v141 = vlaneseq
  %v142 = vshrl.u32 %v141, 7
  %v143 = vsub.s32 0, %v142
  %v144 = vrot.slane %v139, %v143
  %v194 = vunpack.c.l.b16 %v19
  %v195 = vunpack.c.h.b16 %v19
  %v196 = vunpack.c.l.b16 %v20
  %v197 = vunpack.c.h.b16 %v20
  %v198 = vunpack.c.l.b16 %v21
  %v199 = vunpack.c.l.b16 %v22
  %v200 = vunpack.c.h.b16 %v22
  %v201 = vunpack.c.l.b16 %v23
  %v202 = vunpack.c.h.b16 %v23
  %v203 = vunpack.c.l.b16 %v24
  %v204 = vunpack.c.l.b16 %v25
  %v205 = vunpack.c.h.b16 %v25
  %v206 = vunpack.c.l.b16 %v26
  %v207 = vunpack.c.h.b16 %v26
  %v208 = vunpack.c.l.b16 %v27
  %v209 = vunpack.c.l.b16 %v28
  %v210 = vunpack.c.h.b16 %v28
  %v211 = vunpack.c.l.b16 %v29
  %v212 = vunpack.c.h.b16 %v29
  %v213 = vunpack.c.l.b16 %v30
  %v214 = vunpack.c.l.b16 %v31
  %v215 = vunpack.c.h.b16 %v31
  %v216 = vunpack.c.l.b16 %v32
  %v217 = vunpack.c.h.b16 %v32
  %v218 = vunpack.c.l.b16 %v33
  %v219 = vunpack.c.l.b16 %v34
  %v220 = vunpack.c.h.b16 %v34
  %v221 = vunpack.c.l.b16 %v35
  %v222 = vunpack.c.h.b16 %v35
  %v223 = vunpack.c.l.b16 %v36
  %v224 = vunpack.c.l.b16 %v37
  %v225 = vunpack.c.h.b16 %v37
  %v226 = vunpack.c.l.b16 %v38
  %v227 = vunpack.c.h.b16 %v38
  %v228 = vunpack.c.l.b16 %v39
  %v229 = vunpack.c.l.b16 %v40
  %v230 = vunpack.c.h.b16 %v40
  %v231 = vunpack.c.l.b16 %v41
  %v232 = vunpack.c.h.b16 %v41
  %v233 = vunpack.c.l.b16 %v42
  %v234 = vunpack.c.l.b16 %v43
  %v235 = vunpack.c.h.b16 %v43
  %v236 = vunpack.c.l.b16 %v44
  %v237 = vunpack.c.h.b16 %v44
  %v238 = vunpack.c.l.b16 %v45
  %v239 = vunpack.c.l.b16 %v46
  %v240 = vunpack.c.h.b16 %v46
  %v241 = vunpack.c.l.b16 %v47
  %v242 = vunpack.c.h.b16 %v47
  %v243 = vunpack.c.l.b16 %v48
  %v244 = vunpack.c.l.b16 %v49
  %v245 = vunpack.c.h.b16 %v49
  %v246 = vunpack.c.l.b16 %v50
  %v247 = vunpack.c.h.b16 %v50
  %v248 = vunpack.c.l.b16 %v51
  %v249 = vunpack.c.l.b16 %v52
  %v250 = vunpack.c.h.b16 %v52
  %v251 = vunpack.c.l.b16 %v53
  %v252 = vunpack.c.h.b16 %v53
  %v253 = vunpack.c.l.b16 %v54
  %v254 = vunpack.c.l.b16 %v55
  %v255 = vunpack.c.h.b16 %v55
  %v256 = vunpack.c.l.b16 %v56
  %v257 = vunpack.c.h.b16 %v56
  %v258 = vunpack.c.l.b16 %v57
  %v259 = vunpack.c.l.b16 %v58
  %v260 = vunpack.c.h.b16 %v58
  %v261 = vunpack.c.l.b16 %v59
  %v262 = vunpack.c.h.b16 %v59
  %v263 = vunpack.c.l.b16 %v60
  %v264 = vunpack.c.l.b16 %v61
  %v265 = vunpack.c.h.b16 %v61
  %v266 = vunpack.c.l.b16 %v62
  %v267 = vunpack.c.h.b16 %v62
  %v268 = vunpack.c.l.b16 %v63
  %v269 = vunpack.c.l.b16 %v64
  %v270 = vunpack.c.h.b16 %v64
  %v271 = vunpack.c.l.b16 %v65
  %v272 = vunpack.c.h.b16 %v65
  %v273 = vunpack.c.l.b16 %v66
  %v274 = vpack.c.b16 %v199, %v194
  %v275 = vpack.c.b16 %v200, %v195
  %v276 = vpack.c.b16 %v201, %v196
  %v277 = vpack.c.b16 %v202, %v197
  %v278 = vpack.c.b16 %v203, %v198
  %v279 = vpack.c.b16 %v209, %v204
  %v280 = vpack.c.b16 %v210, %v205
  %v281 = vpack.c.b16 %v211, %v206
  %v282 = vpack.c.b16 %v212, %v207
  %v283 = vpack.c.b16 %v213, %v208
  %v284 = vpack.c.b16 %v219, %v214
  %v285 = vpack.c.b16 %v220, %v215
  %v286 = vpack.c.b16 %v221, %v216
  %v287 = vpack.c.b16 %v222, %v217
  %v288 = vpack.c.b16 %v223, %v218
  %v289 = vpack.c.b16 %v229, %v224
  %v290 = vpack.c.b16 %v230, %v225
  %v291 = vpack.c.b16 %v231, %v226
  %v292 = vpack.c.b16 %v232, %v227
  %v293 = vpack.c.b16 %v233, %v228
  %v294 = vpack.c.b16 %v239, %v234
  %v295 = vpack.c.b16 %v240, %v235
  %v296 = vpack.c.b16 %v241, %v236
  %v297 = vpack.c.b16 %v242, %v237
  %v298 = vpack.c.b16 %v243, %v238
  %v299 = vpack.c.b16 %v249, %v244
  %v300 = vpack.c.b16 %v250, %v245
  %v301 = vpack.c.b16 %v251, %v246
  %v302 = vpack.c.b16 %v252, %v247
  %v303 = vpack.c.b16 %v253, %v248
  %v304 = vpack.c.b16 %v259, %v254
  %v305 = vpack.c.b16 %v260, %v255
  %v306 = vpack.c.b16 %v261, %v256
  %v307 = vpack.c.b16 %v262, %v257
  %v308 = vpack.c.b16 %v263, %v258
  %v309 = vpack.c.b16 %v269, %v264
  %v310 = vpack.c.b16 %v270, %v265
  %v311 = vpack.c.b16 %v271, %v266
  %v312 = vpack.c.b16 %v272, %v267
  %v313 = vpack.c.b16 %v273, %v268
  %v418 = vunpack.c.l.b16 %v67
  %v419 = vunpack.c.l.b16 %v68
  %v420 = vunpack.c.l.b16 %v69
  %v421 = vunpack.c.l.b16 %v70
  %v422 = vunpack.c.l.b16 %v71
  %v423 = vunpack.c.l.b16 %v72
  %v424 = vunpack.c.l.b16 %v73
  %v425 = vunpack.c.l.b16 %v74
  %v426 = vunpack.c.l.b16 %v75
  %v427 = vunpack.c.l.b16 %v76
  %v428 = vunpack.c.l.b16 %v77
  %v429 = vunpack.c.l.b16 %v78
  %v430 = vunpack.c.l.b16 %v79
  %v431 = vunpack.c.l.b16 %v80
  %v432 = vunpack.c.l.b16 %v81
  %v433 = vunpack.c.l.b16 %v82
  %v434 = vunpack.c.l.b16 %v83
  %v435 = vunpack.c.l.b16 %v84
  %v436 = vunpack.c.l.b16 %v85
  %v437 = vunpack.c.l.b16 %v86
  %v438 = vunpack.c.l.b16 %v87
  %v439 = vunpack.c.l.b16 %v88
  %v440 = vunpack.c.l.b16 %v89
  %v441 = vunpack.c.l.b16 %v90
  %v442 = vunpack.c.l.b16 %v91
  %v443 = vunpack.c.l.b16 %v92
  %v444 = vunpack.c.l.b16 %v93
  %v445 = vunpack.c.l.b16 %v94
  %v446 = vunpack.c.l.b16 %v95
  %v447 = vunpack.c.l.b16 %v96
  %v448 = vunpack.c.l.b16 %v97
  %v449 = vunpack.c.l.b16 %v98
  %v450 = vunpack.c.l.b16 %v99
  %v451 = vunpack.c.l.b16 %v100
  %v452 = vunpack.c.l.b16 %v101
  %v453 = vunpack.c.l.b16 %v102
  %v454 = vunpack.c.l.b16 %v103
  %v455 = vunpack.c.l.b16 %v104
  %v456 = vunpack.c.l.b16 %v105
  %v457 = vunpack.c.l.b16 %v106
  %v458 = vunpack.c.l.b16 %v107
  %v459 = vunpack.c.l.b16 %v108
  %v460 = vunpack.c.l.b16 %v109
  %v461 = vunpack.c.l.b16 %v110
  %v462 = vunpack.c.l.b16 %v111
  %v463 = vunpack.c.l.b16 %v112
  %v464 = vunpack.c.l.b16 %v113
  %v465 = vunpack.c.l.b16 %v114
  %v466 = vunpack.c.l.b16 %v115
  %v467 = vunpack.c.l.b16 %v116
  %v468 = vunpack.c.l.b16 %v117
  %v469 = vunpack.c.l.b16 %v118
  %v470 = vunpack.c.l.b16 %v119
  %v471 = vunpack.c.l.b16 %v120
  %v472 = vunpack.c.l.b16 %v121
  %v473 = vunpack.c.l.b16 %v122
  %v474 = vunpack.c.l.b16 %v123
  %v475 = vunpack.c.l.b16 %v124
  %v476 = vunpack.c.l.b16 %v125
  %v477 = vunpack.c.l.b16 %v126
  %v478 = vunpack.c.l.b16 %v127
  %v479 = vunpack.c.l.b16 %v128
  %v480 = vunpack.c.l.b16 %v129
  %v481 = vunpack.c.l.b16 %v130
  %v482 = vunpack.c.l.b16 %v131
  %v483 = vunpack.c.l.b16 %v132
  %v484 = vunpack.c.l.b16 %v133
  %v485 = vunpack.c.l.b16 %v134
  %v486 = vunpack.c.l.b16 %v135
  %v487 = vunpack.c.l.b16 %v136
  %v488 = vunpack.c.l.b16 %v137
  %v489 = vunpack.c.l.b16 %v138
  %v490 = vpack.c.b16 %v419, %v418
  %v491 = vpack.c.b16 %v421, %v420
  %v492 = vpack.c.b16 %v423, %v422
  %v493 = vpack.c.b16 %v425, %v424
  %v494 = vpack.c.b16 %v427, %v426
  %v495 = vpack.c.b16 %v429, %v428
  %v496 = vpack.c.b16 %v431, %v430
  %v497 = vpack.c.b16 %v433, %v432
  %v498 = vpack.c.b16 %v435, %v434
  %v499 = vpack.c.b16 %v437, %v436
  %v500 = vpack.c.b16 %v439, %v438
  %v501 = vpack.c.b16 %v441, %v440
  %v502 = vpack.c.b16 %v443, %v442
  %v503 = vpack.c.b16 %v445, %v444
  %v504 = vpack.c.b16 %v447, %v446
  %v505 = vpack.c.b16 %v449, %v448
  %v506 = vpack.c.b16 %v451, %v450
  %v507 = vpack.c.b16 %v453, %v452
  %v508 = vpack.c.b16 %v455, %v454
  %v509 = vpack.c.b16 %v457, %v456
  %v510 = vpack.c.b16 %v459, %v458
  %v511 = vpack.c.b16 %v461, %v460
  %v512 = vpack.c.b16 %v463, %v462
  %v513 = vpack.c.b16 %v465, %v464
  %v514 = vpack.c.b16 %v467, %v466
  %v515 = vpack.c.b16 %v469, %v468
  %v516 = vpack.c.b16 %v471, %v470
  %v517 = vpack.c.b16 %v473, %v472
  %v518 = vpack.c.b16 %v475, %v474
  %v519 = vpack.c.b16 %v477, %v476
  %v520 = vpack.c.b16 %v479, %v478
  %v521 = vpack.c.b16 %v481, %v480
  %v522 = vpack.c.b16 %v483, %v482
  %v523 = vpack.c.b16 %v485, %v484
  %v524 = vpack.c.b16 %v487, %v486
  %v525 = vpack.c.b16 %v489, %v488
  %vm562 = vcmask 523264
  %v564 = vsel %vm562, %v278, 0
  %v567 = vsel %vm562, %v283, 0
  %v570 = vsel %vm562, %v288, 0
  %v573 = vsel %vm562, %v293, 0
  %v576 = vsel %vm562, %v298, 0
  %v579 = vsel %vm562, %v303, 0
  %v582 = vsel %vm562, %v308, 0
  %v585 = vsel %vm562, %v313, 0
  %587 = vmatprep.subr.bf16.mxu0 0
  %588 = vmatpush1.bf16.msra.mxu0 %v490
  %589 = vmatprep.subr.bf16.mxu0 0
  %590 = vmatpush1.bf16.msra.mxu0 %v491
  %591 = vmatprep.subr.bf16.mxu0 0
  %592 = vmatpush1.bf16.msra.mxu0 %v492
  %593 = vmatprep.subr.bf16.mxu0 0
  %594 = vmatpush1.bf16.msra.mxu0 %v493
  %595 = vmatprep.subr.bf16.mxu0 0
  %596 = vmatpush1.bf16.msra.mxu0 %v494
  %597 = vmatprep.subr.bf16.mxu0 0
  %598 = vmatpush1.bf16.msra.mxu0 %v495
  %599 = vmatprep.subr.bf16.mxu0 0
  %600 = vmatpush1.bf16.msra.mxu0 %v496
  %601 = vmatprep.subr.bf16.mxu0 0
  %602 = vmatpush1.bf16.msra.mxu0 %v497
  %603 = vmatprep.subr.bf16.mxu0 0
  %604 = vmatpush1.bf16.msra.mxu0 %v498
  %605 = vmatprep.subr.bf16.mxu0 0
  %606 = vmatpush1.bf16.msra.mxu0 %v499
  %607 = vmatprep.subr.bf16.mxu0 0
  %608 = vmatpush1.bf16.msra.mxu0 %v500
  %609 = vmatprep.subr.bf16.mxu0 0
  %610 = vmatpush1.bf16.msra.mxu0 %v501
  %611 = vmatprep.subr.bf16.mxu0 0
  %612 = vmatpush1.bf16.msra.mxu0 %v502
  %613 = vmatprep.subr.bf16.mxu0 0
  %614 = vmatpush1.bf16.msra.mxu0 %v503
  %615 = vmatprep.subr.bf16.mxu0 0
  %616 = vmatpush1.bf16.msra.mxu0 %v504
  %617 = vmatprep.subr.bf16.mxu0 0
  %618 = vmatpush1.bf16.msra.mxu0 %v505
  %619 = vmatprep.mubr.bf16.mxu0 %v275
  %620 = vmatmul.mubr.bf16.gmra.mrb[0].mxu0 %v274
  %v621 = vpop.f32.mrb[0].mxu0
  %v622 = vadd.f32 %v144, %v621
  %v623 = vpop.f32.mrb[0].mxu0
  %v624 = vpop.f32.mrb[0].mxu0
  %v625 = vadd.f32 %v144, %v624
  %v626 = vpop.f32.mrb[0].mxu0
  %627 = vmatprep.mubr.bf16.mxu0 %v280
  %628 = vmatmul.mubr.bf16.gmra.mrb[0].mxu0 %v279
  %v629 = vpop.f32.mrb[0].mxu0
  %v630 = vadd.f32 %v144, %v629
  %v631 = vpop.f32.mrb[0].mxu0
  %v632 = vpop.f32.mrb[0].mxu0
  %v633 = vadd.f32 %v144, %v632
  %v634 = vpop.f32.mrb[0].mxu0
  %635 = vmatprep.mubr.bf16.mxu0 %v285
  %636 = vmatmul.mubr.bf16.gmra.mrb[0].mxu0 %v284
  %v637 = vpop.f32.mrb[0].mxu0
  %v638 = vadd.f32 %v144, %v637
  %v639 = vpop.f32.mrb[0].mxu0
  %v640 = vpop.f32.mrb[0].mxu0
  %v641 = vadd.f32 %v144, %v640
  %v642 = vpop.f32.mrb[0].mxu0
  %643 = vmatprep.mubr.bf16.mxu0 %v290
  %644 = vmatmul.mubr.bf16.gmra.mrb[0].mxu0 %v289
  %v645 = vpop.f32.mrb[0].mxu0
  %v646 = vadd.f32 %v144, %v645
  %v647 = vpop.f32.mrb[0].mxu0
  %v648 = vpop.f32.mrb[0].mxu0
  %v649 = vadd.f32 %v144, %v648
  %v650 = vpop.f32.mrb[0].mxu0
  %651 = vmatprep.mubr.bf16.mxu0 %v295
  %652 = vmatmul.mubr.bf16.gmra.mrb[0].mxu0 %v294
  %v653 = vpop.f32.mrb[0].mxu0
  %v654 = vadd.f32 %v144, %v653
  %v655 = vpop.f32.mrb[0].mxu0
  %v656 = vpop.f32.mrb[0].mxu0
  %v657 = vadd.f32 %v144, %v656
  %v658 = vpop.f32.mrb[0].mxu0
  %659 = vmatprep.mubr.bf16.mxu0 %v300
  %660 = vmatmul.mubr.bf16.gmra.mrb[0].mxu0 %v299
  %v661 = vpop.f32.mrb[0].mxu0
  %v662 = vadd.f32 %v144, %v661
  %v663 = vpop.f32.mrb[0].mxu0
  %v664 = vpop.f32.mrb[0].mxu0
  %v665 = vadd.f32 %v144, %v664
  %v666 = vpop.f32.mrb[0].mxu0
  %667 = vmatprep.mubr.bf16.mxu0 %v305
  %668 = vmatmul.mubr.bf16.gmra.mrb[0].mxu0 %v304
  %v669 = vpop.f32.mrb[0].mxu0
  %v670 = vadd.f32 %v144, %v669
  %v671 = vpop.f32.mrb[0].mxu0
  %v672 = vpop.f32.mrb[0].mxu0
  %v673 = vadd.f32 %v144, %v672
  %v674 = vpop.f32.mrb[0].mxu0
  %675 = vmatprep.mubr.bf16.mxu0 %v310
  %676 = vmatmul.mubr.bf16.gmra.mrb[0].mxu0 %v309
  %v677 = vpop.f32.mrb[0].mxu0
  %v678 = vadd.f32 %v144, %v677
  %v679 = vpop.f32.mrb[0].mxu0
  %v680 = vpop.f32.mrb[0].mxu0
  %v681 = vadd.f32 %v144, %v680
  %v682 = vpop.f32.mrb[0].mxu0
  %683 = vdwg.mxu0
  %684 = vmatprep.subr.bf16.mxu0 0
  %685 = vmatpush1.bf16.msra.mxu0 %v506
  %686 = vmatprep.subr.bf16.mxu0 0
  %687 = vmatpush1.bf16.msra.mxu0 %v507
  %688 = vmatprep.subr.bf16.mxu0 0
  %689 = vmatpush1.bf16.msra.mxu0 %v508
  %690 = vmatprep.subr.bf16.mxu0 0
  %691 = vmatpush1.bf16.msra.mxu0 %v509
  %692 = vmatprep.subr.bf16.mxu0 0
  %693 = vmatpush1.bf16.msra.mxu0 %v510
  %694 = vmatprep.subr.bf16.mxu0 0
  %695 = vmatpush1.bf16.msra.mxu0 %v511
  %696 = vmatprep.subr.bf16.mxu0 0
  %697 = vmatpush1.bf16.msra.mxu0 %v512
  %698 = vmatprep.subr.bf16.mxu0 0
  %699 = vmatpush1.bf16.msra.mxu0 %v513
  %700 = vmatprep.subr.bf16.mxu0 0
  %701 = vmatpush1.bf16.msra.mxu0 %v514
  %702 = vmatprep.subr.bf16.mxu0 0
  %703 = vmatpush1.bf16.msra.mxu0 %v515
  %704 = vmatprep.subr.bf16.mxu0 0
  %705 = vmatpush1.bf16.msra.mxu0 %v516
  %706 = vmatprep.subr.bf16.mxu0 0
  %707 = vmatpush1.bf16.msra.mxu0 %v517
  %708 = vmatprep.subr.bf16.mxu0 0
  %709 = vmatpush1.bf16.msra.mxu0 %v518
  %710 = vmatprep.subr.bf16.mxu0 0
  %711 = vmatpush1.bf16.msra.mxu0 %v519
  %712 = vmatprep.subr.bf16.mxu0 0
  %713 = vmatpush1.bf16.msra.mxu0 %v520
  %714 = vmatprep.subr.bf16.mxu0 0
  %715 = vmatpush1.bf16.msra.mxu0 %v521
  %716 = vmatprep.mubr.bf16.mxu0 %v277
  %717 = vmatmul.mubr.bf16.gmra.mrb[0].mxu0 %v276
  %v718 = vpop.f32.mrb[0].mxu0
  %v719 = vadd.f32 %v622, %v718
  %v720 = vpop.f32.mrb[0].mxu0
  %v721 = vpop.f32.mrb[0].mxu0
  %v722 = vadd.f32 %v625, %v721
  %v723 = vpop.f32.mrb[0].mxu0
  %724 = vmatprep.mubr.bf16.mxu0 %v282
  %725 = vmatmul.mubr.bf16.gmra.mrb[0].mxu0 %v281
  %v726 = vpop.f32.mrb[0].mxu0
  %v727 = vadd.f32 %v630, %v726
  %v728 = vpop.f32.mrb[0].mxu0
  %v729 = vpop.f32.mrb[0].mxu0
  %v730 = vadd.f32 %v633, %v729
  %v731 = vpop.f32.mrb[0].mxu0
  %732 = vmatprep.mubr.bf16.mxu0 %v287
  %733 = vmatmul.mubr.bf16.gmra.mrb[0].mxu0 %v286
  %v734 = vpop.f32.mrb[0].mxu0
  %v735 = vadd.f32 %v638, %v734
  %v736 = vpop.f32.mrb[0].mxu0
  %v737 = vpop.f32.mrb[0].mxu0
  %v738 = vadd.f32 %v641, %v737
  %v739 = vpop.f32.mrb[0].mxu0
  %740 = vmatprep.mubr.bf16.mxu0 %v292
  %741 = vmatmul.mubr.bf16.gmra.mrb[0].mxu0 %v291
  %v742 = vpop.f32.mrb[0].mxu0
  %v743 = vadd.f32 %v646, %v742
  %v744 = vpop.f32.mrb[0].mxu0
  %v745 = vpop.f32.mrb[0].mxu0
  %v746 = vadd.f32 %v649, %v745
  %v747 = vpop.f32.mrb[0].mxu0
  %748 = vmatprep.mubr.bf16.mxu0 %v297
  %749 = vmatmul.mubr.bf16.gmra.mrb[0].mxu0 %v296
  %v750 = vpop.f32.mrb[0].mxu0
  %v751 = vadd.f32 %v654, %v750
  %v752 = vpop.f32.mrb[0].mxu0
  %v753 = vpop.f32.mrb[0].mxu0
  %v754 = vadd.f32 %v657, %v753
  %v755 = vpop.f32.mrb[0].mxu0
  %756 = vmatprep.mubr.bf16.mxu0 %v302
  %757 = vmatmul.mubr.bf16.gmra.mrb[0].mxu0 %v301
  %v758 = vpop.f32.mrb[0].mxu0
  %v759 = vadd.f32 %v662, %v758
  %v760 = vpop.f32.mrb[0].mxu0
  %v761 = vpop.f32.mrb[0].mxu0
  %v762 = vadd.f32 %v665, %v761
  %v763 = vpop.f32.mrb[0].mxu0
  %764 = vmatprep.mubr.bf16.mxu0 %v307
  %765 = vmatmul.mubr.bf16.gmra.mrb[0].mxu0 %v306
  %v766 = vpop.f32.mrb[0].mxu0
  %v767 = vadd.f32 %v670, %v766
  %v768 = vpop.f32.mrb[0].mxu0
  %v769 = vpop.f32.mrb[0].mxu0
  %v770 = vadd.f32 %v673, %v769
  %v771 = vpop.f32.mrb[0].mxu0
  %772 = vmatprep.mubr.bf16.mxu0 %v312
  %773 = vmatmul.mubr.bf16.gmra.mrb[0].mxu0 %v311
  %v774 = vpop.f32.mrb[0].mxu0
  %v775 = vadd.f32 %v678, %v774
  %v776 = vpop.f32.mrb[0].mxu0
  %v777 = vpop.f32.mrb[0].mxu0
  %v778 = vadd.f32 %v681, %v777
  %v779 = vpop.f32.mrb[0].mxu0
  %780 = vdwg.mxu0
  %781 = vmatprep.subr.bf16.mxu0 0
  %782 = vmatpush1.bf16.msra.mxu0 %v522
  %783 = vmatprep.subr.bf16.mxu0 0
  %784 = vmatpush1.bf16.msra.mxu0 %v523
  %785 = vmatprep.subr.bf16.mxu0 0
  %786 = vmatpush1.bf16.msra.mxu0 %v524
  %787 = vmatprep.subr.bf16.mxu0 0
  %788 = vmatpush1.bf16.msra.mxu0 %v525
  %789 = vmatprep.subr.bf16.mxu0 0
  %790 = vmatpush1.bf16.msra.mxu0 0
  %791 = vmatprep.subr.bf16.mxu0 0
  %792 = vmatpush1.bf16.msra.mxu0 0
  %793 = vmatprep.subr.bf16.mxu0 0
  %794 = vmatpush1.bf16.msra.mxu0 0
  %795 = vmatprep.subr.bf16.mxu0 0
  %796 = vmatpush1.bf16.msra.mxu0 0
  %797 = vmatprep.subr.bf16.mxu0 0
  %798 = vmatpush1.bf16.msra.mxu0 0
  %799 = vmatprep.subr.bf16.mxu0 0
  %800 = vmatpush1.bf16.msra.mxu0 0
  %801 = vmatprep.subr.bf16.mxu0 0
  %802 = vmatpush1.bf16.msra.mxu0 0
  %803 = vmatprep.subr.bf16.mxu0 0
  %804 = vmatpush1.bf16.msra.mxu0 0
  %805 = vmatprep.subr.bf16.mxu0 0
  %806 = vmatpush1.bf16.msra.mxu0 0
  %807 = vmatprep.subr.bf16.mxu0 0
  %808 = vmatpush1.bf16.msra.mxu0 0
  %809 = vmatprep.subr.bf16.mxu0 0
  %810 = vmatpush1.bf16.msra.mxu0 0
  %811 = vmatprep.subr.bf16.mxu0 0
  %812 = vmatpush1.bf16.msra.mxu0 0
  %813 = vmatprep.mubr.bf16.mxu0 0
  %814 = vmatmul.mubr.bf16.gmra.mrb[0].mxu0 %v564
  %v815 = vpop.f32.mrb[0].mxu0
  %v816 = vadd.f32 %v719, %v815
  %v817 = vpop.f32.mrb[0].mxu0
  %v818 = vpop.f32.mrb[0].mxu0
  %v819 = vadd.f32 %v722, %v818
  %v820 = vpop.f32.mrb[0].mxu0
  %821 = vmatprep.mubr.bf16.mxu0 0
  %822 = vmatmul.mubr.bf16.gmra.mrb[0].mxu0 %v567
  %v823 = vpop.f32.mrb[0].mxu0
  %v824 = vadd.f32 %v727, %v823
  %v825 = vpop.f32.mrb[0].mxu0
  %v826 = vpop.f32.mrb[0].mxu0
  %v827 = vadd.f32 %v730, %v826
  %v828 = vpop.f32.mrb[0].mxu0
  %829 = vmatprep.mubr.bf16.mxu0 0
  %830 = vmatmul.mubr.bf16.gmra.mrb[0].mxu0 %v570
  %v831 = vpop.f32.mrb[0].mxu0
  %v832 = vadd.f32 %v735, %v831
  %v833 = vpop.f32.mrb[0].mxu0
  %v834 = vpop.f32.mrb[0].mxu0
  %v835 = vadd.f32 %v738, %v834
  %v836 = vpop.f32.mrb[0].mxu0
  %837 = vmatprep.mubr.bf16.mxu0 0
  %838 = vmatmul.mubr.bf16.gmra.mrb[0].mxu0 %v573
  %v839 = vpop.f32.mrb[0].mxu0
  %v840 = vadd.f32 %v743, %v839
  %v841 = vpop.f32.mrb[0].mxu0
  %v842 = vpop.f32.mrb[0].mxu0
  %v843 = vadd.f32 %v746, %v842
  %v844 = vpop.f32.mrb[0].mxu0
  %845 = vmatprep.mubr.bf16.mxu0 0
  %846 = vmatmul.mubr.bf16.gmra.mrb[0].mxu0 %v576
  %v847 = vpop.f32.mrb[0].mxu0
  %v848 = vadd.f32 %v751, %v847
  %v849 = vpop.f32.mrb[0].mxu0
  %v850 = vpop.f32.mrb[0].mxu0
  %v851 = vadd.f32 %v754, %v850
  %v852 = vpop.f32.mrb[0].mxu0
  %853 = vmatprep.mubr.bf16.mxu0 0
  %854 = vmatmul.mubr.bf16.gmra.mrb[0].mxu0 %v579
  %v855 = vpop.f32.mrb[0].mxu0
  %v856 = vadd.f32 %v759, %v855
  %v857 = vpop.f32.mrb[0].mxu0
  %v858 = vpop.f32.mrb[0].mxu0
  %v859 = vadd.f32 %v762, %v858
  %v860 = vpop.f32.mrb[0].mxu0
  %861 = vmatprep.mubr.bf16.mxu0 0
  %862 = vmatmul.mubr.bf16.gmra.mrb[0].mxu0 %v582
  %v863 = vpop.f32.mrb[0].mxu0
  %v864 = vadd.f32 %v767, %v863
  %v865 = vpop.f32.mrb[0].mxu0
  %v866 = vpop.f32.mrb[0].mxu0
  %v867 = vadd.f32 %v770, %v866
  %v868 = vpop.f32.mrb[0].mxu0
  %869 = vmatprep.mubr.bf16.mxu0 0
  %870 = vmatmul.mubr.bf16.gmra.mrb[0].mxu0 %v585
  %v871 = vpop.f32.mrb[0].mxu0
  %v872 = vadd.f32 %v775, %v871
  %v873 = vpop.f32.mrb[0].mxu0
  %v874 = vpop.f32.mrb[0].mxu0
  %v875 = vadd.f32 %v778, %v874
  %v876 = vpop.f32.mrb[0].mxu0
  %877 = vdwg.mxu0
  %s878 = sld [smem:[#allocation2]]
  %vm879 = vcmp.ge.f32.partialorder %v816, 0.0
  %vm880 = vcmp.ge.f32.partialorder %v819, 0.0
  %vm881 = vcmp.ge.f32.partialorder %v824, 0.0
  %vm882 = vcmp.ge.f32.partialorder %v827, 0.0
  %vm883 = vcmp.ge.f32.partialorder %v832, 0.0
  %vm884 = vcmp.ge.f32.partialorder %v835, 0.0
  %vm885 = vcmp.ge.f32.partialorder %v840, 0.0
  %vm886 = vcmp.ge.f32.partialorder %v843, 0.0
  %vm887 = vcmp.ge.f32.partialorder %v848, 0.0
  %vm888 = vcmp.ge.f32.partialorder %v851, 0.0
  %vm889 = vcmp.ge.f32.partialorder %v856, 0.0
  %vm890 = vcmp.ge.f32.partialorder %v859, 0.0
  %vm891 = vcmp.ge.f32.partialorder %v864, 0.0
  %vm892 = vcmp.ge.f32.partialorder %v867, 0.0
  %vm893 = vcmp.ge.f32.partialorder %v872, 0.0
  %vm894 = vcmp.ge.f32.partialorder %v875, 0.0
  %v895 = vstv %s878
  %v896 = vmul.f32 %v895, %v816
  %v897 = vmul.f32 %v895, %v819
  %v898 = vmul.f32 %v895, %v824
  %v899 = vmul.f32 %v895, %v827
  %v900 = vmul.f32 %v895, %v832
  %v901 = vmul.f32 %v895, %v835
  %v902 = vmul.f32 %v895, %v840
  %v903 = vmul.f32 %v895, %v843
  %v904 = vmul.f32 %v895, %v848
  %v905 = vmul.f32 %v895, %v851
  %v906 = vmul.f32 %v895, %v856
  %v907 = vmul.f32 %v895, %v859
  %v908 = vmul.f32 %v895, %v864
  %v909 = vmul.f32 %v895, %v867
  %v910 = vmul.f32 %v895, %v872
  %v911 = vmul.f32 %v895, %v875
  %v912 = vsel %vm879, %v816, %v896
  %v913 = vsel %vm880, %v819, %v897
  %v914 = vsel %vm881, %v824, %v898
  %v915 = vsel %vm882, %v827, %v899
  %v916 = vsel %vm883, %v832, %v900
  %v917 = vsel %vm884, %v835, %v901
  %v918 = vsel %vm885, %v840, %v902
  %v919 = vsel %vm886, %v843, %v903
  %v920 = vsel %vm887, %v848, %v904
  %v921 = vsel %vm888, %v851, %v905
  %v922 = vsel %vm889, %v856, %v906
  %v923 = vsel %vm890, %v859, %v907
  %v924 = vsel %vm891, %v864, %v908
  %v925 = vsel %vm892, %v867, %v909
  %v926 = vsel %vm893, %v872, %v910
  %v927 = vsel %vm894, %v875, %v911
  %928 = vst [vmem:[%s4] sm:$0xff] %v912
  %929 = vst [vmem:[%s4 + $0x8] sm:$0xff] %v913
  %930 = vst [vmem:[%s4 + $0x10] sm:$0xff] %v914
  %931 = vst [vmem:[%s4 + $0x18] sm:$0xff] %v915
  %932 = vst [vmem:[%s4 + $0x20] sm:$0xff] %v916
  %933 = vst [vmem:[%s4 + $0x28] sm:$0xff] %v917
  %934 = vst [vmem:[%s4 + $0x30] sm:$0xff] %v918
  %935 = vst [vmem:[%s4 + $0x38] sm:$0xff] %v919
  %936 = vst [vmem:[%s4 + $0x40] sm:$0xff] %v920
  %937 = vst [vmem:[%s4 + $0x48] sm:$0xff] %v921
  %938 = vst [vmem:[%s4 + $0x50] sm:$0xff] %v922
  %939 = vst [vmem:[%s4 + $0x58] sm:$0xff] %v923
  %940 = vst [vmem:[%s4 + $0x60] sm:$0xff] %v924
  %941 = vst [vmem:[%s4 + $0x68] sm:$0xff] %v925
  %942 = vst [vmem:[%s4 + $0x70] sm:$0xff] %v926
  %943 = vst [vmem:[%s4 + $0x78] sm:$0xff] %v927
  // Predicated region
  $region18: #{cfb_forward.15} parent=0 // pred_check
    _
  $region19: #{cfb_forward.15} parent=0 // pred_check_branch
    %945 = sbr.rel (0) target = $region21
  $region20: #{cfb_forward.15} parent=0 // pred_region
    _
  $region21: #{cfb_forward.15} parent=0 // pred_fallthru
    _
  // Predicated region
  $region22: #{cfb_forward.15} parent=0 // pred_check
    _
  $region23: #{cfb_forward.15} parent=0 // pred_check_branch
    %947 = sbr.rel (0) target = $region25
  $region24: #{cfb_forward.15} parent=0 // pred_region
    _
  $region25: #{cfb_forward.15} parent=0 // pred_fallthru
    _

// kernel: cfb_forward.20
$region0: #{cfb_forward.20}
  #allocation0 [shape = 'u32[]', space=smem, size = 0x4, offset = 0x4, fixed_abs, tag = 'smem constant byte address 0x4 - core index']
  #allocation1 [shape = 'u32[144,128]{1,0:T(1,128)}', space=vmem, size = 0x12000, scoped, tag = 'internal scratch']
  #allocation2 [shape = 'f32[1]{0:T(128)S(6)}', space=smem, size = 0x200, scoped, tag = 'scoped memory for cfb_forward.20']
  %s0 = inlined_call_operand.vmem [shape: bf16[128,48], index: 0, kind: input, shape index: {}]
  %s1 = inlined_call_operand.vmem [shape: bf16[48,128], index: 1, kind: input, shape index: {}]
  %s2 = inlined_call_operand.vmem [shape: f32[1,128], index: 2, kind: input, shape index: {}]
  %s3 = inlined_call_operand.<no memory space> [shape: f32[1], index: 3, kind: input, shape index: {}]
  %s4 = inlined_call_operand.vmem [shape: f32[128,128], index: 4, kind: output, shape index: {}]
  %s5 = sld [smem:[#allocation0]]
  $region26: #{cfb_forward.20} parent=0
    _
  %s7 = ssub.s32 1, %s5
  %s8 = scalar_select 0, %s7, %s5
  %9 = sst [smem:[#allocation2]] %s3
  // Predicated region
  $region2: #{cfb_forward.20} parent=0 // pred_check
    _
  $region3: #{cfb_forward.20} parent=0 // pred_check_branch
    %11 = sbr.rel (0) target = $region5
  $region4: #{cfb_forward.20} parent=0 // pred_region
    _
  $region5: #{cfb_forward.20} parent=0 // pred_fallthru
    _
  // Predicated region
  $region6: #{cfb_forward.20} parent=0 // pred_check
    _
  $region7: #{cfb_forward.20} parent=0 // pred_check_branch
    %13 = sbr.rel (0) target = $region9
  $region8: #{cfb_forward.20} parent=0 // pred_region
    _
  $region9: #{cfb_forward.20} parent=0 // pred_fallthru
    _
  // Predicated region
  $region10: #{cfb_forward.20} parent=0 // pred_check
    _
  $region11: #{cfb_forward.20} parent=0 // pred_check_branch
    %15 = sbr.rel (0) target = $region13
  $region12: #{cfb_forward.20} parent=0 // pred_region
    _
  $region13: #{cfb_forward.20} parent=0 // pred_fallthru
    _
  // Predicated region
  $region14: #{cfb_forward.20} parent=0 // pred_check
    _
  $region15: #{cfb_forward.20} parent=0 // pred_check_branch
    %17 = sbr.rel (0) target = $region17
  $region16: #{cfb_forward.20} parent=0 // pred_region
    _
  $region17: #{cfb_forward.20} parent=0 // pred_fallthru
    _
  %v19 = vld [vmem:[%s0] sm:$0xf]
  %v20 = vld [vmem:[%s0 + $0x4] sm:$0xf]
  %v21 = vld [vmem:[%s0 + $0x8] sm:$0xf]
  %v22 = vld [vmem:[%s0 + $0xc] sm:$0xf]
  %v23 = vld [vmem:[%s0 + $0x10] sm:$0xf]
  %v24 = vld [vmem:[%s0 + $0x14] sm:$0xf]
  %v25 = vld [vmem:[%s0 + $0x18] sm:$0xf]
  %v26 = vld [vmem:[%s0 + $0x1c] sm:$0xf]
  %v27 = vld [vmem:[%s0 + $0x20] sm:$0xf]
  %v28 = vld [vmem:[%s0 + $0x24] sm:$0xf]
  %v29 = vld [vmem:[%s0 + $0x28] sm:$0xf]
  %v30 = vld [vmem:[%s0 + $0x2c] sm:$0xf]
  %v31 = vld [vmem:[%s0 + $0x30] sm:$0xf]
  %v32 = vld [vmem:[%s0 + $0x34] sm:$0xf]
  %v33 = vld [vmem:[%s0 + $0x38] sm:$0xf]
  %v34 = vld [vmem:[%s0 + $0x3c] sm:$0xf]
  %v35 = vld [vmem:[%s1] sm:$0xf]
  %v36 = vld [vmem:[%s1 + $0x4] sm:$0xf]
  %v37 = vld [vmem:[%s1 + $0x8] sm:$0xf]
  %v38 = vld [vmem:[%s1 + $0xc] sm:$0xf]
  %v39 = vld [vmem:[%s1 + $0x10] sm:$0xf]
  %v40 = vld [vmem:[%s1 + $0x14] sm:$0xf]
  %v41 = vld [vmem:[%s2] sm:$0x1]
  %v43 = vlaneseq
  %v44 = vshrl.u32 %v43, 7
  %v45 = vsub.s32 0, %v44
  %v46 = vrot.slane %v41, %v45
  %v64 = vunpack.c.l.b16 %v19
  %v65 = vunpack.c.l.b16 %v20
  %v66 = vunpack.c.l.b16 %v21
  %v67 = vunpack.c.l.b16 %v22
  %v68 = vunpack.c.l.b16 %v23
  %v69 = vunpack.c.l.b16 %v24
  %v70 = vunpack.c.l.b16 %v25
  %v71 = vunpack.c.l.b16 %v26
  %v72 = vunpack.c.l.b16 %v27
  %v73 = vunpack.c.l.b16 %v28
  %v74 = vunpack.c.l.b16 %v29
  %v75 = vunpack.c.l.b16 %v30
  %v76 = vunpack.c.l.b16 %v31
  %v77 = vunpack.c.l.b16 %v32
  %v78 = vunpack.c.l.b16 %v33
  %v79 = vunpack.c.l.b16 %v34
  %v80 = vpack.c.b16 %v65, %v64
  %v81 = vpack.c.b16 %v67, %v66
  %v82 = vpack.c.b16 %v69, %v68
  %v83 = vpack.c.b16 %v71, %v70
  %v84 = vpack.c.b16 %v73, %v72
  %v85 = vpack.c.b16 %v75, %v74
  %v86 = vpack.c.b16 %v77, %v76
  %v87 = vpack.c.b16 %v79, %v78
  %v94 = vunpack.c.l.b16 %v35
  %v95 = vunpack.c.l.b16 %v36
  %v96 = vunpack.c.l.b16 %v37
  %v97 = vunpack.c.l.b16 %v38
  %v98 = vunpack.c.l.b16 %v39
  %v99 = vunpack.c.l.b16 %v40
  %v100 = vpack.c.b16 %v95, %v94
  %v101 = vpack.c.b16 %v97, %v96
  %v102 = vpack.c.b16 %v99, %v98
  %vm106 = vcmask 392192
  %v108 = vsel %vm106, %v80, 0
  %v111 = vsel %vm106, %v81, 0
  %v114 = vsel %vm106, %v82, 0
  %v117 = vsel %vm106, %v83, 0
  %v120 = vsel %vm106, %v84, 0
  %v123 = vsel %vm106, %v85, 0
  %v126 = vsel %vm106, %v86, 0
  %v129 = vsel %vm106, %v87, 0
  %131 = vmatprep.subr.bf16.mxu0 0
  %132 = vmatpush1.bf16.msra.mxu0 %v100
  %133 = vmatprep.subr.bf16.mxu0 0
  %134 = vmatpush1.bf16.msra.mxu0 %v101
  %135 = vmatprep.subr.bf16.mxu0 0
  %136 = vmatpush1.bf16.msra.mxu0 %v102
  %137 = vmatprep.subr.bf16.mxu0 0
  %138 = vmatpush1.bf16.msra.mxu0 0
  %139 = vmatprep.subr.bf16.mxu0 0
  %140 = vmatpush1.bf16.msra.mxu0 0
  %141 = vmatprep.subr.bf16.mxu0 0
  %142 = vmatpush1.bf16.msra.mxu0 0
  %143 = vmatprep.subr.bf16.mxu0 0
  %144 = vmatpush1.bf16.msra.mxu0 0
  %145 = vmatprep.subr.bf16.mxu0 0
  %146 = vmatpush1.bf16.msra.mxu0 0
  %147 = vmatprep.subr.bf16.mxu0 0
  %148 = vmatpush1.bf16.msra.mxu0 0
  %149 = vmatprep.subr.bf16.mxu0 0
  %150 = vmatpush1.bf16.msra.mxu0 0
  %151 = vmatprep.subr.bf16.mxu0 0
  %152 = vmatpush1.bf16.msra.mxu0 0
  %153 = vmatprep.subr.bf16.mxu0 0
  %154 = vmatpush1.bf16.msra.mxu0 0
  %155 = vmatprep.subr.bf16.mxu0 0
  %156 = vmatpush1.bf16.msra.mxu0 0
  %157 = vmatprep.subr.bf16.mxu0 0
  %158 = vmatpush1.bf16.msra.mxu0 0
  %159 = vmatprep.subr.bf16.mxu0 0
  %160 = vmatpush1.bf16.msra.mxu0 0
  %161 = vmatprep.subr.bf16.mxu0 0
  %162 = vmatpush1.bf16.msra.mxu0 0
  %163 = vmatprep.mubr.bf16.mxu0 0
  %164 = vmatmul.mubr.bf16.gmra.mrb[0].mxu0 %v108
  %v165 = vpop.f32.mrb[0].mxu0
  %v166 = vadd.f32 %v46, %v165
  %v167 = vpop.f32.mrb[0].mxu0
  %v168 = vpop.f32.mrb[0].mxu0
  %v169 = vadd.f32 %v46, %v168
  %v170 = vpop.f32.mrb[0].mxu0
  %171 = vmatprep.mubr.bf16.mxu0 0
  %172 = vmatmul.mubr.bf16.gmra.mrb[0].mxu0 %v111
  %v173 = vpop.f32.mrb[0].mxu0
  %v174 = vadd.f32 %v46, %v173
  %v175 = vpop.f32.mrb[0].mxu0
  %v176 = vpop.f32.mrb[0].mxu0
  %v177 = vadd.f32 %v46, %v176
  %v178 = vpop.f32.mrb[0].mxu0
  %179 = vmatprep.mubr.bf16.mxu0 0
  %180 = vmatmul.mubr.bf16.gmra.mrb[0].mxu0 %v114
  %v181 = vpop.f32.mrb[0].mxu0
  %v182 = vadd.f32 %v46, %v181
  %v183 = vpop.f32.mrb[0].mxu0
  %v184 = vpop.f32.mrb[0].mxu0
  %v185 = vadd.f32 %v46, %v184
  %v186 = vpop.f32.mrb[0].mxu0
  %187 = vmatprep.mubr.bf16.mxu0 0
  %188 = vmatmul.mubr.bf16.gmra.mrb[0].mxu0 %v117
  %v189 = vpop.f32.mrb[0].mxu0
  %v190 = vadd.f32 %v46, %v189
  %v191 = vpop.f32.mrb[0].mxu0
  %v192 = vpop.f32.mrb[0].mxu0
  %v193 = vadd.f32 %v46, %v192
  %v194 = vpop.f32.mrb[0].mxu0
  %195 = vmatprep.mubr.bf16.mxu0 0
  %196 = vmatmul.mubr.bf16.gmra.mrb[0].mxu0 %v120
  %v197 = vpop.f32.mrb[0].mxu0
  %v198 = vadd.f32 %v46, %v197
  %v199 = vpop.f32.mrb[0].mxu0
  %v200 = vpop.f32.mrb[0].mxu0
  %v201 = vadd.f32 %v46, %v200
  %v202 = vpop.f32.mrb[0].mxu0
  %203 = vmatprep.mubr.bf16.mxu0 0
  %204 = vmatmul.mubr.bf16.gmra.mrb[0].mxu0 %v123
  %v205 = vpop.f32.mrb[0].mxu0
  %v206 = vadd.f32 %v46, %v205
  %v207 = vpop.f32.mrb[0].mxu0
  %v208 = vpop.f32.mrb[0].mxu0
  %v209 = vadd.f32 %v46, %v208
  %v210 = vpop.f32.mrb[0].mxu0
  %211 = vmatprep.mubr.bf16.mxu0 0
  %212 = vmatmul.mubr.bf16.gmra.mrb[0].mxu0 %v126
  %v213 = vpop.f32.mrb[0].mxu0
  %v214 = vadd.f32 %v46, %v213
  %v215 = vpop.f32.mrb[0].mxu0
  %v216 = vpop.f32.mrb[0].mxu0
  %v217 = vadd.f32 %v46, %v216
  %v218 = vpop.f32.mrb[0].mxu0
  %219 = vmatprep.mubr.bf16.mxu0 0
  %220 = vmatmul.mubr.bf16.gmra.mrb[0].mxu0 %v129
  %v221 = vpop.f32.mrb[0].mxu0
  %v222 = vadd.f32 %v46, %v221
  %v223 = vpop.f32.mrb[0].mxu0
  %v224 = vpop.f32.mrb[0].mxu0
  %v225 = vadd.f32 %v46, %v224
  %v226 = vpop.f32.mrb[0].mxu0
  %227 = vdwg.mxu0
  %s228 = sld [smem:[#allocation2]]
  %vm229 = vcmp.ge.f32.partialorder %v166, 0.0
  %vm230 = vcmp.ge.f32.partialorder %v169, 0.0
  %vm231 = vcmp.ge.f32.partialorder %v174, 0.0
  %vm232 = vcmp.ge.f32.partialorder %v177, 0.0
  %vm233 = vcmp.ge.f32.partialorder %v182, 0.0
  %vm234 = vcmp.ge.f32.partialorder %v185, 0.0
  %vm235 = vcmp.ge.f32.partialorder %v190, 0.0
  %vm236 = vcmp.ge.f32.partialorder %v193, 0.0
  %vm237 = vcmp.ge.f32.partialorder %v198, 0.0
  %vm238 = vcmp.ge.f32.partialorder %v201, 0.0
  %vm239 = vcmp.ge.f32.partialorder %v206, 0.0
  %vm240 = vcmp.ge.f32.partialorder %v209, 0.0
  %vm241 = vcmp.ge.f32.partialorder %v214, 0.0
  %vm242 = vcmp.ge.f32.partialorder %v217, 0.0
  %vm243 = vcmp.ge.f32.partialorder %v222, 0.0
  %vm244 = vcmp.ge.f32.partialorder %v225, 0.0
  %v245 = vstv %s228
  %v246 = vmul.f32 %v245, %v166
  %v247 = vmul.f32 %v245, %v169
  %v248 = vmul.f32 %v245, %v174
  %v249 = vmul.f32 %v245, %v177
  %v250 = vmul.f32 %v245, %v182
  %v251 = vmul.f32 %v245, %v185
  %v252 = vmul.f32 %v245, %v190
  %v253 = vmul.f32 %v245, %v193
  %v254 = vmul.f32 %v245, %v198
  %v255 = vmul.f32 %v245, %v201
  %v256 = vmul.f32 %v245, %v206
  %v257 = vmul.f32 %v245, %v209
  %v258 = vmul.f32 %v245, %v214
  %v259 = vmul.f32 %v245, %v217
  %v260 = vmul.f32 %v245, %v222
  %v261 = vmul.f32 %v245, %v225
  %v262 = vsel %vm229, %v166, %v246
  %v263 = vsel %vm230, %v169, %v247
  %v264 = vsel %vm231, %v174, %v248
  %v265 = vsel %vm232, %v177, %v249
  %v266 = vsel %vm233, %v182, %v250
  %v267 = vsel %vm234, %v185, %v251
  %v268 = vsel %vm235, %v190, %v252
  %v269 = vsel %vm236, %v193, %v253
  %v270 = vsel %vm237, %v198, %v254
  %v271 = vsel %vm238, %v201, %v255
  %v272 = vsel %vm239, %v206, %v256
  %v273 = vsel %vm240, %v209, %v257
  %v274 = vsel %vm241, %v214, %v258
  %v275 = vsel %vm242, %v217, %v259
  %v276 = vsel %vm243, %v222, %v260
  %v277 = vsel %vm244, %v225, %v261
  %278 = vst [vmem:[%s4] sm:$0xff] %v262
  %279 = vst [vmem:[%s4 + $0x8] sm:$0xff] %v263
  %280 = vst [vmem:[%s4 + $0x10] sm:$0xff] %v264
  %281 = vst [vmem:[%s4 + $0x18] sm:$0xff] %v265
  %282 = vst [vmem:[%s4 + $0x20] sm:$0xff] %v266
  %283 = vst [vmem:[%s4 + $0x28] sm:$0xff] %v267
  %284 = vst [vmem:[%s4 + $0x30] sm:$0xff] %v268
  %285 = vst [vmem:[%s4 + $0x38] sm:$0xff] %v269
  %286 = vst [vmem:[%s4 + $0x40] sm:$0xff] %v270
  %287 = vst [vmem:[%s4 + $0x48] sm:$0xff] %v271
  %288 = vst [vmem:[%s4 + $0x50] sm:$0xff] %v272
  %289 = vst [vmem:[%s4 + $0x58] sm:$0xff] %v273
  %290 = vst [vmem:[%s4 + $0x60] sm:$0xff] %v274
  %291 = vst [vmem:[%s4 + $0x68] sm:$0xff] %v275
  %292 = vst [vmem:[%s4 + $0x70] sm:$0xff] %v276
  %293 = vst [vmem:[%s4 + $0x78] sm:$0xff] %v277
  // Predicated region
  $region18: #{cfb_forward.20} parent=0 // pred_check
    _
  $region19: #{cfb_forward.20} parent=0 // pred_check_branch
    %295 = sbr.rel (0) target = $region21
  $region20: #{cfb_forward.20} parent=0 // pred_region
    _
  $region21: #{cfb_forward.20} parent=0 // pred_fallthru
    _
  // Predicated region
  $region22: #{cfb_forward.20} parent=0 // pred_check
    _
  $region23: #{cfb_forward.20} parent=0 // pred_check_branch
    %297 = sbr.rel (0) target = $region25
  $region24: #{cfb_forward.20} parent=0 // pred_region
    _
  $region25: #{cfb_forward.20} parent=0 // pred_fallthru
    _

// kernel: cfb_forward.18
$region0: #{cfb_forward.18}
  #allocation0 [shape = 'u32[]', space=smem, size = 0x4, offset = 0x4, fixed_abs, tag = 'smem constant byte address 0x4 - core index']
  #allocation1 [shape = 'u32[144,128]{1,0:T(1,128)}', space=vmem, size = 0x12000, scoped, tag = 'internal scratch']
  #allocation2 [shape = 'f32[1]{0:T(128)S(6)}', space=smem, size = 0x200, scoped, tag = 'scoped memory for cfb_forward.18']
  %s0 = inlined_call_operand.vmem [shape: bf16[512,32], index: 0, kind: input, shape index: {}]
  %s1 = inlined_call_operand.vmem [shape: bf16[32,128], index: 1, kind: input, shape index: {}]
  %s2 = inlined_call_operand.vmem [shape: f32[1,128], index: 2, kind: input, shape index: {}]
  %s3 = inlined_call_operand.<no memory space> [shape: f32[1], index: 3, kind: input, shape index: {}]
  %s4 = inlined_call_operand.vmem [shape: f32[512,128], index: 4, kind: output, shape index: {}]
  %s5 = sld [smem:[#allocation0]]
  $region49: #{cfb_forward.18} parent=0
    _
  %s7 = ssub.s32 1, %s5
  %s8 = scalar_select 0, %s7, %s5
  %9 = sst [smem:[#allocation2]] %s3
  loop: start=0, step=1, limit=4
  $region2: #{cfb_forward.18} parent=0 // loop_pre_header
    _
  $region3: #{cfb_forward.18} parent=0 // loop_header
    %s11 = sphi 0, %s15
    %p12 = scmp.ge.s32.totalorder %s11, 4
    %s21 = sphi 0, %s23
    %s24 = sphi 0, %s21
    %s25 = sphi 0, %s24
    %s41 = sphi 0, %s25
    %s45 = sphi 0, %s45
    %s47 = sphi 0, %s45
    %s48 = sphi 0, %s47
    %s62 = sphi 0, %s48
    %s66 = sphi 0, %s66
    %s68 = sphi 0, %s66
    %s69 = sphi 0, %s68
    %s83 = sphi 0, %s69
    %s87 = sphi 0, %s87
    %s89 = sphi 0, %s87
    %s90 = sphi 0, %s89
    %s104 = sphi 0, %s90
    %s110 = sphi 0, %s112
    %s113 = sphi 0, %s110
    %s114 = sphi 0, %s113
    %s130 = sphi 0, %s114
  $region4: #{cfb_forward.18} parent=0 // loop_header_branch
    %14 = sbr.rel (%p12) target = $region8
  $region5: #{cfb_forward.18} parent=0 // loop_body
    %s16 = ssub.s32 %s11, 1
    %s17 = ssub.s32 %s11, 2
    %s18 = sadd.s32 %s11, 1
    %s19 = ssub.s32 %s11, %s18
    %p20 = scmp.eq.s32.totalorder %s19, 0
    %s22 = sadd.s32 %s21, 1
    %s23 = scalar_select %p20, %s21, %s22
    %p26 = pneg %p20
    %p27 = scmp.eq.s32.totalorder %s11, 1
    %p28 = por %p26, %p27
    %p29 = scmp.ne.s32.totalorder %s21, %s24
    %p30 = scmp.eq.s32.totalorder %s11, 0
    %p31 = por %p29, %p30
    %p32 = scmp.ne.s32.totalorder %s21, %s24
    %p33 = scmp.eq.s32.totalorder %s16, 1
    %p34 = por %p32, %p33
    %p35 = scmp.ne.s32.totalorder %s24, %s25
    %p36 = scmp.eq.s32.totalorder %s16, 0
    %p37 = por %p35, %p36
    %p38 = scmp.ne.s32.totalorder %s24, %s25
    %p39 = scmp.eq.s32.totalorder %s17, 1
    %p40 = por %p38, %p39
    %p42 = scmp.ne.s32.totalorder %s25, %s41
    %p43 = scmp.eq.s32.totalorder %s17, 0
    %p44 = por %p42, %p43
    %s46 = sadd.s32 %s45, 1
    %p49 = scmp.eq.s32.totalorder %s11, 1
    %p50 = scmp.ne.s32.totalorder %s45, %s47
    %p51 = scmp.eq.s32.totalorder %s11, 0
    %p52 = por %p50, %p51
    %p53 = scmp.ne.s32.totalorder %s45, %s47
    %p54 = scmp.eq.s32.totalorder %s16, 1
    %p55 = por %p53, %p54
    %p56 = scmp.ne.s32.totalorder %s47, %s48
    %p57 = scmp.eq.s32.totalorder %s16, 0
    %p58 = por %p56, %p57
    %p59 = scmp.ne.s32.totalorder %s47, %s48
    %p60 = scmp.eq.s32.totalorder %s17, 1
    %p61 = por %p59, %p60
    %p63 = scmp.ne.s32.totalorder %s48, %s62
    %p64 = scmp.eq.s32.totalorder %s17, 0
    %p65 = por %p63, %p64
    %s67 = sadd.s32 %s66, 1
    %p70 = scmp.eq.s32.totalorder %s11, 1
    %p71 = scmp.ne.s32.totalorder %s66, %s68
    %p72 = scmp.eq.s32.totalorder %s11, 0
    %p73 = por %p71, %p72
    %p74 = scmp.ne.s32.totalorder %s66, %s68
    %p75 = scmp.eq.s32.totalorder %s16, 1
    %p76 = por %p74, %p75
    %p77 = scmp.ne.s32.totalorder %s68, %s69
    %p78 = scmp.eq.s32.totalorder %s16, 0
    %p79 = por %p77, %p78
    %p80 = scmp.ne.s32.totalorder %s68, %s69
    %p81 = scmp.eq.s32.totalorder %s17, 1
    %p82 = por %p80, %p81
    %p84 = scmp.ne.s32.totalorder %s69, %s83
    %p85 = scmp.eq.s32.totalorder %s17, 0
    %p86 = por %p84, %p85
    %s88 = sadd.s32 %s87, 1
    %p91 = scmp.eq.s32.totalorder %s11, 1
    %p92 = scmp.ne.s32.totalorder %s87, %s89
    %p93 = scmp.eq.s32.totalorder %s11, 0
    %p94 = por %p92, %p93
    %p95 = scmp.ne.s32.totalorder %s87, %s89
    %p96 = scmp.eq.s32.totalorder %s16, 1
    %p97 = por %p95, %p96
    %p98 = scmp.ne.s32.totalorder %s89, %s90
    %p99 = scmp.eq.s32.totalorder %s16, 0
    %p100 = por %p98, %p99
    %p101 = scmp.ne.s32.totalorder %s89, %s90
    %p102 = scmp.eq.s32.totalorder %s17, 1
    %p103 = por %p101, %p102
    %p105 = scmp.ne.s32.totalorder %s90, %s104
    %p106 = scmp.eq.s32.totalorder %s17, 0
    %p107 = por %p105, %p106
    %s108 = ssub.s32 %s11, %s18
    %p109 = scmp.eq.s32.totalorder %s108, 0
    %s111 = sadd.s32 %s110, 1
    %s112 = scalar_select %p109, %s110, %s111
    %p115 = pneg %p109
    %p116 = scmp.eq.s32.totalorder %s11, 1
    %p117 = por %p115, %p116
    %p118 = scmp.ne.s32.totalorder %s110, %s113
    %p119 = scmp.eq.s32.totalorder %s11, 0
    %p120 = por %p118, %p119
    %p121 = scmp.ne.s32.totalorder %s110, %s113
    %p122 = scmp.eq.s32.totalorder %s16, 1
    %p123 = por %p121, %p122
    %p124 = scmp.ne.s32.totalorder %s113, %s114
    %p125 = scmp.eq.s32.totalorder %s16, 0
    %p126 = por %p124, %p125
    %p127 = scmp.ne.s32.totalorder %s113, %s114
    %p128 = scmp.eq.s32.totalorder %s17, 1
    %p129 = por %p127, %p128
    %p131 = scmp.ne.s32.totalorder %s114, %s130
    %p132 = scmp.eq.s32.totalorder %s17, 0
    %p133 = por %p131, %p132
    %p134 = scmp.le.s32.totalorder 1, %s11
    %p135 = scmp.lt.s32.totalorder %s11, 3
    %p136 = pnand %p134, %p135
    %p137 = pneg %p136
    // Predicated region
    $region9: #{cfb_forward.18} parent=5 // pred_check
      _
    $region10: #{cfb_forward.18} parent=5 // pred_check_branch
      %139 = sbr.rel (%p136) target = $region12
    $region11: #{cfb_forward.18} parent=5 // pred_region
      %s140 = ssub.s32 %s11, 1
      // Predicated region
      $region13: #{cfb_forward.18} parent=11 // pred_check
        %p141 = pneg %p58
      $region14: #{cfb_forward.18} parent=11 // pred_check_branch
        %143 = sbr.rel (%p141) target = $region16
      $region15: #{cfb_forward.18} parent=11 // pred_region
        _
      $region16: #{cfb_forward.18} parent=11 // pred_fallthru
        _
      // Predicated region
      $region17: #{cfb_forward.18} parent=11 // pred_check
        %p144 = pneg %p79
      $region18: #{cfb_forward.18} parent=11 // pred_check_branch
        %146 = sbr.rel (%p144) target = $region20
      $region19: #{cfb_forward.18} parent=11 // pred_region
        _
      $region20: #{cfb_forward.18} parent=11 // pred_fallthru
        _
      // Predicated region
      $region21: #{cfb_forward.18} parent=11 // pred_check
        %p147 = pneg %p100
      $region22: #{cfb_forward.18} parent=11 // pred_check_branch
        %149 = sbr.rel (%p147) target = $region24
      $region23: #{cfb_forward.18} parent=11 // pred_region
        _
      $region24: #{cfb_forward.18} parent=11 // pred_fallthru
        _
    $region12: #{cfb_forward.18} parent=5 // pred_fallthru
      _
    %p150 = scmp.lt.s32.totalorder %s11, 2
    // Predicated region
    $region25: #{cfb_forward.18} parent=5 // pred_check
      %p151 = pneg %p150
    $region26: #{cfb_forward.18} parent=5 // pred_check_branch
      %153 = sbr.rel (%p151) target = $region28
    $region27: #{cfb_forward.18} parent=5 // pred_region
      // Predicated region
      $region29: #{cfb_forward.18} parent=27 // pred_check
        %p154 = pneg %p31
      $region30: #{cfb_forward.18} parent=27 // pred_check_branch
        %156 = sbr.rel (%p154) target = $region32
      $region31: #{cfb_forward.18} parent=27 // pred_region
        %s157 = smul.u32 32, %s11
        %p158 = scmp.lt.s32.totalorder %s157, 63
        %s159 = scalar_select %p158, %s157, 63
        %s160 = smul.addr %s159, 4
        %s161 = scalar_lea.vmem %s0, %s160
        %s162 = smul.u32 32, %s11
      $region32: #{cfb_forward.18} parent=27 // pred_fallthru
        _
    $region28: #{cfb_forward.18} parent=5 // pred_fallthru
      _
    %p163 = scmp.le.s32.totalorder 1, %s11
    %p164 = scmp.lt.s32.totalorder %s11, 3
    %p165 = pnand %p163, %p164
    %p166 = pneg %p165
    // Predicated region
    $region33: #{cfb_forward.18} parent=5 // pred_check
      _
    $region34: #{cfb_forward.18} parent=5 // pred_check_branch
      %168 = sbr.rel (%p165) target = $region36
    $region35: #{cfb_forward.18} parent=5 // pred_region
      %s169 = ssub.s32 %s11, 1
      %s170 = smul.u32 32, %s16
      %p171 = scmp.lt.s32.totalorder %s170, 63
      %s172 = scalar_select %p171, %s170, 63
      %s173 = smul.addr %s172, 4
      %s174 = scalar_lea.vmem %s0, %s173
      %p175 = pneg %p37
      %p176 = pneg %p34
      %p177 = pneg %p58
      %p178 = pneg %p55
      %p179 = pneg %p79
      %p180 = pneg %p76
      %p181 = pneg %p100
      %p182 = pneg %p97
      %p183 = pneg %p126
      %p184 = pneg %p123
      %s185 = smul.u32 32, %s16
      %p186 = scmp.lt.s32.totalorder %s185, 63
      %s187 = scalar_select %p186, %s185, 63
      %s188 = smul.addr %s187, 8
      %s189 = scalar_lea.vmem %s4, %s188
      %s190 = smul.u32 32, %s16
      %p191 = scmp.lt.s32.totalorder %s190, 63
      %s192 = scalar_select %p191, %s190, 63
      %s193 = smul.addr %s192, 4
      %s194 = scalar_lea.vmem %s0, %s193
      %s195 = smul.u32 32, %s16
      %s196 = smul.u32 32, %s16
      %p197 = scmp.lt.s32.totalorder %s196, 63
      %s198 = scalar_select %p197, %s196, 63
      %s199 = smul.addr %s198, 8
      %s200 = scalar_lea.vmem %s4, %s199
      %s201 = smul.u32 32, %s16
      %v203 = vld [vmem:[%s194] sm:$0xf]
      %v204 = vld [vmem:[%s194 + $0x4] sm:$0xf]
      %v205 = vld [vmem:[%s194 + $0x8] sm:$0xf]
      %v206 = vld [vmem:[%s194 + $0xc] sm:$0xf]
      %v207 = vld [vmem:[%s194 + $0x10] sm:$0xf]
      %v208 = vld [vmem:[%s194 + $0x14] sm:$0xf]
      %v209 = vld [vmem:[%s194 + $0x18] sm:$0xf]
      %v210 = vld [vmem:[%s194 + $0x1c] sm:$0xf]
      %v211 = vld [vmem:[%s194 + $0x20] sm:$0xf]
      %v212 = vld [vmem:[%s194 + $0x24] sm:$0xf]
      %v213 = vld [vmem:[%s194 + $0x28] sm:$0xf]
      %v214 = vld [vmem:[%s194 + $0x2c] sm:$0xf]
      %v215 = vld [vmem:[%s194 + $0x30] sm:$0xf]
      %v216 = vld [vmem:[%s194 + $0x34] sm:$0xf]
      %v217 = vld [vmem:[%s194 + $0x38] sm:$0xf]
      %v218 = vld [vmem:[%s194 + $0x3c] sm:$0xf]
      %v219 = vld [vmem:[%s194 + $0x40] sm:$0xf]
      %v220 = vld [vmem:[%s194 + $0x44] sm:$0xf]
      %v221 = vld [vmem:[%s194 + $0x48] sm:$0xf]
      %v222 = vld [vmem:[%s194 + $0x4c] sm:$0xf]
      %v223 = vld [vmem:[%s194 + $0x50] sm:$0xf]
      %v224 = vld [vmem:[%s194 + $0x54] sm:$0xf]
      %v225 = vld [vmem:[%s194 + $0x58] sm:$0xf]
      %v226 = vld [vmem:[%s194 + $0x5c] sm:$0xf]
      %v227 = vld [vmem:[%s194 + $0x60] sm:$0xf]
      %v228 = vld [vmem:[%s194 + $0x64] sm:$0xf]
      %v229 = vld [vmem:[%s194 + $0x68] sm:$0xf]
      %v230 = vld [vmem:[%s194 + $0x6c] sm:$0xf]
      %v231 = vld [vmem:[%s194 + $0x70] sm:$0xf]
      %v232 = vld [vmem:[%s194 + $0x74] sm:$0xf]
      %v233 = vld [vmem:[%s194 + $0x78] sm:$0xf]
      %v234 = vld [vmem:[%s194 + $0x7c] sm:$0xf]
      %v235 = vld [vmem:[%s1] sm:$0xf]
      %v236 = vld [vmem:[%s1 + $0x4] sm:$0xf]
      %v237 = vld [vmem:[%s1 + $0x8] sm:$0xf]
      %v238 = vld [vmem:[%s1 + $0xc] sm:$0xf]
      %v239 = vld [vmem:[%s2] sm:$0x1]
      %v241 = vlaneseq
      %v242 = vshrl.u32 %v241, 7
      %v243 = vsub.s32 0, %v242
      %v244 = vrot.slane %v239, %v243
      %v278 = vunpack.c.l.b16 %v203
      %v279 = vunpack.c.l.b16 %v204
      %v280 = vunpack.c.l.b16 %v205
      %v281 = vunpack.c.l.b16 %v206
      %v282 = vunpack.c.l.b16 %v207
      %v283 = vunpack.c.l.b16 %v208
      %v284 = vunpack.c.l.b16 %v209
      %v285 = vunpack.c.l.b16 %v210
      %v286 = vunpack.c.l.b16 %v211
      %v287 = vunpack.c.l.b16 %v212
      %v288 = vunpack.c.l.b16 %v213
      %v289 = vunpack.c.l.b16 %v214
      %v290 = vunpack.c.l.b16 %v215
      %v291 = vunpack.c.l.b16 %v216
      %v292 = vunpack.c.l.b16 %v217
      %v293 = vunpack.c.l.b16 %v218
      %v294 = vunpack.c.l.b16 %v219
      %v295 = vunpack.c.l.b16 %v220
      %v296 = vunpack.c.l.b16 %v221
      %v297 = vunpack.c.l.b16 %v222
      %v298 = vunpack.c.l.b16 %v223
      %v299 = vunpack.c.l.b16 %v224
      %v300 = vunpack.c.l.b16 %v225
      %v301 = vunpack.c.l.b16 %v226
      %v302 = vunpack.c.l.b16 %v227
      %v303 = vunpack.c.l.b16 %v228
      %v304 = vunpack.c.l.b16 %v229
      %v305 = vunpack.c.l.b16 %v230
      %v306 = vunpack.c.l.b16 %v231
      %v307 = vunpack.c.l.b16 %v232
      %v308 = vunpack.c.l.b16 %v233
      %v309 = vunpack.c.l.b16 %v234
      %v310 = vpack.c.b16 %v279, %v278
      %v311 = vpack.c.b16 %v281, %v280
      %v312 = vpack.c.b16 %v283, %v282
      %v313 = vpack.c.b16 %v285, %v284
      %v314 = vpack.c.b16 %v287, %v286
      %v315 = vpack.c.b16 %v289, %v288
      %v316 = vpack.c.b16 %v291, %v290
      %v317 = vpack.c.b16 %v293, %v292
      %v318 = vpack.c.b16 %v295, %v294
      %v319 = vpack.c.b16 %v297, %v296
      %v320 = vpack.c.b16 %v299, %v298
      %v321 = vpack.c.b16 %v301, %v300
      %v322 = vpack.c.b16 %v303, %v302
      %v323 = vpack.c.b16 %v305, %v304
      %v324 = vpack.c.b16 %v307, %v306
      %v325 = vpack.c.b16 %v309, %v308
      %v330 = vunpack.c.l.b16 %v235
      %v331 = vunpack.c.l.b16 %v236
      %v332 = vunpack.c.l.b16 %v237
      %v333 = vunpack.c.l.b16 %v238
      %v334 = vpack.c.b16 %v331, %v330
      %v335 = vpack.c.b16 %v333, %v332
      %vm338 = vcmask 261120
      %v340 = vsel %vm338, %v310, 0
      %v343 = vsel %vm338, %v311, 0
      %v346 = vsel %vm338, %v312, 0
      %v349 = vsel %vm338, %v313, 0
      %v352 = vsel %vm338, %v314, 0
      %v355 = vsel %vm338, %v315, 0
      %v358 = vsel %vm338, %v316, 0
      %v361 = vsel %vm338, %v317, 0
      %v364 = vsel %vm338, %v318, 0
      %v367 = vsel %vm338, %v319, 0
      %v370 = vsel %vm338, %v320, 0
      %v373 = vsel %vm338, %v321, 0
      %v376 = vsel %vm338, %v322, 0
      %v379 = vsel %vm338, %v323, 0
      %v382 = vsel %vm338, %v324, 0
      %v385 = vsel %vm338, %v325, 0
      %387 = vmatprep.subr.bf16.mxu0 0
      %388 = vmatpush1.bf16.msra.mxu0 %v334
      %389 = vmatprep.subr.bf16.mxu0 0
      %390 = vmatpush1.bf16.msra.mxu0 %v335
      %391 = vmatprep.subr.bf16.mxu0 0
      %392 = vmatpush1.bf16.msra.mxu0 0
      %393 = vmatprep.subr.bf16.mxu0 0
      %394 = vmatpush1.bf16.msra.mxu0 0
      %395 = vmatprep.subr.bf16.mxu0 0
      %396 = vmatpush1.bf16.msra.mxu0 0
      %397 = vmatprep.subr.bf16.mxu0 0
      %398 = vmatpush1.bf16.msra.mxu0 0
      %399 = vmatprep.subr.bf16.mxu0 0
      %400 = vmatpush1.bf16.msra.mxu0 0
      %401 = vmatprep.subr.bf16.mxu0 0
      %402 = vmatpush1.bf16.msra.mxu0 0
      %403 = vmatprep.subr.bf16.mxu0 0
      %404 = vmatpush1.bf16.msra.mxu0 0
      %405 = vmatprep.subr.bf16.mxu0 0
      %406 = vmatpush1.bf16.msra.mxu0 0
      %407 = vmatprep.subr.bf16.mxu0 0
      %408 = vmatpush1.bf16.msra.mxu0 0
      %409 = vmatprep.subr.bf16.mxu0 0
      %410 = vmatpush1.bf16.msra.mxu0 0
      %411 = vmatprep.subr.bf16.mxu0 0
      %412 = vmatpush1.bf16.msra.mxu0 0
      %413 = vmatprep.subr.bf16.mxu0 0
      %414 = vmatpush1.bf16.msra.mxu0 0
      %415 = vmatprep.subr.bf16.mxu0 0
      %416 = vmatpush1.bf16.msra.mxu0 0
      %417 = vmatprep.subr.bf16.mxu0 0
      %418 = vmatpush1.bf16.msra.mxu0 0
      %419 = vmatprep.mubr.bf16.mxu0 0
      %420 = vmatmul.mubr.bf16.gmra.mrb[0].mxu0 %v340
      %v421 = vpop.f32.mrb[0].mxu0
      %v422 = vadd.f32 %v244, %v421
      %v423 = vpop.f32.mrb[0].mxu0
      %v424 = vpop.f32.mrb[0].mxu0
      %v425 = vadd.f32 %v244, %v424
      %v426 = vpop.f32.mrb[0].mxu0
      %427 = vmatprep.mubr.bf16.mxu0 0
      %428 = vmatmul.mubr.bf16.gmra.mrb[0].mxu0 %v343
      %v429 = vpop.f32.mrb[0].mxu0
      %v430 = vadd.f32 %v244, %v429
      %v431 = vpop.f32.mrb[0].mxu0
      %v432 = vpop.f32.mrb[0].mxu0
      %v433 = vadd.f32 %v244, %v432
      %v434 = vpop.f32.mrb[0].mxu0
      %435 = vmatprep.mubr.bf16.mxu0 0
      %436 = vmatmul.mubr.bf16.gmra.mrb[0].mxu0 %v346
      %v437 = vpop.f32.mrb[0].mxu0
      %v438 = vadd.f32 %v244, %v437
      %v439 = vpop.f32.mrb[0].mxu0
      %v440 = vpop.f32.mrb[0].mxu0
      %v441 = vadd.f32 %v244, %v440
      %v442 = vpop.f32.mrb[0].mxu0
      %443 = vmatprep.mubr.bf16.mxu0 0
      %444 = vmatmul.mubr.bf16.gmra.mrb[0].mxu0 %v349
      %v445 = vpop.f32.mrb[0].mxu0
      %v446 = vadd.f32 %v244, %v445
      %v447 = vpop.f32.mrb[0].mxu0
      %v448 = vpop.f32.mrb[0].mxu0
      %v449 = vadd.f32 %v244, %v448
      %v450 = vpop.f32.mrb[0].mxu0
      %451 = vmatprep.mubr.bf16.mxu0 0
      %452 = vmatmul.mubr.bf16.gmra.mrb[0].mxu0 %v352
      %v453 = vpop.f32.mrb[0].mxu0
      %v454 = vadd.f32 %v244, %v453
      %v455 = vpop.f32.mrb[0].mxu0
      %v456 = vpop.f32.mrb[0].mxu0
      %v457 = vadd.f32 %v244, %v456
      %v458 = vpop.f32.mrb[0].mxu0
      %459 = vmatprep.mubr.bf16.mxu0 0
      %460 = vmatmul.mubr.bf16.gmra.mrb[0].mxu0 %v355
      %v461 = vpop.f32.mrb[0].mxu0
      %v462 = vadd.f32 %v244, %v461
      %v463 = vpop.f32.mrb[0].mxu0
      %v464 = vpop.f32.mrb[0].mxu0
      %v465 = vadd.f32 %v244, %v464
      %v466 = vpop.f32.mrb[0].mxu0
      %467 = vmatprep.mubr.bf16.mxu0 0
      %468 = vmatmul.mubr.bf16.gmra.mrb[0].mxu0 %v358
      %v469 = vpop.f32.mrb[0].mxu0
      %v470 = vadd.f32 %v244, %v469
      %v471 = vpop.f32.mrb[0].mxu0
      %v472 = vpop.f32.mrb[0].mxu0
      %v473 = vadd.f32 %v244, %v472
      %v474 = vpop.f32.mrb[0].mxu0
      %475 = vmatprep.mubr.bf16.mxu0 0
      %476 = vmatmul.mubr.bf16.gmra.mrb[0].mxu0 %v361
      %v477 = vpop.f32.mrb[0].mxu0
      %v478 = vadd.f32 %v244, %v477
      %v479 = vpop.f32.mrb[0].mxu0
      %v480 = vpop.f32.mrb[0].mxu0
      %v481 = vadd.f32 %v244, %v480
      %v482 = vpop.f32.mrb[0].mxu0
      %483 = vmatprep.mubr.bf16.mxu0 0
      %484 = vmatmul.mubr.bf16.gmra.mrb[0].mxu0 %v364
      %v485 = vpop.f32.mrb[0].mxu0
      %v486 = vadd.f32 %v244, %v485
      %v487 = vpop.f32.mrb[0].mxu0
      %v488 = vpop.f32.mrb[0].mxu0
      %v489 = vadd.f32 %v244, %v488
      %v490 = vpop.f32.mrb[0].mxu0
      %491 = vmatprep.mubr.bf16.mxu0 0
      %492 = vmatmul.mubr.bf16.gmra.mrb[0].mxu0 %v367
      %v493 = vpop.f32.mrb[0].mxu0
      %v494 = vadd.f32 %v244, %v493
      %v495 = vpop.f32.mrb[0].mxu0
      %v496 = vpop.f32.mrb[0].mxu0
      %v497 = vadd.f32 %v244, %v496
      %v498 = vpop.f32.mrb[0].mxu0
      %499 = vmatprep.mubr.bf16.mxu0 0
      %500 = vmatmul.mubr.bf16.gmra.mrb[0].mxu0 %v370
      %v501 = vpop.f32.mrb[0].mxu0
      %v502 = vadd.f32 %v244, %v501
      %v503 = vpop.f32.mrb[0].mxu0
      %v504 = vpop.f32.mrb[0].mxu0
      %v505 = vadd.f32 %v244, %v504
      %v506 = vpop.f32.mrb[0].mxu0
      %507 = vmatprep.mubr.bf16.mxu0 0
      %508 = vmatmul.mubr.bf16.gmra.mrb[0].mxu0 %v373
      %v509 = vpop.f32.mrb[0].mxu0
      %v510 = vadd.f32 %v244, %v509
      %v511 = vpop.f32.mrb[0].mxu0
      %v512 = vpop.f32.mrb[0].mxu0
      %v513 = vadd.f32 %v244, %v512
      %v514 = vpop.f32.mrb[0].mxu0
      %515 = vmatprep.mubr.bf16.mxu0 0
      %516 = vmatmul.mubr.bf16.gmra.mrb[0].mxu0 %v376
      %v517 = vpop.f32.mrb[0].mxu0
      %v518 = vadd.f32 %v244, %v517
      %v519 = vpop.f32.mrb[0].mxu0
      %v520 = vpop.f32.mrb[0].mxu0
      %v521 = vadd.f32 %v244, %v520
      %v522 = vpop.f32.mrb[0].mxu0
      %523 = vmatprep.mubr.bf16.mxu0 0
      %524 = vmatmul.mubr.bf16.gmra.mrb[0].mxu0 %v379
      %v525 = vpop.f32.mrb[0].mxu0
      %v526 = vadd.f32 %v244, %v525
      %v527 = vpop.f32.mrb[0].mxu0
      %v528 = vpop.f32.mrb[0].mxu0
      %v529 = vadd.f32 %v244, %v528
      %v530 = vpop.f32.mrb[0].mxu0
      %531 = vmatprep.mubr.bf16.mxu0 0
      %532 = vmatmul.mubr.bf16.gmra.mrb[0].mxu0 %v382
      %v533 = vpop.f32.mrb[0].mxu0
      %v534 = vadd.f32 %v244, %v533
      %v535 = vpop.f32.mrb[0].mxu0
      %v536 = vpop.f32.mrb[0].mxu0
      %v537 = vadd.f32 %v244, %v536
      %v538 = vpop.f32.mrb[0].mxu0
      %539 = vmatprep.mubr.bf16.mxu0 0
      %540 = vmatmul.mubr.bf16.gmra.mrb[0].mxu0 %v385
      %v541 = vpop.f32.mrb[0].mxu0
      %v542 = vadd.f32 %v244, %v541
      %v543 = vpop.f32.mrb[0].mxu0
      %v544 = vpop.f32.mrb[0].mxu0
      %v545 = vadd.f32 %v244, %v544
      %v546 = vpop.f32.mrb[0].mxu0
      %547 = vdwg.mxu0
      %s548 = sld [smem:[#allocation2]]
      %vm549 = vcmp.ge.f32.partialorder %v422, 0.0
      %vm550 = vcmp.ge.f32.partialorder %v425, 0.0
      %vm551 = vcmp.ge.f32.partialorder %v430, 0.0
      %vm552 = vcmp.ge.f32.partialorder %v433, 0.0
      %vm553 = vcmp.ge.f32.partialorder %v438, 0.0
      %vm554 = vcmp.ge.f32.partialorder %v441, 0.0
      %vm555 = vcmp.ge.f32.partialorder %v446, 0.0
      %vm556 = vcmp.ge.f32.partialorder %v449, 0.0
      %vm557 = vcmp.ge.f32.partialorder %v454, 0.0
      %vm558 = vcmp.ge.f32.partialorder %v457, 0.0
      %vm559 = vcmp.ge.f32.partialorder %v462, 0.0
      %vm560 = vcmp.ge.f32.partialorder %v465, 0.0
      %vm561 = vcmp.ge.f32.partialorder %v470, 0.0
      %vm562 = vcmp.ge.f32.partialorder %v473, 0.0
      %vm563 = vcmp.ge.f32.partialorder %v478, 0.0
      %vm564 = vcmp.ge.f32.partialorder %v481, 0.0
      %vm565 = vcmp.ge.f32.partialorder %v486, 0.0
      %vm566 = vcmp.ge.f32.partialorder %v489, 0.0
      %vm567 = vcmp.ge.f32.partialorder %v494, 0.0
      %vm568 = vcmp.ge.f32.partialorder %v497, 0.0
      %vm569 = vcmp.ge.f32.partialorder %v502, 0.0
      %vm570 = vcmp.ge.f32.partialorder %v505, 0.0
      %vm571 = vcmp.ge.f32.partialorder %v510, 0.0
      %vm572 = vcmp.ge.f32.partialorder %v513, 0.0
      %vm573 = vcmp.ge.f32.partialorder %v518, 0.0
      %vm574 = vcmp.ge.f32.partialorder %v521, 0.0
      %vm575 = vcmp.ge.f32.partialorder %v526, 0.0
      %vm576 = vcmp.ge.f32.partialorder %v529, 0.0
      %vm577 = vcmp.ge.f32.partialorder %v534, 0.0
      %vm578 = vcmp.ge.f32.partialorder %v537, 0.0
      %vm579 = vcmp.ge.f32.partialorder %v542, 0.0
      %vm580 = vcmp.ge.f32.partialorder %v545, 0.0
      %v581 = vstv %s548
      %v582 = vmul.f32 %v581, %v422
      %v583 = vmul.f32 %v581, %v425
      %v584 = vmul.f32 %v581, %v430
      %v585 = vmul.f32 %v581, %v433
      %v586 = vmul.f32 %v581, %v438
      %v587 = vmul.f32 %v581, %v441
      %v588 = vmul.f32 %v581, %v446
      %v589 = vmul.f32 %v581, %v449
      %v590 = vmul.f32 %v581, %v454
      %v591 = vmul.f32 %v581, %v457
      %v592 = vmul.f32 %v581, %v462
      %v593 = vmul.f32 %v581, %v465
      %v594 = vmul.f32 %v581, %v470
      %v595 = vmul.f32 %v581, %v473
      %v596 = vmul.f32 %v581, %v478
      %v597 = vmul.f32 %v581, %v481
      %v598 = vmul.f32 %v581, %v486
      %v599 = vmul.f32 %v581, %v489
      %v600 = vmul.f32 %v581, %v494
      %v601 = vmul.f32 %v581, %v497
      %v602 = vmul.f32 %v581, %v502
      %v603 = vmul.f32 %v581, %v505
      %v604 = vmul.f32 %v581, %v510
      %v605 = vmul.f32 %v581, %v513
      %v606 = vmul.f32 %v581, %v518
      %v607 = vmul.f32 %v581, %v521
      %v608 = vmul.f32 %v581, %v526
      %v609 = vmul.f32 %v581, %v529
      %v610 = vmul.f32 %v581, %v534
      %v611 = vmul.f32 %v581, %v537
      %v612 = vmul.f32 %v581, %v542
      %v613 = vmul.f32 %v581, %v545
      %v614 = vsel %vm549, %v422, %v582
      %v615 = vsel %vm550, %v425, %v583
      %v616 = vsel %vm551, %v430, %v584
      %v617 = vsel %vm552, %v433, %v585
      %v618 = vsel %vm553, %v438, %v586
      %v619 = vsel %vm554, %v441, %v587
      %v620 = vsel %vm555, %v446, %v588
      %v621 = vsel %vm556, %v449, %v589
      %v622 = vsel %vm557, %v454, %v590
      %v623 = vsel %vm558, %v457, %v591
      %v624 = vsel %vm559, %v462, %v592
      %v625 = vsel %vm560, %v465, %v593
      %v626 = vsel %vm561, %v470, %v594
      %v627 = vsel %vm562, %v473, %v595
      %v628 = vsel %vm563, %v478, %v596
      %v629 = vsel %vm564, %v481, %v597
      %v630 = vsel %vm565, %v486, %v598
      %v631 = vsel %vm566, %v489, %v599
      %v632 = vsel %vm567, %v494, %v600
      %v633 = vsel %vm568, %v497, %v601
      %v634 = vsel %vm569, %v502, %v602
      %v635 = vsel %vm570, %v505, %v603
      %v636 = vsel %vm571, %v510, %v604
      %v637 = vsel %vm572, %v513, %v605
      %v638 = vsel %vm573, %v518, %v606
      %v639 = vsel %vm574, %v521, %v607
      %v640 = vsel %vm575, %v526, %v608
      %v641 = vsel %vm576, %v529, %v609
      %v642 = vsel %vm577, %v534, %v610
      %v643 = vsel %vm578, %v537, %v611
      %v644 = vsel %vm579, %v542, %v612
      %v645 = vsel %vm580, %v545, %v613
      %646 = vst [vmem:[%s200] sm:$0xff] %v614
      %647 = vst [vmem:[%s200 + $0x8] sm:$0xff] %v615
      %648 = vst [vmem:[%s200 + $0x10] sm:$0xff] %v616
      %649 = vst [vmem:[%s200 + $0x18] sm:$0xff] %v617
      %650 = vst [vmem:[%s200 + $0x20] sm:$0xff] %v618
      %651 = vst [vmem:[%s200 + $0x28] sm:$0xff] %v619
      %652 = vst [vmem:[%s200 + $0x30] sm:$0xff] %v620
      %653 = vst [vmem:[%s200 + $0x38] sm:$0xff] %v621
      %654 = vst [vmem:[%s200 + $0x40] sm:$0xff] %v622
      %655 = vst [vmem:[%s200 + $0x48] sm:$0xff] %v623
      %656 = vst [vmem:[%s200 + $0x50] sm:$0xff] %v624
      %657 = vst [vmem:[%s200 + $0x58] sm:$0xff] %v625
      %658 = vst [vmem:[%s200 + $0x60] sm:$0xff] %v626
      %659 = vst [vmem:[%s200 + $0x68] sm:$0xff] %v627
      %660 = vst [vmem:[%s200 + $0x70] sm:$0xff] %v628
      %661 = vst [vmem:[%s200 + $0x78] sm:$0xff] %v629
      %662 = vst [vmem:[%s200 + $0x80] sm:$0xff] %v630
      %663 = vst [vmem:[%s200 + $0x88] sm:$0xff] %v631
      %664 = vst [vmem:[%s200 + $0x90] sm:$0xff] %v632
      %665 = vst [vmem:[%s200 + $0x98] sm:$0xff] %v633
      %666 = vst [vmem:[%s200 + $0xa0] sm:$0xff] %v634
      %667 = vst [vmem:[%s200 + $0xa8] sm:$0xff] %v635
      %668 = vst [vmem:[%s200 + $0xb0] sm:$0xff] %v636
      %669 = vst [vmem:[%s200 + $0xb8] sm:$0xff] %v637
      %670 = vst [vmem:[%s200 + $0xc0] sm:$0xff] %v638
      %671 = vst [vmem:[%s200 + $0xc8] sm:$0xff] %v639
      %672 = vst [vmem:[%s200 + $0xd0] sm:$0xff] %v640
      %673 = vst [vmem:[%s200 + $0xd8] sm:$0xff] %v641
      %674 = vst [vmem:[%s200 + $0xe0] sm:$0xff] %v642
      %675 = vst [vmem:[%s200 + $0xe8] sm:$0xff] %v643
      %676 = vst [vmem:[%s200 + $0xf0] sm:$0xff] %v644
      %677 = vst [vmem:[%s200 + $0xf8] sm:$0xff] %v645
      %s678 = smul.u32 32, %s16
      %p679 = scmp.lt.s32.totalorder %s678, 63
      %s680 = scalar_select %p679, %s678, 63
      %s681 = smul.addr %s680, 8
      %s682 = scalar_lea.vmem %s4, %s681
      // Predicated region
      $region37: #{cfb_forward.18} parent=35 // pred_check
        %p683 = pneg %p123
      $region38: #{cfb_forward.18} parent=35 // pred_check_branch
        %685 = sbr.rel (%p683) target = $region40
      $region39: #{cfb_forward.18} parent=35 // pred_region
        %s686 = smul.u32 32, %s16
      $region40: #{cfb_forward.18} parent=35 // pred_fallthru
        _
    $region36: #{cfb_forward.18} parent=5 // pred_fallthru
      _
    %p687 = scmp.le.s32.totalorder 2, %s11
    // Predicated region
    $region41: #{cfb_forward.18} parent=5 // pred_check
      %p688 = pneg %p687
    $region42: #{cfb_forward.18} parent=5 // pred_check_branch
      %690 = sbr.rel (%p688) target = $region44
    $region43: #{cfb_forward.18} parent=5 // pred_region
      %s691 = ssub.s32 %s11, 2
      // Predicated region
      $region45: #{cfb_forward.18} parent=43 // pred_check
        %p692 = pneg %p129
      $region46: #{cfb_forward.18} parent=43 // pred_check_branch
        %694 = sbr.rel (%p692) target = $region48
      $region47: #{cfb_forward.18} parent=43 // pred_region
        %s695 = smul.u32 32, %s17
        %p696 = scmp.lt.s32.totalorder %s695, 63
        %s697 = scalar_select %p696, %s695, 63
        %s698 = smul.addr %s697, 8
        %s699 = scalar_lea.vmem %s4, %s698
      $region48: #{cfb_forward.18} parent=43 // pred_fallthru
        _
    $region44: #{cfb_forward.18} parent=5 // pred_fallthru
      _
  $region6: #{cfb_forward.18} parent=0 // loop_footer
    %s15 = sadd.s32 1, %s11
  $region7: #{cfb_forward.18} parent=0 // loop_footer_branch
    %10 = sbr.rel target = $region3
  $region8: #{cfb_forward.18} parent=0 // loop_exit
    _

// kernel: cfb_forward.22
$region0: #{cfb_forward.22}
  #allocation0 [shape = 'u32[]', space=smem, size = 0x4, offset = 0x4, fixed_abs, tag = 'smem constant byte address 0x4 - core index']
  #allocation1 [shape = 'u32[144,128]{1,0:T(1,128)}', space=vmem, size = 0x12000, scoped, tag = 'internal scratch']
  #allocation2 [shape = 'f32[1]{0:T(128)S(6)}', space=smem, size = 0x200, scoped, tag = 'scoped memory for cfb_forward.22']
  %s0 = inlined_call_operand.vmem [shape: bf16[512,48], index: 0, kind: input, shape index: {}]
  %s1 = inlined_call_operand.vmem [shape: bf16[48,128], index: 1, kind: input, shape index: {}]
  %s2 = inlined_call_operand.vmem [shape: f32[1,128], index: 2, kind: input, shape index: {}]
  %s3 = inlined_call_operand.<no memory space> [shape: f32[1], index: 3, kind: input, shape index: {}]
  %s4 = inlined_call_operand.vmem [shape: f32[512,128], index: 4, kind: output, shape index: {}]
  %s5 = sld [smem:[#allocation0]]
  $region49: #{cfb_forward.22} parent=0
    _
  %s7 = ssub.s32 1, %s5
  %s8 = scalar_select 0, %s7, %s5
  %9 = sst [smem:[#allocation2]] %s3
  loop: start=0, step=1, limit=4
  $region2: #{cfb_forward.22} parent=0 // loop_pre_header
    _
  $region3: #{cfb_forward.22} parent=0 // loop_header
    %s11 = sphi 0, %s15
    %p12 = scmp.ge.s32.totalorder %s11, 4
    %s21 = sphi 0, %s23
    %s24 = sphi 0, %s21
    %s25 = sphi 0, %s24
    %s41 = sphi 0, %s25
    %s45 = sphi 0, %s45
    %s47 = sphi 0, %s45
    %s48 = sphi 0, %s47
    %s62 = sphi 0, %s48
    %s66 = sphi 0, %s66
    %s68 = sphi 0, %s66
    %s69 = sphi 0, %s68
    %s83 = sphi 0, %s69
    %s87 = sphi 0, %s87
    %s89 = sphi 0, %s87
    %s90 = sphi 0, %s89
    %s104 = sphi 0, %s90
    %s110 = sphi 0, %s112
    %s113 = sphi 0, %s110
    %s114 = sphi 0, %s113
    %s130 = sphi 0, %s114
  $region4: #{cfb_forward.22} parent=0 // loop_header_branch
    %14 = sbr.rel (%p12) target = $region8
  $region5: #{cfb_forward.22} parent=0 // loop_body
    %s16 = ssub.s32 %s11, 1
    %s17 = ssub.s32 %s11, 2
    %s18 = sadd.s32 %s11, 1
    %s19 = ssub.s32 %s11, %s18
    %p20 = scmp.eq.s32.totalorder %s19, 0
    %s22 = sadd.s32 %s21, 1
    %s23 = scalar_select %p20, %s21, %s22
    %p26 = pneg %p20
    %p27 = scmp.eq.s32.totalorder %s11, 1
    %p28 = por %p26, %p27
    %p29 = scmp.ne.s32.totalorder %s21, %s24
    %p30 = scmp.eq.s32.totalorder %s11, 0
    %p31 = por %p29, %p30
    %p32 = scmp.ne.s32.totalorder %s21, %s24
    %p33 = scmp.eq.s32.totalorder %s16, 1
    %p34 = por %p32, %p33
    %p35 = scmp.ne.s32.totalorder %s24, %s25
    %p36 = scmp.eq.s32.totalorder %s16, 0
    %p37 = por %p35, %p36
    %p38 = scmp.ne.s32.totalorder %s24, %s25
    %p39 = scmp.eq.s32.totalorder %s17, 1
    %p40 = por %p38, %p39
    %p42 = scmp.ne.s32.totalorder %s25, %s41
    %p43 = scmp.eq.s32.totalorder %s17, 0
    %p44 = por %p42, %p43
    %s46 = sadd.s32 %s45, 1
    %p49 = scmp.eq.s32.totalorder %s11, 1
    %p50 = scmp.ne.s32.totalorder %s45, %s47
    %p51 = scmp.eq.s32.totalorder %s11, 0
    %p52 = por %p50, %p51
    %p53 = scmp.ne.s32.totalorder %s45, %s47
    %p54 = scmp.eq.s32.totalorder %s16, 1
    %p55 = por %p53, %p54
    %p56 = scmp.ne.s32.totalorder %s47, %s48
    %p57 = scmp.eq.s32.totalorder %s16, 0
    %p58 = por %p56, %p57
    %p59 = scmp.ne.s32.totalorder %s47, %s48
    %p60 = scmp.eq.s32.totalorder %s17, 1
    %p61 = por %p59, %p60
    %p63 = scmp.ne.s32.totalorder %s48, %s62
    %p64 = scmp.eq.s32.totalorder %s17, 0
    %p65 = por %p63, %p64
    %s67 = sadd.s32 %s66, 1
    %p70 = scmp.eq.s32.totalorder %s11, 1
    %p71 = scmp.ne.s32.totalorder %s66, %s68
    %p72 = scmp.eq.s32.totalorder %s11, 0
    %p73 = por %p71, %p72
    %p74 = scmp.ne.s32.totalorder %s66, %s68
    %p75 = scmp.eq.s32.totalorder %s16, 1
    %p76 = por %p74, %p75
    %p77 = scmp.ne.s32.totalorder %s68, %s69
    %p78 = scmp.eq.s32.totalorder %s16, 0
    %p79 = por %p77, %p78
    %p80 = scmp.ne.s32.totalorder %s68, %s69
    %p81 = scmp.eq.s32.totalorder %s17, 1
    %p82 = por %p80, %p81
    %p84 = scmp.ne.s32.totalorder %s69, %s83
    %p85 = scmp.eq.s32.totalorder %s17, 0
    %p86 = por %p84, %p85
    %s88 = sadd.s32 %s87, 1
    %p91 = scmp.eq.s32.totalorder %s11, 1
    %p92 = scmp.ne.s32.totalorder %s87, %s89
    %p93 = scmp.eq.s32.totalorder %s11, 0
    %p94 = por %p92, %p93
    %p95 = scmp.ne.s32.totalorder %s87, %s89
    %p96 = scmp.eq.s32.totalorder %s16, 1
    %p97 = por %p95, %p96
    %p98 = scmp.ne.s32.totalorder %s89, %s90
    %p99 = scmp.eq.s32.totalorder %s16, 0
    %p100 = por %p98, %p99
    %p101 = scmp.ne.s32.totalorder %s89, %s90
    %p102 = scmp.eq.s32.totalorder %s17, 1
    %p103 = por %p101, %p102
    %p105 = scmp.ne.s32.totalorder %s90, %s104
    %p106 = scmp.eq.s32.totalorder %s17, 0
    %p107 = por %p105, %p106
    %s108 = ssub.s32 %s11, %s18
    %p109 = scmp.eq.s32.totalorder %s108, 0
    %s111 = sadd.s32 %s110, 1
    %s112 = scalar_select %p109, %s110, %s111
    %p115 = pneg %p109
    %p116 = scmp.eq.s32.totalorder %s11, 1
    %p117 = por %p115, %p116
    %p118 = scmp.ne.s32.totalorder %s110, %s113
    %p119 = scmp.eq.s32.totalorder %s11, 0
    %p120 = por %p118, %p119
    %p121 = scmp.ne.s32.totalorder %s110, %s113
    %p122 = scmp.eq.s32.totalorder %s16, 1
    %p123 = por %p121, %p122
    %p124 = scmp.ne.s32.totalorder %s113, %s114
    %p125 = scmp.eq.s32.totalorder %s16, 0
    %p126 = por %p124, %p125
    %p127 = scmp.ne.s32.totalorder %s113, %s114
    %p128 = scmp.eq.s32.totalorder %s17, 1
    %p129 = por %p127, %p128
    %p131 = scmp.ne.s32.totalorder %s114, %s130
    %p132 = scmp.eq.s32.totalorder %s17, 0
    %p133 = por %p131, %p132
    %p134 = scmp.le.s32.totalorder 1, %s11
    %p135 = scmp.lt.s32.totalorder %s11, 3
    %p136 = pnand %p134, %p135
    %p137 = pneg %p136
    // Predicated region
    $region9: #{cfb_forward.22} parent=5 // pred_check
      _
    $region10: #{cfb_forward.22} parent=5 // pred_check_branch
      %139 = sbr.rel (%p136) target = $region12
    $region11: #{cfb_forward.22} parent=5 // pred_region
      %s140 = ssub.s32 %s11, 1
      // Predicated region
      $region13: #{cfb_forward.22} parent=11 // pred_check
        %p141 = pneg %p58
      $region14: #{cfb_forward.22} parent=11 // pred_check_branch
        %143 = sbr.rel (%p141) target = $region16
      $region15: #{cfb_forward.22} parent=11 // pred_region
        _
      $region16: #{cfb_forward.22} parent=11 // pred_fallthru
        _
      // Predicated region
      $region17: #{cfb_forward.22} parent=11 // pred_check
        %p144 = pneg %p79
      $region18: #{cfb_forward.22} parent=11 // pred_check_branch
        %146 = sbr.rel (%p144) target = $region20
      $region19: #{cfb_forward.22} parent=11 // pred_region
        _
      $region20: #{cfb_forward.22} parent=11 // pred_fallthru
        _
      // Predicated region
      $region21: #{cfb_forward.22} parent=11 // pred_check
        %p147 = pneg %p100
      $region22: #{cfb_forward.22} parent=11 // pred_check_branch
        %149 = sbr.rel (%p147) target = $region24
      $region23: #{cfb_forward.22} parent=11 // pred_region
        _
      $region24: #{cfb_forward.22} parent=11 // pred_fallthru
        _
    $region12: #{cfb_forward.22} parent=5 // pred_fallthru
      _
    %p150 = scmp.lt.s32.totalorder %s11, 2
    // Predicated region
    $region25: #{cfb_forward.22} parent=5 // pred_check
      %p151 = pneg %p150
    $region26: #{cfb_forward.22} parent=5 // pred_check_branch
      %153 = sbr.rel (%p151) target = $region28
    $region27: #{cfb_forward.22} parent=5 // pred_region
      // Predicated region
      $region29: #{cfb_forward.22} parent=27 // pred_check
        %p154 = pneg %p31
      $region30: #{cfb_forward.22} parent=27 // pred_check_branch
        %156 = sbr.rel (%p154) target = $region32
      $region31: #{cfb_forward.22} parent=27 // pred_region
        %s157 = smul.u32 32, %s11
        %p158 = scmp.lt.s32.totalorder %s157, 63
        %s159 = scalar_select %p158, %s157, 63
        %s160 = smul.addr %s159, 4
        %s161 = scalar_lea.vmem %s0, %s160
        %s162 = smul.u32 32, %s11
      $region32: #{cfb_forward.22} parent=27 // pred_fallthru
        _
    $region28: #{cfb_forward.22} parent=5 // pred_fallthru
      _
    %p163 = scmp.le.s32.totalorder 1, %s11
    %p164 = scmp.lt.s32.totalorder %s11, 3
    %p165 = pnand %p163, %p164
    %p166 = pneg %p165
    // Predicated region
    $region33: #{cfb_forward.22} parent=5 // pred_check
      _
    $region34: #{cfb_forward.22} parent=5 // pred_check_branch
      %168 = sbr.rel (%p165) target = $region36
    $region35: #{cfb_forward.22} parent=5 // pred_region
      %s169 = ssub.s32 %s11, 1
      %s170 = smul.u32 32, %s16
      %p171 = scmp.lt.s32.totalorder %s170, 63
      %s172 = scalar_select %p171, %s170, 63
      %s173 = smul.addr %s172, 4
      %s174 = scalar_lea.vmem %s0, %s173
      %p175 = pneg %p37
      %p176 = pneg %p34
      %p177 = pneg %p58
      %p178 = pneg %p55
      %p179 = pneg %p79
      %p180 = pneg %p76
      %p181 = pneg %p100
      %p182 = pneg %p97
      %p183 = pneg %p126
      %p184 = pneg %p123
      %s185 = smul.u32 32, %s16
      %p186 = scmp.lt.s32.totalorder %s185, 63
      %s187 = scalar_select %p186, %s185, 63
      %s188 = smul.addr %s187, 8
      %s189 = scalar_lea.vmem %s4, %s188
      %s190 = smul.u32 32, %s16
      %p191 = scmp.lt.s32.totalorder %s190, 63
      %s192 = scalar_select %p191, %s190, 63
      %s193 = smul.addr %s192, 4
      %s194 = scalar_lea.vmem %s0, %s193
      %s195 = smul.u32 32, %s16
      %s196 = smul.u32 32, %s16
      %p197 = scmp.lt.s32.totalorder %s196, 63
      %s198 = scalar_select %p197, %s196, 63
      %s199 = smul.addr %s198, 8
      %s200 = scalar_lea.vmem %s4, %s199
      %s201 = smul.u32 32, %s16
      %v203 = vld [vmem:[%s194] sm:$0xf]
      %v204 = vld [vmem:[%s194 + $0x4] sm:$0xf]
      %v205 = vld [vmem:[%s194 + $0x8] sm:$0xf]
      %v206 = vld [vmem:[%s194 + $0xc] sm:$0xf]
      %v207 = vld [vmem:[%s194 + $0x10] sm:$0xf]
      %v208 = vld [vmem:[%s194 + $0x14] sm:$0xf]
      %v209 = vld [vmem:[%s194 + $0x18] sm:$0xf]
      %v210 = vld [vmem:[%s194 + $0x1c] sm:$0xf]
      %v211 = vld [vmem:[%s194 + $0x20] sm:$0xf]
      %v212 = vld [vmem:[%s194 + $0x24] sm:$0xf]
      %v213 = vld [vmem:[%s194 + $0x28] sm:$0xf]
      %v214 = vld [vmem:[%s194 + $0x2c] sm:$0xf]
      %v215 = vld [vmem:[%s194 + $0x30] sm:$0xf]
      %v216 = vld [vmem:[%s194 + $0x34] sm:$0xf]
      %v217 = vld [vmem:[%s194 + $0x38] sm:$0xf]
      %v218 = vld [vmem:[%s194 + $0x3c] sm:$0xf]
      %v219 = vld [vmem:[%s194 + $0x40] sm:$0xf]
      %v220 = vld [vmem:[%s194 + $0x44] sm:$0xf]
      %v221 = vld [vmem:[%s194 + $0x48] sm:$0xf]
      %v222 = vld [vmem:[%s194 + $0x4c] sm:$0xf]
      %v223 = vld [vmem:[%s194 + $0x50] sm:$0xf]
      %v224 = vld [vmem:[%s194 + $0x54] sm:$0xf]
      %v225 = vld [vmem:[%s194 + $0x58] sm:$0xf]
      %v226 = vld [vmem:[%s194 + $0x5c] sm:$0xf]
      %v227 = vld [vmem:[%s194 + $0x60] sm:$0xf]
      %v228 = vld [vmem:[%s194 + $0x64] sm:$0xf]
      %v229 = vld [vmem:[%s194 + $0x68] sm:$0xf]
      %v230 = vld [vmem:[%s194 + $0x6c] sm:$0xf]
      %v231 = vld [vmem:[%s194 + $0x70] sm:$0xf]
      %v232 = vld [vmem:[%s194 + $0x74] sm:$0xf]
      %v233 = vld [vmem:[%s194 + $0x78] sm:$0xf]
      %v234 = vld [vmem:[%s194 + $0x7c] sm:$0xf]
      %v235 = vld [vmem:[%s1] sm:$0xf]
      %v236 = vld [vmem:[%s1 + $0x4] sm:$0xf]
      %v237 = vld [vmem:[%s1 + $0x8] sm:$0xf]
      %v238 = vld [vmem:[%s1 + $0xc] sm:$0xf]
      %v239 = vld [vmem:[%s1 + $0x10] sm:$0xf]
      %v240 = vld [vmem:[%s1 + $0x14] sm:$0xf]
      %v241 = vld [vmem:[%s2] sm:$0x1]
      %v243 = vlaneseq
      %v244 = vshrl.u32 %v243, 7
      %v245 = vsub.s32 0, %v244
      %v246 = vrot.slane %v241, %v245
      %v280 = vunpack.c.l.b16 %v203
      %v281 = vunpack.c.l.b16 %v204
      %v282 = vunpack.c.l.b16 %v205
      %v283 = vunpack.c.l.b16 %v206
      %v284 = vunpack.c.l.b16 %v207
      %v285 = vunpack.c.l.b16 %v208
      %v286 = vunpack.c.l.b16 %v209
      %v287 = vunpack.c.l.b16 %v210
      %v288 = vunpack.c.l.b16 %v211
      %v289 = vunpack.c.l.b16 %v212
      %v290 = vunpack.c.l.b16 %v213
      %v291 = vunpack.c.l.b16 %v214
      %v292 = vunpack.c.l.b16 %v215
      %v293 = vunpack.c.l.b16 %v216
      %v294 = vunpack.c.l.b16 %v217
      %v295 = vunpack.c.l.b16 %v218
      %v296 = vunpack.c.l.b16 %v219
      %v297 = vunpack.c.l.b16 %v220
      %v298 = vunpack.c.l.b16 %v221
      %v299 = vunpack.c.l.b16 %v222
      %v300 = vunpack.c.l.b16 %v223
      %v301 = vunpack.c.l.b16 %v224
      %v302 = vunpack.c.l.b16 %v225
      %v303 = vunpack.c.l.b16 %v226
      %v304 = vunpack.c.l.b16 %v227
      %v305 = vunpack.c.l.b16 %v228
      %v306 = vunpack.c.l.b16 %v229
      %v307 = vunpack.c.l.b16 %v230
      %v308 = vunpack.c.l.b16 %v231
      %v309 = vunpack.c.l.b16 %v232
      %v310 = vunpack.c.l.b16 %v233
      %v311 = vunpack.c.l.b16 %v234
      %v312 = vpack.c.b16 %v281, %v280
      %v313 = vpack.c.b16 %v283, %v282
      %v314 = vpack.c.b16 %v285, %v284
      %v315 = vpack.c.b16 %v287, %v286
      %v316 = vpack.c.b16 %v289, %v288
      %v317 = vpack.c.b16 %v291, %v290
      %v318 = vpack.c.b16 %v293, %v292
      %v319 = vpack.c.b16 %v295, %v294
      %v320 = vpack.c.b16 %v297, %v296
      %v321 = vpack.c.b16 %v299, %v298
      %v322 = vpack.c.b16 %v301, %v300
      %v323 = vpack.c.b16 %v303, %v302
      %v324 = vpack.c.b16 %v305, %v304
      %v325 = vpack.c.b16 %v307, %v306
      %v326 = vpack.c.b16 %v309, %v308
      %v327 = vpack.c.b16 %v311, %v310
      %v334 = vunpack.c.l.b16 %v235
      %v335 = vunpack.c.l.b16 %v236
      %v336 = vunpack.c.l.b16 %v237
      %v337 = vunpack.c.l.b16 %v238
      %v338 = vunpack.c.l.b16 %v239
      %v339 = vunpack.c.l.b16 %v240
      %v340 = vpack.c.b16 %v335, %v334
      %v341 = vpack.c.b16 %v337, %v336
      %v342 = vpack.c.b16 %v339, %v338
      %vm346 = vcmask 392192
      %v348 = vsel %vm346, %v312, 0
      %v351 = vsel %vm346, %v313, 0
      %v354 = vsel %vm346, %v314, 0
      %v357 = vsel %vm346, %v315, 0
      %v360 = vsel %vm346, %v316, 0
      %v363 = vsel %vm346, %v317, 0
      %v366 = vsel %vm346, %v318, 0
      %v369 = vsel %vm346, %v319, 0
      %v372 = vsel %vm346, %v320, 0
      %v375 = vsel %vm346, %v321, 0
      %v378 = vsel %vm346, %v322, 0
      %v381 = vsel %vm346, %v323, 0
      %v384 = vsel %vm346, %v324, 0
      %v387 = vsel %vm346, %v325, 0
      %v390 = vsel %vm346, %v326, 0
      %v393 = vsel %vm346, %v327, 0
      %395 = vmatprep.subr.bf16.mxu0 0
      %396 = vmatpush1.bf16.msra.mxu0 %v340
      %397 = vmatprep.subr.bf16.mxu0 0
      %398 = vmatpush1.bf16.msra.mxu0 %v341
      %399 = vmatprep.subr.bf16.mxu0 0
      %400 = vmatpush1.bf16.msra.mxu0 %v342
      %401 = vmatprep.subr.bf16.mxu0 0
      %402 = vmatpush1.bf16.msra.mxu0 0
      %403 = vmatprep.subr.bf16.mxu0 0
      %404 = vmatpush1.bf16.msra.mxu0 0
      %405 = vmatprep.subr.bf16.mxu0 0
      %406 = vmatpush1.bf16.msra.mxu0 0
      %407 = vmatprep.subr.bf16.mxu0 0
      %408 = vmatpush1.bf16.msra.mxu0 0
      %409 = vmatprep.subr.bf16.mxu0 0
      %410 = vmatpush1.bf16.msra.mxu0 0
      %411 = vmatprep.subr.bf16.mxu0 0
      %412 = vmatpush1.bf16.msra.mxu0 0
      %413 = vmatprep.subr.bf16.mxu0 0
      %414 = vmatpush1.bf16.msra.mxu0 0
      %415 = vmatprep.subr.bf16.mxu0 0
      %416 = vmatpush1.bf16.msra.mxu0 0
      %417 = vmatprep.subr.bf16.mxu0 0
      %418 = vmatpush1.bf16.msra.mxu0 0
      %419 = vmatprep.subr.bf16.mxu0 0
      %420 = vmatpush1.bf16.msra.mxu0 0
      %421 = vmatprep.subr.bf16.mxu0 0
      %422 = vmatpush1.bf16.msra.mxu0 0
      %423 = vmatprep.subr.bf16.mxu0 0
      %424 = vmatpush1.bf16.msra.mxu0 0
      %425 = vmatprep.subr.bf16.mxu0 0
      %426 = vmatpush1.bf16.msra.mxu0 0
      %427 = vmatprep.mubr.bf16.mxu0 0
      %428 = vmatmul.mubr.bf16.gmra.mrb[0].mxu0 %v348
      %v429 = vpop.f32.mrb[0].mxu0
      %v430 = vadd.f32 %v246, %v429
      %v431 = vpop.f32.mrb[0].mxu0
      %v432 = vpop.f32.mrb[0].mxu0
      %v433 = vadd.f32 %v246, %v432
      %v434 = vpop.f32.mrb[0].mxu0
      %435 = vmatprep.mubr.bf16.mxu0 0
      %436 = vmatmul.mubr.bf16.gmra.mrb[0].mxu0 %v351
      %v437 = vpop.f32.mrb[0].mxu0
      %v438 = vadd.f32 %v246, %v437
      %v439 = vpop.f32.mrb[0].mxu0
      %v440 = vpop.f32.mrb[0].mxu0
      %v441 = vadd.f32 %v246, %v440
      %v442 = vpop.f32.mrb[0].mxu0
      %443 = vmatprep.mubr.bf16.mxu0 0
      %444 = vmatmul.mubr.bf16.gmra.mrb[0].mxu0 %v354
      %v445 = vpop.f32.mrb[0].mxu0
      %v446 = vadd.f32 %v246, %v445
      %v447 = vpop.f32.mrb[0].mxu0
      %v448 = vpop.f32.mrb[0].mxu0
      %v449 = vadd.f32 %v246, %v448
      %v450 = vpop.f32.mrb[0].mxu0
      %451 = vmatprep.mubr.bf16.mxu0 0
      %452 = vmatmul.mubr.bf16.gmra.mrb[0].mxu0 %v357
      %v453 = vpop.f32.mrb[0].mxu0
      %v454 = vadd.f32 %v246, %v453
      %v455 = vpop.f32.mrb[0].mxu0
      %v456 = vpop.f32.mrb[0].mxu0
      %v457 = vadd.f32 %v246, %v456
      %v458 = vpop.f32.mrb[0].mxu0
      %459 = vmatprep.mubr.bf16.mxu0 0
      %460 = vmatmul.mubr.bf16.gmra.mrb[0].mxu0 %v360
      %v461 = vpop.f32.mrb[0].mxu0
      %v462 = vadd.f32 %v246, %v461
      %v463 = vpop.f32.mrb[0].mxu0
      %v464 = vpop.f32.mrb[0].mxu0
      %v465 = vadd.f32 %v246, %v464
      %v466 = vpop.f32.mrb[0].mxu0
      %467 = vmatprep.mubr.bf16.mxu0 0
      %468 = vmatmul.mubr.bf16.gmra.mrb[0].mxu0 %v363
      %v469 = vpop.f32.mrb[0].mxu0
      %v470 = vadd.f32 %v246, %v469
      %v471 = vpop.f32.mrb[0].mxu0
      %v472 = vpop.f32.mrb[0].mxu0
      %v473 = vadd.f32 %v246, %v472
      %v474 = vpop.f32.mrb[0].mxu0
      %475 = vmatprep.mubr.bf16.mxu0 0
      %476 = vmatmul.mubr.bf16.gmra.mrb[0].mxu0 %v366
      %v477 = vpop.f32.mrb[0].mxu0
      %v478 = vadd.f32 %v246, %v477
      %v479 = vpop.f32.mrb[0].mxu0
      %v480 = vpop.f32.mrb[0].mxu0
      %v481 = vadd.f32 %v246, %v480
      %v482 = vpop.f32.mrb[0].mxu0
      %483 = vmatprep.mubr.bf16.mxu0 0
      %484 = vmatmul.mubr.bf16.gmra.mrb[0].mxu0 %v369
      %v485 = vpop.f32.mrb[0].mxu0
      %v486 = vadd.f32 %v246, %v485
      %v487 = vpop.f32.mrb[0].mxu0
      %v488 = vpop.f32.mrb[0].mxu0
      %v489 = vadd.f32 %v246, %v488
      %v490 = vpop.f32.mrb[0].mxu0
      %491 = vmatprep.mubr.bf16.mxu0 0
      %492 = vmatmul.mubr.bf16.gmra.mrb[0].mxu0 %v372
      %v493 = vpop.f32.mrb[0].mxu0
      %v494 = vadd.f32 %v246, %v493
      %v495 = vpop.f32.mrb[0].mxu0
      %v496 = vpop.f32.mrb[0].mxu0
      %v497 = vadd.f32 %v246, %v496
      %v498 = vpop.f32.mrb[0].mxu0
      %499 = vmatprep.mubr.bf16.mxu0 0
      %500 = vmatmul.mubr.bf16.gmra.mrb[0].mxu0 %v375
      %v501 = vpop.f32.mrb[0].mxu0
      %v502 = vadd.f32 %v246, %v501
      %v503 = vpop.f32.mrb[0].mxu0
      %v504 = vpop.f32.mrb[0].mxu0
      %v505 = vadd.f32 %v246, %v504
      %v506 = vpop.f32.mrb[0].mxu0
      %507 = vmatprep.mubr.bf16.mxu0 0
      %508 = vmatmul.mubr.bf16.gmra.mrb[0].mxu0 %v378
      %v509 = vpop.f32.mrb[0].mxu0
      %v510 = vadd.f32 %v246, %v509
      %v511 = vpop.f32.mrb[0].mxu0
      %v512 = vpop.f32.mrb[0].mxu0
      %v513 = vadd.f32 %v246, %v512
      %v514 = vpop.f32.mrb[0].mxu0
      %515 = vmatprep.mubr.bf16.mxu0 0
      %516 = vmatmul.mubr.bf16.gmra.mrb[0].mxu0 %v381
      %v517 = vpop.f32.mrb[0].mxu0
      %v518 = vadd.f32 %v246, %v517
      %v519 = vpop.f32.mrb[0].mxu0
      %v520 = vpop.f32.mrb[0].mxu0
      %v521 = vadd.f32 %v246, %v520
      %v522 = vpop.f32.mrb[0].mxu0
      %523 = vmatprep.mubr.bf16.mxu0 0
      %524 = vmatmul.mubr.bf16.gmra.mrb[0].mxu0 %v384
      %v525 = vpop.f32.mrb[0].mxu0
      %v526 = vadd.f32 %v246, %v525
      %v527 = vpop.f32.mrb[0].mxu0
      %v528 = vpop.f32.mrb[0].mxu0
      %v529 = vadd.f32 %v246, %v528
      %v530 = vpop.f32.mrb[0].mxu0
      %531 = vmatprep.mubr.bf16.mxu0 0
      %532 = vmatmul.mubr.bf16.gmra.mrb[0].mxu0 %v387
      %v533 = vpop.f32.mrb[0].mxu0
      %v534 = vadd.f32 %v246, %v533
      %v535 = vpop.f32.mrb[0].mxu0
      %v536 = vpop.f32.mrb[0].mxu0
      %v537 = vadd.f32 %v246, %v536
      %v538 = vpop.f32.mrb[0].mxu0
      %539 = vmatprep.mubr.bf16.mxu0 0
      %540 = vmatmul.mubr.bf16.gmra.mrb[0].mxu0 %v390
      %v541 = vpop.f32.mrb[0].mxu0
      %v542 = vadd.f32 %v246, %v541
      %v543 = vpop.f32.mrb[0].mxu0
      %v544 = vpop.f32.mrb[0].mxu0
      %v545 = vadd.f32 %v246, %v544
      %v546 = vpop.f32.mrb[0].mxu0
      %547 = vmatprep.mubr.bf16.mxu0 0
      %548 = vmatmul.mubr.bf16.gmra.mrb[0].mxu0 %v393
      %v549 = vpop.f32.mrb[0].mxu0
      %v550 = vadd.f32 %v246, %v549
      %v551 = vpop.f32.mrb[0].mxu0
      %v552 = vpop.f32.mrb[0].mxu0
      %v553 = vadd.f32 %v246, %v552
      %v554 = vpop.f32.mrb[0].mxu0
      %555 = vdwg.mxu0
      %s556 = sld [smem:[#allocation2]]
      %vm557 = vcmp.ge.f32.partialorder %v430, 0.0
      %vm558 = vcmp.ge.f32.partialorder %v433, 0.0
      %vm559 = vcmp.ge.f32.partialorder %v438, 0.0
      %vm560 = vcmp.ge.f32.partialorder %v441, 0.0
      %vm561 = vcmp.ge.f32.partialorder %v446, 0.0
      %vm562 = vcmp.ge.f32.partialorder %v449, 0.0
      %vm563 = vcmp.ge.f32.partialorder %v454, 0.0
      %vm564 = vcmp.ge.f32.partialorder %v457, 0.0
      %vm565 = vcmp.ge.f32.partialorder %v462, 0.0
      %vm566 = vcmp.ge.f32.partialorder %v465, 0.0
      %vm567 = vcmp.ge.f32.partialorder %v470, 0.0
      %vm568 = vcmp.ge.f32.partialorder %v473, 0.0
      %vm569 = vcmp.ge.f32.partialorder %v478, 0.0
      %vm570 = vcmp.ge.f32.partialorder %v481, 0.0
      %vm571 = vcmp.ge.f32.partialorder %v486, 0.0
      %vm572 = vcmp.ge.f32.partialorder %v489, 0.0
      %vm573 = vcmp.ge.f32.partialorder %v494, 0.0
      %vm574 = vcmp.ge.f32.partialorder %v497, 0.0
      %vm575 = vcmp.ge.f32.partialorder %v502, 0.0
      %vm576 = vcmp.ge.f32.partialorder %v505, 0.0
      %vm577 = vcmp.ge.f32.partialorder %v510, 0.0
      %vm578 = vcmp.ge.f32.partialorder %v513, 0.0
      %vm579 = vcmp.ge.f32.partialorder %v518, 0.0
      %vm580 = vcmp.ge.f32.partialorder %v521, 0.0
      %vm581 = vcmp.ge.f32.partialorder %v526, 0.0
      %vm582 = vcmp.ge.f32.partialorder %v529, 0.0
      %vm583 = vcmp.ge.f32.partialorder %v534, 0.0
      %vm584 = vcmp.ge.f32.partialorder %v537, 0.0
      %vm585 = vcmp.ge.f32.partialorder %v542, 0.0
      %vm586 = vcmp.ge.f32.partialorder %v545, 0.0
      %vm587 = vcmp.ge.f32.partialorder %v550, 0.0
      %vm588 = vcmp.ge.f32.partialorder %v553, 0.0
      %v589 = vstv %s556
      %v590 = vmul.f32 %v589, %v430
      %v591 = vmul.f32 %v589, %v433
      %v592 = vmul.f32 %v589, %v438
      %v593 = vmul.f32 %v589, %v441
      %v594 = vmul.f32 %v589, %v446
      %v595 = vmul.f32 %v589, %v449
      %v596 = vmul.f32 %v589, %v454
      %v597 = vmul.f32 %v589, %v457
      %v598 = vmul.f32 %v589, %v462
      %v599 = vmul.f32 %v589, %v465
      %v600 = vmul.f32 %v589, %v470
      %v601 = vmul.f32 %v589, %v473
      %v602 = vmul.f32 %v589, %v478
      %v603 = vmul.f32 %v589, %v481
      %v604 = vmul.f32 %v589, %v486
      %v605 = vmul.f32 %v589, %v489
      %v606 = vmul.f32 %v589, %v494
      %v607 = vmul.f32 %v589, %v497
      %v608 = vmul.f32 %v589, %v502
      %v609 = vmul.f32 %v589, %v505
      %v610 = vmul.f32 %v589, %v510
      %v611 = vmul.f32 %v589, %v513
      %v612 = vmul.f32 %v589, %v518
      %v613 = vmul.f32 %v589, %v521
      %v614 = vmul.f32 %v589, %v526
      %v615 = vmul.f32 %v589, %v529
      %v616 = vmul.f32 %v589, %v534
      %v617 = vmul.f32 %v589, %v537
      %v618 = vmul.f32 %v589, %v542
      %v619 = vmul.f32 %v589, %v545
      %v620 = vmul.f32 %v589, %v550
      %v621 = vmul.f32 %v589, %v553
      %v622 = vsel %vm557, %v430, %v590
      %v623 = vsel %vm558, %v433, %v591
      %v624 = vsel %vm559, %v438, %v592
      %v625 = vsel %vm560, %v441, %v593
      %v626 = vsel %vm561, %v446, %v594
      %v627 = vsel %vm562, %v449, %v595
      %v628 = vsel %vm563, %v454, %v596
      %v629 = vsel %vm564, %v457, %v597
      %v630 = vsel %vm565, %v462, %v598
      %v631 = vsel %vm566, %v465, %v599
      %v632 = vsel %vm567, %v470, %v600
      %v633 = vsel %vm568, %v473, %v601
      %v634 = vsel %vm569, %v478, %v602
      %v635 = vsel %vm570, %v481, %v603
      %v636 = vsel %vm571, %v486, %v604
      %v637 = vsel %vm572, %v489, %v605
      %v638 = vsel %vm573, %v494, %v606
      %v639 = vsel %vm574, %v497, %v607
      %v640 = vsel %vm575, %v502, %v608
      %v641 = vsel %vm576, %v505, %v609
      %v642 = vsel %vm577, %v510, %v610
      %v643 = vsel %vm578, %v513, %v611
      %v644 = vsel %vm579, %v518, %v612
      %v645 = vsel %vm580, %v521, %v613
      %v646 = vsel %vm581, %v526, %v614
      %v647 = vsel %vm582, %v529, %v615
      %v648 = vsel %vm583, %v534, %v616
      %v649 = vsel %vm584, %v537, %v617
      %v650 = vsel %vm585, %v542, %v618
      %v651 = vsel %vm586, %v545, %v619
      %v652 = vsel %vm587, %v550, %v620
      %v653 = vsel %vm588, %v553, %v621
      %654 = vst [vmem:[%s200] sm:$0xff] %v622
      %655 = vst [vmem:[%s200 + $0x8] sm:$0xff] %v623
      %656 = vst [vmem:[%s200 + $0x10] sm:$0xff] %v624
      %657 = vst [vmem:[%s200 + $0x18] sm:$0xff] %v625
      %658 = vst [vmem:[%s200 + $0x20] sm:$0xff] %v626
      %659 = vst [vmem:[%s200 + $0x28] sm:$0xff] %v627
      %660 = vst [vmem:[%s200 + $0x30] sm:$0xff] %v628
      %661 = vst [vmem:[%s200 + $0x38] sm:$0xff] %v629
      %662 = vst [vmem:[%s200 + $0x40] sm:$0xff] %v630
      %663 = vst [vmem:[%s200 + $0x48] sm:$0xff] %v631
      %664 = vst [vmem:[%s200 + $0x50] sm:$0xff] %v632
      %665 = vst [vmem:[%s200 + $0x58] sm:$0xff] %v633
      %666 = vst [vmem:[%s200 + $0x60] sm:$0xff] %v634
      %667 = vst [vmem:[%s200 + $0x68] sm:$0xff] %v635
      %668 = vst [vmem:[%s200 + $0x70] sm:$0xff] %v636
      %669 = vst [vmem:[%s200 + $0x78] sm:$0xff] %v637
      %670 = vst [vmem:[%s200 + $0x80] sm:$0xff] %v638
      %671 = vst [vmem:[%s200 + $0x88] sm:$0xff] %v639
      %672 = vst [vmem:[%s200 + $0x90] sm:$0xff] %v640
      %673 = vst [vmem:[%s200 + $0x98] sm:$0xff] %v641
      %674 = vst [vmem:[%s200 + $0xa0] sm:$0xff] %v642
      %675 = vst [vmem:[%s200 + $0xa8] sm:$0xff] %v643
      %676 = vst [vmem:[%s200 + $0xb0] sm:$0xff] %v644
      %677 = vst [vmem:[%s200 + $0xb8] sm:$0xff] %v645
      %678 = vst [vmem:[%s200 + $0xc0] sm:$0xff] %v646
      %679 = vst [vmem:[%s200 + $0xc8] sm:$0xff] %v647
      %680 = vst [vmem:[%s200 + $0xd0] sm:$0xff] %v648
      %681 = vst [vmem:[%s200 + $0xd8] sm:$0xff] %v649
      %682 = vst [vmem:[%s200 + $0xe0] sm:$0xff] %v650
      %683 = vst [vmem:[%s200 + $0xe8] sm:$0xff] %v651
      %684 = vst [vmem:[%s200 + $0xf0] sm:$0xff] %v652
      %685 = vst [vmem:[%s200 + $0xf8] sm:$0xff] %v653
      %s686 = smul.u32 32, %s16
      %p687 = scmp.lt.s32.totalorder %s686, 63
      %s688 = scalar_select %p687, %s686, 63
      %s689 = smul.addr %s688, 8
      %s690 = scalar_lea.vmem %s4, %s689
      // Predicated region
      $region37: #{cfb_forward.22} parent=35 // pred_check
        %p691 = pneg %p123
      $region38: #{cfb_forward.22} parent=35 // pred_check_branch
        %693 = sbr.rel (%p691) target = $region40
      $region39: #{cfb_forward.22} parent=35 // pred_region
        %s694 = smul.u32 32, %s16
      $region40: #{cfb_forward.22} parent=35 // pred_fallthru
        _
    $region36: #{cfb_forward.22} parent=5 // pred_fallthru
      _
    %p695 = scmp.le.s32.totalorder 2, %s11
    // Predicated region
    $region41: #{cfb_forward.22} parent=5 // pred_check
      %p696 = pneg %p695
    $region42: #{cfb_forward.22} parent=5 // pred_check_branch
      %698 = sbr.rel (%p696) target = $region44
    $region43: #{cfb_forward.22} parent=5 // pred_region
      %s699 = ssub.s32 %s11, 2
      // Predicated region
      $region45: #{cfb_forward.22} parent=43 // pred_check
        %p700 = pneg %p129
      $region46: #{cfb_forward.22} parent=43 // pred_check_branch
        %702 = sbr.rel (%p700) target = $region48
      $region47: #{cfb_forward.22} parent=43 // pred_region
        %s703 = smul.u32 32, %s17
        %p704 = scmp.lt.s32.totalorder %s703, 63
        %s705 = scalar_select %p704, %s703, 63
        %s706 = smul.addr %s705, 8
        %s707 = scalar_lea.vmem %s4, %s706
      $region48: #{cfb_forward.22} parent=43 // pred_fallthru
        _
    $region44: #{cfb_forward.22} parent=5 // pred_fallthru
      _
  $region6: #{cfb_forward.22} parent=0 // loop_footer
    %s15 = sadd.s32 1, %s11
  $region7: #{cfb_forward.22} parent=0 // loop_footer_branch
    %10 = sbr.rel target = $region3
  $region8: #{cfb_forward.22} parent=0 // loop_exit
    _

// kernel: cfb_forward.25
$region0: #{cfb_forward.25}
  #allocation0 [shape = 'u32[]', space=smem, size = 0x4, offset = 0x4, fixed_abs, tag = 'smem constant byte address 0x4 - core index']
  #allocation1 [shape = 'u32[144,128]{1,0:T(1,128)}', space=vmem, size = 0x12000, scoped, tag = 'internal scratch']
  #allocation2 [shape = 'f32[1]{0:T(128)S(6)}', space=smem, size = 0x200, scoped, tag = 'scoped memory for cfb_forward.25']
  %s0 = inlined_call_operand.vmem [shape: bf16[128,48], index: 0, kind: input, shape index: {}]
  %s1 = inlined_call_operand.vmem [shape: bf16[48,128], index: 1, kind: input, shape index: {}]
  %s2 = inlined_call_operand.vmem [shape: f32[1,128], index: 2, kind: input, shape index: {}]
  %s3 = inlined_call_operand.<no memory space> [shape: f32[1], index: 3, kind: input, shape index: {}]
  %s4 = inlined_call_operand.hbm [shape: f32[128,128], index: 4, kind: output, shape index: {}]
  %s5 = sld [smem:[#allocation0]]
  $region26: #{cfb_forward.25} parent=0
    _
  %s7 = ssub.s32 1, %s5
  %s8 = scalar_select 0, %s7, %s5
  %9 = sst [smem:[#allocation2]] %s3
  $region1: #{cfb_forward.25} parent=0
    #allocation3 [shape = 'u8[65536]{0}', space=vmem, size = 0x10000, scoped, tag = 'output window, operand 0, single buffered']
    #allocation4 [shape = 's32[1]{0}', space=sflag, size = 0x4, scoped, tag = 'scoped memory for cfb_forward.25']
    %10 = vsyncpa [#allocation4], 0
    // Predicated region
    $region2: #{cfb_forward.25} parent=1 // pred_check
      _
    $region3: #{cfb_forward.25} parent=1 // pred_check_branch
      %12 = sbr.rel (0) target = $region5
    $region4: #{cfb_forward.25} parent=1 // pred_region
      _
    $region5: #{cfb_forward.25} parent=1 // pred_fallthru
      _
    // Predicated region
    $region6: #{cfb_forward.25} parent=1 // pred_check
      _
    $region7: #{cfb_forward.25} parent=1 // pred_check_branch
      %14 = sbr.rel (0) target = $region9
    $region8: #{cfb_forward.25} parent=1 // pred_region
      _
    $region9: #{cfb_forward.25} parent=1 // pred_fallthru
      _
    // Predicated region
    $region10: #{cfb_forward.25} parent=1 // pred_check
      _
    $region11: #{cfb_forward.25} parent=1 // pred_check_branch
      %16 = sbr.rel (0) target = $region13
    $region12: #{cfb_forward.25} parent=1 // pred_region
      _
    $region13: #{cfb_forward.25} parent=1 // pred_fallthru
      _
    // Predicated region
    $region14: #{cfb_forward.25} parent=1 // pred_check
      _
    $region15: #{cfb_forward.25} parent=1 // pred_check_branch
      %18 = sbr.rel (0) target = $region17
    $region16: #{cfb_forward.25} parent=1 // pred_region
      _
    $region17: #{cfb_forward.25} parent=1 // pred_fallthru
      _
    %v20 = vld [vmem:[%s0] sm:$0xf]
    %v21 = vld [vmem:[%s0 + $0x4] sm:$0xf]
    %v22 = vld [vmem:[%s0 + $0x8] sm:$0xf]
    %v23 = vld [vmem:[%s0 + $0xc] sm:$0xf]
    %v24 = vld [vmem:[%s0 + $0x10] sm:$0xf]
    %v25 = vld [vmem:[%s0 + $0x14] sm:$0xf]
    %v26 = vld [vmem:[%s0 + $0x18] sm:$0xf]
    %v27 = vld [vmem:[%s0 + $0x1c] sm:$0xf]
    %v28 = vld [vmem:[%s0 + $0x20] sm:$0xf]
    %v29 = vld [vmem:[%s0 + $0x24] sm:$0xf]
    %v30 = vld [vmem:[%s0 + $0x28] sm:$0xf]
    %v31 = vld [vmem:[%s0 + $0x2c] sm:$0xf]
    %v32 = vld [vmem:[%s0 + $0x30] sm:$0xf]
    %v33 = vld [vmem:[%s0 + $0x34] sm:$0xf]
    %v34 = vld [vmem:[%s0 + $0x38] sm:$0xf]
    %v35 = vld [vmem:[%s0 + $0x3c] sm:$0xf]
    %v36 = vld [vmem:[%s1] sm:$0xf]
    %v37 = vld [vmem:[%s1 + $0x4] sm:$0xf]
    %v38 = vld [vmem:[%s1 + $0x8] sm:$0xf]
    %v39 = vld [vmem:[%s1 + $0xc] sm:$0xf]
    %v40 = vld [vmem:[%s1 + $0x10] sm:$0xf]
    %v41 = vld [vmem:[%s1 + $0x14] sm:$0xf]
    %v42 = vld [vmem:[%s2] sm:$0x1]
    %v44 = vlaneseq
    %v45 = vshrl.u32 %v44, 7
    %v46 = vsub.s32 0, %v45
    %v47 = vrot.slane %v42, %v46
    %v65 = vunpack.c.l.b16 %v20
    %v66 = vunpack.c.l.b16 %v21
    %v67 = vunpack.c.l.b16 %v22
    %v68 = vunpack.c.l.b16 %v23
    %v69 = vunpack.c.l.b16 %v24
    %v70 = vunpack.c.l.b16 %v25
    %v71 = vunpack.c.l.b16 %v26
    %v72 = vunpack.c.l.b16 %v27
    %v73 = vunpack.c.l.b16 %v28
    %v74 = vunpack.c.l.b16 %v29
    %v75 = vunpack.c.l.b16 %v30
    %v76 = vunpack.c.l.b16 %v31
    %v77 = vunpack.c.l.b16 %v32
    %v78 = vunpack.c.l.b16 %v33
    %v79 = vunpack.c.l.b16 %v34
    %v80 = vunpack.c.l.b16 %v35
    %v81 = vpack.c.b16 %v66, %v65
    %v82 = vpack.c.b16 %v68, %v67
    %v83 = vpack.c.b16 %v70, %v69
    %v84 = vpack.c.b16 %v72, %v71
    %v85 = vpack.c.b16 %v74, %v73
    %v86 = vpack.c.b16 %v76, %v75
    %v87 = vpack.c.b16 %v78, %v77
    %v88 = vpack.c.b16 %v80, %v79
    %v95 = vunpack.c.l.b16 %v36
    %v96 = vunpack.c.l.b16 %v37
    %v97 = vunpack.c.l.b16 %v38
    %v98 = vunpack.c.l.b16 %v39
    %v99 = vunpack.c.l.b16 %v40
    %v100 = vunpack.c.l.b16 %v41
    %v101 = vpack.c.b16 %v96, %v95
    %v102 = vpack.c.b16 %v98, %v97
    %v103 = vpack.c.b16 %v100, %v99
    %vm107 = vcmask 392192
    %v109 = vsel %vm107, %v81, 0
    %v112 = vsel %vm107, %v82, 0
    %v115 = vsel %vm107, %v83, 0
    %v118 = vsel %vm107, %v84, 0
    %v121 = vsel %vm107, %v85, 0
    %v124 = vsel %vm107, %v86, 0
    %v127 = vsel %vm107, %v87, 0
    %v130 = vsel %vm107, %v88, 0
    %132 = vmatprep.subr.bf16.mxu0 0
    %133 = vmatpush1.bf16.msra.mxu0 %v101
    %134 = vmatprep.subr.bf16.mxu0 0
    %135 = vmatpush1.bf16.msra.mxu0 %v102
    %136 = vmatprep.subr.bf16.mxu0 0
    %137 = vmatpush1.bf16.msra.mxu0 %v103
    %138 = vmatprep.subr.bf16.mxu0 0
    %139 = vmatpush1.bf16.msra.mxu0 0
    %140 = vmatprep.subr.bf16.mxu0 0
    %141 = vmatpush1.bf16.msra.mxu0 0
    %142 = vmatprep.subr.bf16.mxu0 0
    %143 = vmatpush1.bf16.msra.mxu0 0
    %144 = vmatprep.subr.bf16.mxu0 0
    %145 = vmatpush1.bf16.msra.mxu0 0
    %146 = vmatprep.subr.bf16.mxu0 0
    %147 = vmatpush1.bf16.msra.mxu0 0
    %148 = vmatprep.subr.bf16.mxu0 0
    %149 = vmatpush1.bf16.msra.mxu0 0
    %150 = vmatprep.subr.bf16.mxu0 0
    %151 = vmatpush1.bf16.msra.mxu0 0
    %152 = vmatprep.subr.bf16.mxu0 0
    %153 = vmatpush1.bf16.msra.mxu0 0
    %154 = vmatprep.subr.bf16.mxu0 0
    %155 = vmatpush1.bf16.msra.mxu0 0
    %156 = vmatprep.subr.bf16.mxu0 0
    %157 = vmatpush1.bf16.msra.mxu0 0
    %158 = vmatprep.subr.bf16.mxu0 0
    %159 = vmatpush1.bf16.msra.mxu0 0
    %160 = vmatprep.subr.bf16.mxu0 0
    %161 = vmatpush1.bf16.msra.mxu0 0
    %162 = vmatprep.subr.bf16.mxu0 0
    %163 = vmatpush1.bf16.msra.mxu0 0
    %164 = vmatprep.mubr.bf16.mxu0 0
    %165 = vmatmul.mubr.bf16.gmra.mrb[0].mxu0 %v109
    %v166 = vpop.f32.mrb[0].mxu0
    %v167 = vadd.f32 %v47, %v166
    %v168 = vpop.f32.mrb[0].mxu0
    %v169 = vpop.f32.mrb[0].mxu0
    %v170 = vadd.f32 %v47, %v169
    %v171 = vpop.f32.mrb[0].mxu0
    %172 = vmatprep.mubr.bf16.mxu0 0
    %173 = vmatmul.mubr.bf16.gmra.mrb[0].mxu0 %v112
    %v174 = vpop.f32.mrb[0].mxu0
    %v175 = vadd.f32 %v47, %v174
    %v176 = vpop.f32.mrb[0].mxu0
    %v177 = vpop.f32.mrb[0].mxu0
    %v178 = vadd.f32 %v47, %v177
    %v179 = vpop.f32.mrb[0].mxu0
    %180 = vmatprep.mubr.bf16.mxu0 0
    %181 = vmatmul.mubr.bf16.gmra.mrb[0].mxu0 %v115
    %v182 = vpop.f32.mrb[0].mxu0
    %v183 = vadd.f32 %v47, %v182
    %v184 = vpop.f32.mrb[0].mxu0
    %v185 = vpop.f32.mrb[0].mxu0
    %v186 = vadd.f32 %v47, %v185
    %v187 = vpop.f32.mrb[0].mxu0
    %188 = vmatprep.mubr.bf16.mxu0 0
    %189 = vmatmul.mubr.bf16.gmra.mrb[0].mxu0 %v118
    %v190 = vpop.f32.mrb[0].mxu0
    %v191 = vadd.f32 %v47, %v190
    %v192 = vpop.f32.mrb[0].mxu0
    %v193 = vpop.f32.mrb[0].mxu0
    %v194 = vadd.f32 %v47, %v193
    %v195 = vpop.f32.mrb[0].mxu0
    %196 = vmatprep.mubr.bf16.mxu0 0
    %197 = vmatmul.mubr.bf16.gmra.mrb[0].mxu0 %v121
    %v198 = vpop.f32.mrb[0].mxu0
    %v199 = vadd.f32 %v47, %v198
    %v200 = vpop.f32.mrb[0].mxu0
    %v201 = vpop.f32.mrb[0].mxu0
    %v202 = vadd.f32 %v47, %v201
    %v203 = vpop.f32.mrb[0].mxu0
    %204 = vmatprep.mubr.bf16.mxu0 0
    %205 = vmatmul.mubr.bf16.gmra.mrb[0].mxu0 %v124
    %v206 = vpop.f32.mrb[0].mxu0
    %v207 = vadd.f32 %v47, %v206
    %v208 = vpop.f32.mrb[0].mxu0
    %v209 = vpop.f32.mrb[0].mxu0
    %v210 = vadd.f32 %v47, %v209
    %v211 = vpop.f32.mrb[0].mxu0
    %212 = vmatprep.mubr.bf16.mxu0 0
    %213 = vmatmul.mubr.bf16.gmra.mrb[0].mxu0 %v127
    %v214 = vpop.f32.mrb[0].mxu0
    %v215 = vadd.f32 %v47, %v214
    %v216 = vpop.f32.mrb[0].mxu0
    %v217 = vpop.f32.mrb[0].mxu0
    %v218 = vadd.f32 %v47, %v217
    %v219 = vpop.f32.mrb[0].mxu0
    %220 = vmatprep.mubr.bf16.mxu0 0
    %221 = vmatmul.mubr.bf16.gmra.mrb[0].mxu0 %v130
    %v222 = vpop.f32.mrb[0].mxu0
    %v223 = vadd.f32 %v47, %v222
    %v224 = vpop.f32.mrb[0].mxu0
    %v225 = vpop.f32.mrb[0].mxu0
    %v226 = vadd.f32 %v47, %v225
    %v227 = vpop.f32.mrb[0].mxu0
    %228 = vdwg.mxu0
    %s229 = sld [smem:[#allocation2]]
    %vm230 = vcmp.ge.f32.partialorder %v167, 0.0
    %vm231 = vcmp.ge.f32.partialorder %v170, 0.0
    %vm232 = vcmp.ge.f32.partialorder %v175, 0.0
    %vm233 = vcmp.ge.f32.partialorder %v178, 0.0
    %vm234 = vcmp.ge.f32.partialorder %v183, 0.0
    %vm235 = vcmp.ge.f32.partialorder %v186, 0.0
    %vm236 = vcmp.ge.f32.partialorder %v191, 0.0
    %vm237 = vcmp.ge.f32.partialorder %v194, 0.0
    %vm238 = vcmp.ge.f32.partialorder %v199, 0.0
    %vm239 = vcmp.ge.f32.partialorder %v202, 0.0
    %vm240 = vcmp.ge.f32.partialorder %v207, 0.0
    %vm241 = vcmp.ge.f32.partialorder %v210, 0.0
    %vm242 = vcmp.ge.f32.partialorder %v215, 0.0
    %vm243 = vcmp.ge.f32.partialorder %v218, 0.0
    %vm244 = vcmp.ge.f32.partialorder %v223, 0.0
    %vm245 = vcmp.ge.f32.partialorder %v226, 0.0
    %v246 = vstv %s229
    %v247 = vmul.f32 %v246, %v167
    %v248 = vmul.f32 %v246, %v170
    %v249 = vmul.f32 %v246, %v175
    %v250 = vmul.f32 %v246, %v178
    %v251 = vmul.f32 %v246, %v183
    %v252 = vmul.f32 %v246, %v186
    %v253 = vmul.f32 %v246, %v191
    %v254 = vmul.f32 %v246, %v194
    %v255 = vmul.f32 %v246, %v199
    %v256 = vmul.f32 %v246, %v202
    %v257 = vmul.f32 %v246, %v207
    %v258 = vmul.f32 %v246, %v210
    %v259 = vmul.f32 %v246, %v215
    %v260 = vmul.f32 %v246, %v218
    %v261 = vmul.f32 %v246, %v223
    %v262 = vmul.f32 %v246, %v226
    %v263 = vsel %vm230, %v167, %v247
    %v264 = vsel %vm231, %v170, %v248
    %v265 = vsel %vm232, %v175, %v249
    %v266 = vsel %vm233, %v178, %v250
    %v267 = vsel %vm234, %v183, %v251
    %v268 = vsel %vm235, %v186, %v252
    %v269 = vsel %vm236, %v191, %v253
    %v270 = vsel %vm237, %v194, %v254
    %v271 = vsel %vm238, %v199, %v255
    %v272 = vsel %vm239, %v202, %v256
    %v273 = vsel %vm240, %v207, %v257
    %v274 = vsel %vm241, %v210, %v258
    %v275 = vsel %vm242, %v215, %v259
    %v276 = vsel %vm243, %v218, %v260
    %v277 = vsel %vm244, %v223, %v261
    %v278 = vsel %vm245, %v226, %v262
    %279 = vst [vmem:[#allocation3] sm:$0xff] %v263
    %280 = vst [vmem:[#allocation3 + $0x8] sm:$0xff] %v264
    %281 = vst [vmem:[#allocation3 + $0x10] sm:$0xff] %v265
    %282 = vst [vmem:[#allocation3 + $0x18] sm:$0xff] %v266
    %283 = vst [vmem:[#allocation3 + $0x20] sm:$0xff] %v267
    %284 = vst [vmem:[#allocation3 + $0x28] sm:$0xff] %v268
    %285 = vst [vmem:[#allocation3 + $0x30] sm:$0xff] %v269
    %286 = vst [vmem:[#allocation3 + $0x38] sm:$0xff] %v270
    %287 = vst [vmem:[#allocation3 + $0x40] sm:$0xff] %v271
    %288 = vst [vmem:[#allocation3 + $0x48] sm:$0xff] %v272
    %289 = vst [vmem:[#allocation3 + $0x50] sm:$0xff] %v273
    %290 = vst [vmem:[#allocation3 + $0x58] sm:$0xff] %v274
    %291 = vst [vmem:[#allocation3 + $0x60] sm:$0xff] %v275
    %292 = vst [vmem:[#allocation3 + $0x68] sm:$0xff] %v276
    %293 = vst [vmem:[#allocation3 + $0x70] sm:$0xff] %v277
    %294 = vst [vmem:[#allocation3 + $0x78] sm:$0xff] %v278
    // Predicated region
    $region18: #{cfb_forward.25} parent=1 // pred_check
      _
    $region19: #{cfb_forward.25} parent=1 // pred_check_branch
      %296 = sbr.rel (0) target = $region21
    $region20: #{cfb_forward.25} parent=1 // pred_region
      %s298 = ssub.s32 2048, 2048
      %299 = vsyncadd [#allocation4], %s298
      %s300 = sshll.u32 [#allocation3], 4
      %s301 = int_to_ptr.vmem [resolvable:$true] %s300
      %306 = dma.vmem_to_hbm [thread:$0]  %s301, 2048, %s4, [#allocation4], 128, 128, 8
    $region21: #{cfb_forward.25} parent=1 // pred_fallthru
      _
    // Predicated region
    $region22: #{cfb_forward.25} parent=1 // pred_check
      _
    $region23: #{cfb_forward.25} parent=1 // pred_check_branch
      %308 = sbr.rel (0) target = $region25
    $region24: #{cfb_forward.25} parent=1 // pred_region
      %309 = dma.done [#allocation4], 2048
    $region25: #{cfb_forward.25} parent=1 // pred_fallthru
      _
    %310 = vsyncpa [#allocation4], 1

</llo_original>
